<compile_context>
chip_gen: v7x
topology: tpu7x:2x2x1
jax: 0.10.0
libtpu: 0.0.40
codegen_flags: <defaults>
</compile_context>

<pallas_src>
import functools

import jax
import jax.numpy as jnp
from jax.experimental import pallas as pl
from jax.experimental.pallas import tpu as pltpu


_HIDDEN = (512, 256, 128, 64)
_NEG_FILL = -1e30  # softmax-neutral fill for padded logit lanes (exp underflows to 0)


def _dnn_kernel(x_ref, w1_ref, w2_ref, w3_ref, w4_ref, w5_ref, vec_ref, o_ref):
    """Whole forward pass on one VMEM-resident batch block.

    vec_ref rows (f32, lane-padded to 512):
      rows 2i, 2i+1 : gamma / beta of BN layer i (i = 0..3); layer 3 occupies
                      lanes [:64], pad lanes [64:128] are exactly zero so the
                      lane-padded layer-4 activations come out as exact zeros.
      row 8         : final-layer bias; lanes [n_out:nout_pad] = -1e30.
    Hidden-layer Linear biases are omitted: training-mode BN cancels them exactly.
    """
    eps = jnp.float32(1e-5)

    def linear_bn_relu(h_bf16, w_ref, row):
        width = w_ref.shape[1]
        # Linear (MXU, bf16 operands, f32 accumulate); bias dropped (BN cancels it).
        z = jnp.dot(h_bf16, w_ref[...], preferred_element_type=jnp.float32)
        gamma = vec_ref[row:row + 1, :width]
        beta = vec_ref[row + 1:row + 2, :width]
        # BatchNorm1d, training mode (batch stats, biased variance).
        # Two-pass variance mean((z-mu)^2): robust when |mu| >> std (review concern).
        mu = jnp.mean(z, axis=0, keepdims=True)
        d = z - mu
        var = jnp.mean(d * d, axis=0, keepdims=True)
        scale = gamma * jax.lax.rsqrt(var + eps)
        a = jnp.maximum(d * scale + beta, 0.0)                  # BN + ReLU
        return a.astype(jnp.bfloat16)                           # next MXU input

    h = x_ref[...].astype(jnp.bfloat16)
    h = linear_bn_relu(h, w1_ref, 0)
    h = linear_bn_relu(h, w2_ref, 2)
    h = linear_bn_relu(h, w3_ref, 4)
    h = linear_bn_relu(h, w4_ref, 6)   # lane-padded to 128; pad lanes are exact zeros

    # Final Linear(64->128 padded, nout_pad) into a lane-dense (B, nout_pad) buffer.
    # Padded w5 rows are zero, so the zero pad activations contribute nothing.
    nout_pad = w5_ref.shape[1]
    logits = jnp.dot(h, w5_ref[...], preferred_element_type=jnp.float32)
    logits = logits + vec_ref[8:9, :nout_pad]   # real lanes: bias; pad lanes: -1e30

    # Softmax(dim=1), numerically stable; padded lanes contribute exp(-1e30 - m) = 0.
    # NOTE: approx reciprocal (EUP) -> rows sum to 1 only to ~1e-3 relative error.
    m = jnp.max(logits, axis=1, keepdims=True)
    e = jnp.exp(logits - m)
    denom = jnp.sum(e, axis=1, keepdims=True)
    o_ref[...] = (e * pl.reciprocal(denom, approx=True)).astype(o_ref.dtype)


def init_params(key, n_features, n_out):
    """Mirror _init_weights: W ~ N(0, sqrt(2/out)), b = 0, BN gamma = 1, beta = 0.
    Weights stored transposed relative to PyTorch, i.e. (in, out)."""
    dims = [n_features, *_HIDDEN, n_out]
    params = []
    keys = jax.random.split(key, len(dims) - 1)
    for i in range(len(dims) - 1):
        fan_in, fan_out = dims[i], dims[i + 1]
        std = jnp.sqrt(2.0 / fan_out)  # std = sqrt(2 / weight.shape[0]) = sqrt(2/out)
        w = (std * jax.random.normal(keys[i], (fan_in, fan_out))).astype(jnp.float32)
        b = jnp.zeros((1, fan_out), jnp.float32)
        entry = {"w": w, "b": b}
        if i < len(dims) - 2:  # BN follows every linear except the last
            entry["gamma"] = jnp.ones((1, fan_out), jnp.float32)
            entry["beta"] = jnp.zeros((1, fan_out), jnp.float32)
        params.append(entry)
    return params


def pack_params(params, n_out):
    """Pack params for the kernel:
      * bf16 (in,out) weights; w4 lane-padded (128,64)->(128,128) with zero columns,
        w5 padded (64,n_out)->(128,nout_pad) with zero rows/columns.
      * one f32 (16, 512) vector pack with BN gamma/beta rows and the final bias
        (pad logit lanes pre-filled with -1e30).  Hidden biases are not packed
        (training-mode BN cancels them exactly).
    """
    nout_pad = max(128, ((n_out + 127) // 128) * 128)
    lane_w = max(512, nout_pad)

    def pad_w(w, rows, cols):
        out = jnp.zeros((rows, cols), jnp.float32).at[:w.shape[0], :w.shape[1]].set(w)
        return out.astype(jnp.bfloat16)

    w1 = params[0]["w"].astype(jnp.bfloat16)          # (nf, 512)
    w2 = params[1]["w"].astype(jnp.bfloat16)          # (512, 256)
    w3 = params[2]["w"].astype(jnp.bfloat16)          # (256, 128)
    w4 = pad_w(params[3]["w"], 128, 128)              # (128, 64) -> (128, 128)
    w5 = pad_w(params[4]["w"], 128, nout_pad)         # (64, n_out) -> (128, nout_pad)

    vecs = jnp.zeros((16, lane_w), jnp.float32)
    for i in range(4):
        w = params[i]["gamma"].shape[1]               # real width (64 for layer 3)
        vecs = vecs.at[2 * i, :w].set(params[i]["gamma"][0])
        vecs = vecs.at[2 * i + 1, :w].set(params[i]["beta"][0])
    b5_row = jnp.full((lane_w,), _NEG_FILL, jnp.float32).at[:n_out].set(params[4]["b"][0])
    vecs = vecs.at[8].set(b5_row)

    return (w1, w2, w3, w4, w5, vecs)


def _vmem_limit_bytes(batch, n_features, nout_pad, param_bytes):
    """Honest single-block VMEM budget with a generation-aware cap."""
    widths = (n_features, 512, 256, 128, 128, nout_pad)
    # f32 z / BN temporaries + output block, plus bf16 activation copies (per row).
    per_row = 4 * sum(widths) + 2 * sum(widths[:-1])
    est = 2 * batch * per_row + param_bytes + (2 << 20)   # x2 safety + params + slack
    try:
        cap = int(0.7 * pltpu.get_tpu_info().vmem_capacity_bytes)  # ~89 MiB on v5e/v6e, ~44 MiB on v7x
    except Exception:
        cap = 48 << 20  # conservative fallback: safe on v7x's 64 MiB physical VMEM
    return int(min(max(est, 8 << 20), cap))


@functools.partial(jax.jit, static_argnames=("n_out", "vmem_limit"))
def _dnn_forward_jit(x, kernel_params, n_out, vmem_limit):
    batch = x.shape[0]
    w1, w2, w3, w4, w5p, vecs = kernel_params
    nout_pad = w5p.shape[1]

    vmem_spec = pl.BlockSpec(memory_space=pltpu.MemorySpace.VMEM)
    out_pad = pl.pallas_call(
        _dnn_kernel,
        out_shape=jax.ShapeDtypeStruct((batch, nout_pad), jnp.float32),
        in_specs=[vmem_spec] * 7,
        out_specs=vmem_spec,
        compiler_params=pltpu.CompilerParams(vmem_limit_bytes=vmem_limit),
    )(x, w1, w2, w3, w4, w5p, vecs)
    return out_pad[:, :n_out]


def dnn_forward(x, kernel_params, n_out):
    batch, n_features = x.shape
    nout_pad = kernel_params[4].shape[1]
    param_bytes = sum(int(a.size) * a.dtype.itemsize for a in kernel_params)
    vmem_limit = _vmem_limit_bytes(batch, n_features, nout_pad, param_bytes)
    return _dnn_forward_jit(x, kernel_params, n_out, vmem_limit)


def reference_forward(x, params):
    """Pure-JAX reference with the same bf16-matmul / f32-elsewhere recipe.
    Keeps the hidden Linear biases (as in the PyTorch module); BN cancels them."""
    eps = 1e-5
    h = x.astype(jnp.float32)
    for i, p in enumerate(params):
        z = jnp.dot(h.astype(jnp.bfloat16), p["w"].astype(jnp.bfloat16),
                    preferred_element_type=jnp.float32) + p["b"]
        if i < len(params) - 1:
            mu = jnp.mean(z, axis=0, keepdims=True)
            var = jnp.mean((z - mu) ** 2, axis=0, keepdims=True)
            h = jnp.maximum((z - mu) / jnp.sqrt(var + eps) * p["gamma"] + p["beta"], 0.0)
        else:
            h = z
    return jax.nn.softmax(h, axis=1)


if __name__ == "__main__":
    n_features, n_out = 32, 10
    batch = 256  # multiple of 8 sublanes; fills the MXU M dimension on v6e/v7x

    key = jax.random.PRNGKey(0)
    k_x, k_p = jax.random.split(key)
    x = jax.random.normal(k_x, (batch, n_features), dtype=jnp.float32)
    params = init_params(k_p, n_features, n_out)

    # Perturb BN affine params and biases (deterministically) so the packed-parameter
    # path is actually exercised by the correctness check (init leaves them at 1/0/0).
    ks = jax.random.split(jax.random.PRNGKey(1), 3 * len(params))
    for i, p in enumerate(params):
        if "gamma" in p:
            p["gamma"] = 1.0 + 0.1 * jax.random.normal(ks[3 * i], p["gamma"].shape)
            p["beta"] = 0.1 * jax.random.normal(ks[3 * i + 1], p["beta"].shape)
        p["b"] = 0.1 * jax.random.normal(ks[3 * i + 2], p["b"].shape)

    kernel_params = pack_params(params, n_out)

    out = dnn_forward(x, kernel_params, n_out)
    out = jax.block_until_ready(out)

    ref = reference_forward(x, params)
    assert out.shape == (batch, n_out)
    assert bool(jnp.all(jnp.isfinite(out)))
    # approx-reciprocal softmax + bf16 matmuls -> loose-but-meaningful tolerances
    assert jnp.allclose(jnp.sum(out, axis=1), 1.0, atol=1e-2)
    assert jnp.allclose(out, ref, atol=2e-2, rtol=2e-2)

    print("KERNEL_OK")
</pallas_src>

<mosaic_0001>
module attributes {stable_mosaic.version = 11 : i64} {
  func.func @_dnn_kernel(%arg0: memref<256x32xf32, #tpu.memory_space<vmem>>, %arg1: memref<32x512xbf16, #tpu.memory_space<vmem>>, %arg2: memref<512x256xbf16, #tpu.memory_space<vmem>>, %arg3: memref<256x128xbf16, #tpu.memory_space<vmem>>, %arg4: memref<128x128xbf16, #tpu.memory_space<vmem>>, %arg5: memref<128x128xbf16, #tpu.memory_space<vmem>>, %arg6: memref<16x512xf32, #tpu.memory_space<vmem>>, %arg7: memref<256x128xf32, #tpu.memory_space<vmem>>) attributes {dimension_semantics = [], scalar_prefetch = 0 : i64, scratch_operands = 0 : i64, tpu.core_type = #tpu.core_type<tc>} {
    %c0 = arith.constant 0 : index
    %c0_0 = arith.constant 0 : index
    %0 = vector.load %arg0[%c0, %c0_0] : memref<256x32xf32, #tpu.memory_space<vmem>>, vector<256x32xf32>
    %1 = arith.truncf %0 : vector<256x32xf32> to vector<256x32xbf16>
    %c0_1 = arith.constant 0 : index
    %c0_2 = arith.constant 0 : index
    %2 = vector.load %arg1[%c0_1, %c0_2] : memref<32x512xbf16, #tpu.memory_space<vmem>>, vector<32x512xbf16>
    %cst = arith.constant dense<0.000000e+00> : vector<256x512xf32>
    %3 = tpu.matmul %1, %2, %cst {dimension_numbers = #tpu.dot_dimension_numbers<[1], [0], [0], [1], [0, 0, 1, 1], [], []>} : vector<256x32xbf16>, vector<32x512xbf16>, vector<256x512xf32> -> vector<256x512xf32>
    %c0_3 = arith.constant 0 : index
    %c0_4 = arith.constant 0 : index
    %4 = vector.load %arg6[%c0_3, %c0_4] : memref<16x512xf32, #tpu.memory_space<vmem>>, vector<1x512xf32>
    %c1 = arith.constant 1 : index
    %c0_5 = arith.constant 0 : index
    %5 = vector.load %arg6[%c1, %c0_5] : memref<16x512xf32, #tpu.memory_space<vmem>>, vector<1x512xf32>
    %cst_6 = arith.constant dense<0.000000e+00> : vector<512xf32>
    %6 = vector.multi_reduction <add>, %3, %cst_6 [0] : vector<256x512xf32> to vector<512xf32>
    %7 = vector.shape_cast %6 : vector<512xf32> to vector<1x512xf32>
    %cst_7 = arith.constant 2.560000e+02 : f32
    %8 = vector.broadcast %cst_7 : f32 to vector<1x512xf32>
    %9 = arith.divf %7, %8 : vector<1x512xf32>
    %10 = vector.broadcast %9 : vector<1x512xf32> to vector<256x512xf32>
    %11 = arith.subf %3, %10 : vector<256x512xf32>
    %12 = arith.mulf %11, %11 : vector<256x512xf32>
    %cst_8 = arith.constant dense<0.000000e+00> : vector<512xf32>
    %13 = vector.multi_reduction <add>, %12, %cst_8 [0] : vector<256x512xf32> to vector<512xf32>
    %14 = vector.shape_cast %13 : vector<512xf32> to vector<1x512xf32>
    %cst_9 = arith.constant 2.560000e+02 : f32
    %15 = vector.broadcast %cst_9 : f32 to vector<1x512xf32>
    %16 = arith.divf %14, %15 : vector<1x512xf32>
    %cst_10 = arith.constant 9.99999974E-6 : f32
    %17 = vector.broadcast %cst_10 : f32 to vector<1x512xf32>
    %18 = arith.addf %16, %17 : vector<1x512xf32>
    %19 = math.rsqrt %18 : vector<1x512xf32>
    %20 = arith.mulf %4, %19 : vector<1x512xf32>
    %21 = vector.broadcast %20 : vector<1x512xf32> to vector<256x512xf32>
    %22 = arith.mulf %11, %21 : vector<256x512xf32>
    %23 = vector.broadcast %5 : vector<1x512xf32> to vector<256x512xf32>
    %24 = arith.addf %22, %23 : vector<256x512xf32>
    %cst_11 = arith.constant 0.000000e+00 : f32
    %25 = vector.broadcast %cst_11 : f32 to vector<256x512xf32>
    %26 = arith.maximumf %24, %25 : vector<256x512xf32>
    %27 = arith.truncf %26 : vector<256x512xf32> to vector<256x512xbf16>
    %c0_12 = arith.constant 0 : index
    %c0_13 = arith.constant 0 : index
    %28 = vector.load %arg2[%c0_12, %c0_13] : memref<512x256xbf16, #tpu.memory_space<vmem>>, vector<512x256xbf16>
    %cst_14 = arith.constant dense<0.000000e+00> : vector<256x256xf32>
    %29 = tpu.matmul %27, %28, %cst_14 {dimension_numbers = #tpu.dot_dimension_numbers<[1], [0], [0], [1], [0, 0, 1, 1], [], []>} : vector<256x512xbf16>, vector<512x256xbf16>, vector<256x256xf32> -> vector<256x256xf32>
    %c2 = arith.constant 2 : index
    %c0_15 = arith.constant 0 : index
    %30 = vector.load %arg6[%c2, %c0_15] : memref<16x512xf32, #tpu.memory_space<vmem>>, vector<1x256xf32>
    %c3 = arith.constant 3 : index
    %c0_16 = arith.constant 0 : index
    %31 = vector.load %arg6[%c3, %c0_16] : memref<16x512xf32, #tpu.memory_space<vmem>>, vector<1x256xf32>
    %cst_17 = arith.constant dense<0.000000e+00> : vector<256xf32>
    %32 = vector.multi_reduction <add>, %29, %cst_17 [0] : vector<256x256xf32> to vector<256xf32>
    %33 = vector.shape_cast %32 : vector<256xf32> to vector<1x256xf32>
    %cst_18 = arith.constant 2.560000e+02 : f32
    %34 = vector.broadcast %cst_18 : f32 to vector<1x256xf32>
    %35 = arith.divf %33, %34 : vector<1x256xf32>
    %36 = vector.broadcast %35 : vector<1x256xf32> to vector<256x256xf32>
    %37 = arith.subf %29, %36 : vector<256x256xf32>
    %38 = arith.mulf %37, %37 : vector<256x256xf32>
    %cst_19 = arith.constant dense<0.000000e+00> : vector<256xf32>
    %39 = vector.multi_reduction <add>, %38, %cst_19 [0] : vector<256x256xf32> to vector<256xf32>
    %40 = vector.shape_cast %39 : vector<256xf32> to vector<1x256xf32>
    %cst_20 = arith.constant 2.560000e+02 : f32
    %41 = vector.broadcast %cst_20 : f32 to vector<1x256xf32>
    %42 = arith.divf %40, %41 : vector<1x256xf32>
    %cst_21 = arith.constant 9.99999974E-6 : f32
    %43 = vector.broadcast %cst_21 : f32 to vector<1x256xf32>
    %44 = arith.addf %42, %43 : vector<1x256xf32>
    %45 = math.rsqrt %44 : vector<1x256xf32>
    %46 = arith.mulf %30, %45 : vector<1x256xf32>
    %47 = vector.broadcast %46 : vector<1x256xf32> to vector<256x256xf32>
    %48 = arith.mulf %37, %47 : vector<256x256xf32>
    %49 = vector.broadcast %31 : vector<1x256xf32> to vector<256x256xf32>
    %50 = arith.addf %48, %49 : vector<256x256xf32>
    %cst_22 = arith.constant 0.000000e+00 : f32
    %51 = vector.broadcast %cst_22 : f32 to vector<256x256xf32>
    %52 = arith.maximumf %50, %51 : vector<256x256xf32>
    %53 = arith.truncf %52 : vector<256x256xf32> to vector<256x256xbf16>
    %c0_23 = arith.constant 0 : index
    %c0_24 = arith.constant 0 : index
    %54 = vector.load %arg3[%c0_23, %c0_24] : memref<256x128xbf16, #tpu.memory_space<vmem>>, vector<256x128xbf16>
    %cst_25 = arith.constant dense<0.000000e+00> : vector<256x128xf32>
    %55 = tpu.matmul %53, %54, %cst_25 {dimension_numbers = #tpu.dot_dimension_numbers<[1], [0], [0], [1], [0, 0, 1, 1], [], []>} : vector<256x256xbf16>, vector<256x128xbf16>, vector<256x128xf32> -> vector<256x128xf32>
    %c4 = arith.constant 4 : index
    %c0_26 = arith.constant 0 : index
    %56 = vector.load %arg6[%c4, %c0_26] : memref<16x512xf32, #tpu.memory_space<vmem>>, vector<1x128xf32>
    %c5 = arith.constant 5 : index
    %c0_27 = arith.constant 0 : index
    %57 = vector.load %arg6[%c5, %c0_27] : memref<16x512xf32, #tpu.memory_space<vmem>>, vector<1x128xf32>
    %cst_28 = arith.constant dense<0.000000e+00> : vector<128xf32>
    %58 = vector.multi_reduction <add>, %55, %cst_28 [0] : vector<256x128xf32> to vector<128xf32>
    %59 = vector.shape_cast %58 : vector<128xf32> to vector<1x128xf32>
    %cst_29 = arith.constant 2.560000e+02 : f32
    %60 = vector.broadcast %cst_29 : f32 to vector<1x128xf32>
    %61 = arith.divf %59, %60 : vector<1x128xf32>
    %62 = vector.broadcast %61 : vector<1x128xf32> to vector<256x128xf32>
    %63 = arith.subf %55, %62 : vector<256x128xf32>
    %64 = arith.mulf %63, %63 : vector<256x128xf32>
    %cst_30 = arith.constant dense<0.000000e+00> : vector<128xf32>
    %65 = vector.multi_reduction <add>, %64, %cst_30 [0] : vector<256x128xf32> to vector<128xf32>
    %66 = vector.shape_cast %65 : vector<128xf32> to vector<1x128xf32>
    %cst_31 = arith.constant 2.560000e+02 : f32
    %67 = vector.broadcast %cst_31 : f32 to vector<1x128xf32>
    %68 = arith.divf %66, %67 : vector<1x128xf32>
    %cst_32 = arith.constant 9.99999974E-6 : f32
    %69 = vector.broadcast %cst_32 : f32 to vector<1x128xf32>
    %70 = arith.addf %68, %69 : vector<1x128xf32>
    %71 = math.rsqrt %70 : vector<1x128xf32>
    %72 = arith.mulf %56, %71 : vector<1x128xf32>
    %73 = vector.broadcast %72 : vector<1x128xf32> to vector<256x128xf32>
    %74 = arith.mulf %63, %73 : vector<256x128xf32>
    %75 = vector.broadcast %57 : vector<1x128xf32> to vector<256x128xf32>
    %76 = arith.addf %74, %75 : vector<256x128xf32>
    %cst_33 = arith.constant 0.000000e+00 : f32
    %77 = vector.broadcast %cst_33 : f32 to vector<256x128xf32>
    %78 = arith.maximumf %76, %77 : vector<256x128xf32>
    %79 = arith.truncf %78 : vector<256x128xf32> to vector<256x128xbf16>
    %c0_34 = arith.constant 0 : index
    %c0_35 = arith.constant 0 : index
    %80 = vector.load %arg4[%c0_34, %c0_35] : memref<128x128xbf16, #tpu.memory_space<vmem>>, vector<128x128xbf16>
    %cst_36 = arith.constant dense<0.000000e+00> : vector<256x128xf32>
    %81 = tpu.matmul %79, %80, %cst_36 {dimension_numbers = #tpu.dot_dimension_numbers<[1], [0], [0], [1], [0, 0, 1, 1], [], []>} : vector<256x128xbf16>, vector<128x128xbf16>, vector<256x128xf32> -> vector<256x128xf32>
    %c6 = arith.constant 6 : index
    %c0_37 = arith.constant 0 : index
    %82 = vector.load %arg6[%c6, %c0_37] : memref<16x512xf32, #tpu.memory_space<vmem>>, vector<1x128xf32>
    %c7 = arith.constant 7 : index
    %c0_38 = arith.constant 0 : index
    %83 = vector.load %arg6[%c7, %c0_38] : memref<16x512xf32, #tpu.memory_space<vmem>>, vector<1x128xf32>
    %cst_39 = arith.constant dense<0.000000e+00> : vector<128xf32>
    %84 = vector.multi_reduction <add>, %81, %cst_39 [0] : vector<256x128xf32> to vector<128xf32>
    %85 = vector.shape_cast %84 : vector<128xf32> to vector<1x128xf32>
    %cst_40 = arith.constant 2.560000e+02 : f32
    %86 = vector.broadcast %cst_40 : f32 to vector<1x128xf32>
    %87 = arith.divf %85, %86 : vector<1x128xf32>
    %88 = vector.broadcast %87 : vector<1x128xf32> to vector<256x128xf32>
    %89 = arith.subf %81, %88 : vector<256x128xf32>
    %90 = arith.mulf %89, %89 : vector<256x128xf32>
    %cst_41 = arith.constant dense<0.000000e+00> : vector<128xf32>
    %91 = vector.multi_reduction <add>, %90, %cst_41 [0] : vector<256x128xf32> to vector<128xf32>
    %92 = vector.shape_cast %91 : vector<128xf32> to vector<1x128xf32>
    %cst_42 = arith.constant 2.560000e+02 : f32
    %93 = vector.broadcast %cst_42 : f32 to vector<1x128xf32>
    %94 = arith.divf %92, %93 : vector<1x128xf32>
    %cst_43 = arith.constant 9.99999974E-6 : f32
    %95 = vector.broadcast %cst_43 : f32 to vector<1x128xf32>
    %96 = arith.addf %94, %95 : vector<1x128xf32>
    %97 = math.rsqrt %96 : vector<1x128xf32>
    %98 = arith.mulf %82, %97 : vector<1x128xf32>
    %99 = vector.broadcast %98 : vector<1x128xf32> to vector<256x128xf32>
    %100 = arith.mulf %89, %99 : vector<256x128xf32>
    %101 = vector.broadcast %83 : vector<1x128xf32> to vector<256x128xf32>
    %102 = arith.addf %100, %101 : vector<256x128xf32>
    %cst_44 = arith.constant 0.000000e+00 : f32
    %103 = vector.broadcast %cst_44 : f32 to vector<256x128xf32>
    %104 = arith.maximumf %102, %103 : vector<256x128xf32>
    %105 = arith.truncf %104 : vector<256x128xf32> to vector<256x128xbf16>
    %c0_45 = arith.constant 0 : index
    %c0_46 = arith.constant 0 : index
    %106 = vector.load %arg5[%c0_45, %c0_46] : memref<128x128xbf16, #tpu.memory_space<vmem>>, vector<128x128xbf16>
    %cst_47 = arith.constant dense<0.000000e+00> : vector<256x128xf32>
    %107 = tpu.matmul %105, %106, %cst_47 {dimension_numbers = #tpu.dot_dimension_numbers<[1], [0], [0], [1], [0, 0, 1, 1], [], []>} : vector<256x128xbf16>, vector<128x128xbf16>, vector<256x128xf32> -> vector<256x128xf32>
    %c8 = arith.constant 8 : index
    %c0_48 = arith.constant 0 : index
    %108 = vector.load %arg6[%c8, %c0_48] : memref<16x512xf32, #tpu.memory_space<vmem>>, vector<1x128xf32>
    %109 = vector.broadcast %108 : vector<1x128xf32> to vector<256x128xf32>
    %110 = arith.addf %107, %109 : vector<256x128xf32>
    %cst_49 = arith.constant dense<0xFF800000> : vector<256xf32>
    %111 = vector.multi_reduction <maximumf>, %110, %cst_49 [1] : vector<256x128xf32> to vector<256xf32>
    %112 = vector.shape_cast %111 : vector<256xf32> to vector<256x1xf32>
    %113 = vector.broadcast %112 : vector<256x1xf32> to vector<256x128xf32>
    %114 = arith.subf %110, %113 : vector<256x128xf32>
    %115 = math.exp %114 : vector<256x128xf32>
    %cst_50 = arith.constant dense<0.000000e+00> : vector<256xf32>
    %116 = vector.multi_reduction <add>, %115, %cst_50 [1] : vector<256x128xf32> to vector<256xf32>
    %117 = vector.shape_cast %116 : vector<256xf32> to vector<256x1xf32>
    %118 = tpu.reciprocal %117 {approx = true} : vector<256x1xf32> -> vector<256x1xf32>
    %119 = vector.broadcast %118 : vector<256x1xf32> to vector<256x128xf32>
    %120 = arith.mulf %115, %119 : vector<256x128xf32>
    %c0_51 = arith.constant 0 : index
    %c0_52 = arith.constant 0 : index
    %121 = vector.load %arg7[%c0_51, %c0_52] : memref<256x128xf32, #tpu.memory_space<vmem>>, vector<256x128xf32>
    tpu.vector_store %arg7[%c0_51, %c0_52], %120 {strides = array<i32>} : memref<256x128xf32, #tpu.memory_space<vmem>>, vector<256x128xf32>,
    return
  }
}

</mosaic_0001>

<llo_original>
// kernel: _dnn_forward_jit.1
$region0: #{_dnn_forward_jit.1}
  #allocation0 [shape = 'u32[]', space=smem, size = 0x4, offset = 0x4, fixed_abs, tag = 'smem constant byte address 0x4 - core index']
  #allocation1 [shape = 'u32[144,128]{1,0:T(1,128)}', space=vmem, size = 0x12000, scoped, tag = 'internal scratch']
  %s0 = inlined_call_operand.vmem [shape: f32[256,32], index: 0, kind: input, shape index: {}]
  %s1 = inlined_call_operand.vmem [shape: bf16[32,512], index: 1, kind: input, shape index: {}]
  %s2 = inlined_call_operand.hbm [shape: bf16[512,256], index: 2, kind: input, shape index: {}]
  %s3 = inlined_call_operand.vmem [shape: bf16[256,128], index: 3, kind: input, shape index: {}]
  %s4 = inlined_call_operand.vmem [shape: bf16[128,128], index: 4, kind: input, shape index: {}]
  %s5 = inlined_call_operand.vmem [shape: bf16[128,128], index: 5, kind: input, shape index: {}]
  %s6 = inlined_call_operand.hbm [shape: f32[16,512], index: 6, kind: input, shape index: {}]
  %s7 = inlined_call_operand.vmem [shape: f32[256,128], index: 7, kind: output, shape index: {}]
  %s8 = sld [smem:[#allocation0]]
  $region46: #{_dnn_forward_jit.1} parent=0
    _
  %s10 = ssub.s32 1, %s8
  %s11 = scalar_select 0, %s10, %s8
  $region1: #{_dnn_forward_jit.1} parent=0
    #allocation2 [shape = 'u8[262144]{0}', space=vmem, size = 0x40000, scoped, tag = 'input window, operand 2, single buffered']
    #allocation3 [shape = 's32[1]{0}', space=sflag, size = 0x4, scoped, tag = 'scoped memory for _dnn_forward_jit.1']
    #allocation4 [shape = 'u8[32768]{0}', space=vmem, size = 0x8000, scoped, tag = 'input window, operand 6, single buffered']
    #allocation5 [shape = 's32[1]{0}', space=sflag, size = 0x4, scoped, tag = 'scoped memory for _dnn_forward_jit.1']
    %12 = vsyncpa [#allocation3], 0
    %13 = vsyncpa [#allocation5], 0
    // Predicated region
    $region2: #{_dnn_forward_jit.1} parent=1 // pred_check
      _
    $region3: #{_dnn_forward_jit.1} parent=1 // pred_check_branch
      %15 = sbr.rel (0) target = $region5
    $region4: #{_dnn_forward_jit.1} parent=1 // pred_region
      _
    $region5: #{_dnn_forward_jit.1} parent=1 // pred_fallthru
      _
    // Predicated region
    $region6: #{_dnn_forward_jit.1} parent=1 // pred_check
      _
    $region7: #{_dnn_forward_jit.1} parent=1 // pred_check_branch
      %17 = sbr.rel (0) target = $region9
    $region8: #{_dnn_forward_jit.1} parent=1 // pred_region
      _
    $region9: #{_dnn_forward_jit.1} parent=1 // pred_fallthru
      _
    // Predicated region
    $region10: #{_dnn_forward_jit.1} parent=1 // pred_check
      _
    $region11: #{_dnn_forward_jit.1} parent=1 // pred_check_branch
      %19 = sbr.rel (0) target = $region13
    $region12: #{_dnn_forward_jit.1} parent=1 // pred_region
      %s21 = ssub.s32 8192, 8192
      %22 = vsyncadd [#allocation3], %s21
      %s23 = sshll.u32 [#allocation2], 4
      %s24 = int_to_ptr.vmem [resolvable:$true] %s23
      %29 = dma.hbm_to_vmem [thread:$0]  %s2, 8192, %s24, [#allocation3], 128, 128, 8
    $region13: #{_dnn_forward_jit.1} parent=1 // pred_fallthru
      _
    // Predicated region
    $region14: #{_dnn_forward_jit.1} parent=1 // pred_check
      _
    $region15: #{_dnn_forward_jit.1} parent=1 // pred_check_branch
      %31 = sbr.rel (0) target = $region17
    $region16: #{_dnn_forward_jit.1} parent=1 // pred_region
      _
    $region17: #{_dnn_forward_jit.1} parent=1 // pred_fallthru
      _
    // Predicated region
    $region18: #{_dnn_forward_jit.1} parent=1 // pred_check
      _
    $region19: #{_dnn_forward_jit.1} parent=1 // pred_check_branch
      %33 = sbr.rel (0) target = $region21
    $region20: #{_dnn_forward_jit.1} parent=1 // pred_region
      _
    $region21: #{_dnn_forward_jit.1} parent=1 // pred_fallthru
      _
    // Predicated region
    $region22: #{_dnn_forward_jit.1} parent=1 // pred_check
      _
    $region23: #{_dnn_forward_jit.1} parent=1 // pred_check_branch
      %35 = sbr.rel (0) target = $region25
    $region24: #{_dnn_forward_jit.1} parent=1 // pred_region
      _
    $region25: #{_dnn_forward_jit.1} parent=1 // pred_fallthru
      _
    // Predicated region
    $region26: #{_dnn_forward_jit.1} parent=1 // pred_check
      _
    $region27: #{_dnn_forward_jit.1} parent=1 // pred_check_branch
      %37 = sbr.rel (0) target = $region29
    $region28: #{_dnn_forward_jit.1} parent=1 // pred_region
      %s39 = ssub.s32 1024, 1024
      %40 = vsyncadd [#allocation5], %s39
      %s41 = sshll.u32 [#allocation4], 4
      %s42 = int_to_ptr.vmem [resolvable:$true] %s41
      %47 = dma.hbm_to_vmem [thread:$0]  %s6, 1024, %s42, [#allocation5], 512, 512, 32
    $region29: #{_dnn_forward_jit.1} parent=1 // pred_fallthru
      _
    // Predicated region
    $region30: #{_dnn_forward_jit.1} parent=1 // pred_check
      _
    $region31: #{_dnn_forward_jit.1} parent=1 // pred_check_branch
      %49 = sbr.rel (0) target = $region33
    $region32: #{_dnn_forward_jit.1} parent=1 // pred_region
      %50 = dma.done [#allocation3], 8192
    $region33: #{_dnn_forward_jit.1} parent=1 // pred_fallthru
      _
    // Predicated region
    $region34: #{_dnn_forward_jit.1} parent=1 // pred_check
      _
    $region35: #{_dnn_forward_jit.1} parent=1 // pred_check_branch
      %52 = sbr.rel (0) target = $region37
    $region36: #{_dnn_forward_jit.1} parent=1 // pred_region
      %53 = dma.done [#allocation5], 1024
    $region37: #{_dnn_forward_jit.1} parent=1 // pred_fallthru
      _
    %v55 = vld [vmem:[%s0] sm:$0xff]
    %v56 = vld [vmem:[%s0 + $0x8] sm:$0xff]
    %v57 = vld [vmem:[%s0 + $0x10] sm:$0xff]
    %v58 = vld [vmem:[%s0 + $0x18] sm:$0xff]
    %v59 = vld [vmem:[%s0 + $0x20] sm:$0xff]
    %v60 = vld [vmem:[%s0 + $0x28] sm:$0xff]
    %v61 = vld [vmem:[%s0 + $0x30] sm:$0xff]
    %v62 = vld [vmem:[%s0 + $0x38] sm:$0xff]
    %v63 = vld [vmem:[%s0 + $0x40] sm:$0xff]
    %v64 = vld [vmem:[%s0 + $0x48] sm:$0xff]
    %v65 = vld [vmem:[%s0 + $0x50] sm:$0xff]
    %v66 = vld [vmem:[%s0 + $0x58] sm:$0xff]
    %v67 = vld [vmem:[%s0 + $0x60] sm:$0xff]
    %v68 = vld [vmem:[%s0 + $0x68] sm:$0xff]
    %v69 = vld [vmem:[%s0 + $0x70] sm:$0xff]
    %v70 = vld [vmem:[%s0 + $0x78] sm:$0xff]
    %v71 = vld [vmem:[%s0 + $0x80] sm:$0xff]
    %v72 = vld [vmem:[%s0 + $0x88] sm:$0xff]
    %v73 = vld [vmem:[%s0 + $0x90] sm:$0xff]
    %v74 = vld [vmem:[%s0 + $0x98] sm:$0xff]
    %v75 = vld [vmem:[%s0 + $0xa0] sm:$0xff]
    %v76 = vld [vmem:[%s0 + $0xa8] sm:$0xff]
    %v77 = vld [vmem:[%s0 + $0xb0] sm:$0xff]
    %v78 = vld [vmem:[%s0 + $0xb8] sm:$0xff]
    %v79 = vld [vmem:[%s0 + $0xc0] sm:$0xff]
    %v80 = vld [vmem:[%s0 + $0xc8] sm:$0xff]
    %v81 = vld [vmem:[%s0 + $0xd0] sm:$0xff]
    %v82 = vld [vmem:[%s0 + $0xd8] sm:$0xff]
    %v83 = vld [vmem:[%s0 + $0xe0] sm:$0xff]
    %v84 = vld [vmem:[%s0 + $0xe8] sm:$0xff]
    %v85 = vld [vmem:[%s0 + $0xf0] sm:$0xff]
    %v86 = vld [vmem:[%s0 + $0xf8] sm:$0xff]
    %v87 = vpack.c.bf16 %v56, %v55
    %v88 = vpack.c.bf16 %v58, %v57
    %v89 = vpack.c.bf16 %v60, %v59
    %v90 = vpack.c.bf16 %v62, %v61
    %v91 = vpack.c.bf16 %v64, %v63
    %v92 = vpack.c.bf16 %v66, %v65
    %v93 = vpack.c.bf16 %v68, %v67
    %v94 = vpack.c.bf16 %v70, %v69
    %v95 = vpack.c.bf16 %v72, %v71
    %v96 = vpack.c.bf16 %v74, %v73
    %v97 = vpack.c.bf16 %v76, %v75
    %v98 = vpack.c.bf16 %v78, %v77
    %v99 = vpack.c.bf16 %v80, %v79
    %v100 = vpack.c.bf16 %v82, %v81
    %v101 = vpack.c.bf16 %v84, %v83
    %v102 = vpack.c.bf16 %v86, %v85
    %v103 = vld [vmem:[%s1] sm:$0xff]
    %v104 = vld [vmem:[%s1 + $0x8] sm:$0xff]
    %v105 = vld [vmem:[%s1 + $0x10] sm:$0xff]
    %v106 = vld [vmem:[%s1 + $0x18] sm:$0xff]
    %v107 = vld [vmem:[%s1 + $0x20] sm:$0xff]
    %v108 = vld [vmem:[%s1 + $0x28] sm:$0xff]
    %v109 = vld [vmem:[%s1 + $0x30] sm:$0xff]
    %v110 = vld [vmem:[%s1 + $0x38] sm:$0xff]
    %v119 = vunpack.c.l.b16 %v103
    %v120 = vunpack.c.h.b16 %v103
    %v121 = vunpack.c.l.b16 %v104
    %v122 = vunpack.c.h.b16 %v104
    %v123 = vunpack.c.l.b16 %v105
    %v124 = vunpack.c.h.b16 %v105
    %v125 = vunpack.c.l.b16 %v106
    %v126 = vunpack.c.h.b16 %v106
    %v127 = vunpack.c.l.b16 %v107
    %v128 = vunpack.c.h.b16 %v107
    %v129 = vunpack.c.l.b16 %v108
    %v130 = vunpack.c.h.b16 %v108
    %v131 = vunpack.c.l.b16 %v109
    %v132 = vunpack.c.h.b16 %v109
    %v133 = vunpack.c.l.b16 %v110
    %v134 = vunpack.c.h.b16 %v110
    %v135 = vpack.c.b16 %v123, %v119
    %v136 = vpack.c.b16 %v124, %v120
    %v137 = vpack.c.b16 %v125, %v121
    %v138 = vpack.c.b16 %v126, %v122
    %v139 = vpack.c.b16 %v131, %v127
    %v140 = vpack.c.b16 %v132, %v128
    %v141 = vpack.c.b16 %v133, %v129
    %v142 = vpack.c.b16 %v134, %v130
    %vm151 = vcmask 261120
    %v153 = vsel %vm151, %v87, 0
    %v156 = vsel %vm151, %v88, 0
    %v159 = vsel %vm151, %v89, 0
    %v162 = vsel %vm151, %v90, 0
    %v165 = vsel %vm151, %v91, 0
    %v168 = vsel %vm151, %v92, 0
    %v171 = vsel %vm151, %v93, 0
    %v174 = vsel %vm151, %v94, 0
    %v177 = vsel %vm151, %v95, 0
    %v180 = vsel %vm151, %v96, 0
    %v183 = vsel %vm151, %v97, 0
    %v186 = vsel %vm151, %v98, 0
    %v189 = vsel %vm151, %v99, 0
    %v192 = vsel %vm151, %v100, 0
    %v195 = vsel %vm151, %v101, 0
    %v198 = vsel %vm151, %v102, 0
    %200 = vmatprep.subr.bf16.mxu0 %v136
    %201 = vmatpush1.bf16.msra.mxu0 %v135
    %202 = vmatprep.subr.bf16.mxu0 %v140
    %203 = vmatpush1.bf16.msra.mxu0 %v139
    %204 = vmatprep.subr.bf16.mxu0 0
    %205 = vmatpush1.bf16.msra.mxu0 0
    %206 = vmatprep.subr.bf16.mxu0 0
    %207 = vmatpush1.bf16.msra.mxu0 0
    %208 = vmatprep.subr.bf16.mxu0 0
    %209 = vmatpush1.bf16.msra.mxu0 0
    %210 = vmatprep.subr.bf16.mxu0 0
    %211 = vmatpush1.bf16.msra.mxu0 0
    %212 = vmatprep.subr.bf16.mxu0 0
    %213 = vmatpush1.bf16.msra.mxu0 0
    %214 = vmatprep.subr.bf16.mxu0 0
    %215 = vmatpush1.bf16.msra.mxu0 0
    %216 = vmatprep.subr.bf16.mxu0 0
    %217 = vmatpush1.bf16.msra.mxu0 0
    %218 = vmatprep.subr.bf16.mxu0 0
    %219 = vmatpush1.bf16.msra.mxu0 0
    %220 = vmatprep.subr.bf16.mxu0 0
    %221 = vmatpush1.bf16.msra.mxu0 0
    %222 = vmatprep.subr.bf16.mxu0 0
    %223 = vmatpush1.bf16.msra.mxu0 0
    %224 = vmatprep.subr.bf16.mxu0 0
    %225 = vmatpush1.bf16.msra.mxu0 0
    %226 = vmatprep.subr.bf16.mxu0 0
    %227 = vmatpush1.bf16.msra.mxu0 0
    %228 = vmatprep.subr.bf16.mxu0 0
    %229 = vmatpush1.bf16.msra.mxu0 0
    %230 = vmatprep.subr.bf16.mxu0 0
    %231 = vmatpush1.bf16.msra.mxu0 0
    %232 = vmatprep.mubr.bf16.mxu0 0
    %233 = vmatmul.mubr.bf16.gmra.mrb[0].mxu0 %v153
    %v234 = vpop.f32.mrb[0].mxu0
    %v235 = vadd.f32 0.0, %v234
    %v236 = vpop.f32.mrb[0].mxu0
    %v237 = vadd.f32 0.0, %v236
    %v238 = vpop.f32.mrb[0].mxu0
    %v239 = vadd.f32 0.0, %v238
    %v240 = vpop.f32.mrb[0].mxu0
    %v241 = vadd.f32 0.0, %v240
    %242 = vmatprep.mubr.bf16.mxu0 0
    %243 = vmatmul.mubr.bf16.gmra.mrb[0].mxu0 %v156
    %v244 = vpop.f32.mrb[0].mxu0
    %v245 = vadd.f32 0.0, %v244
    %v246 = vpop.f32.mrb[0].mxu0
    %v247 = vadd.f32 0.0, %v246
    %v248 = vpop.f32.mrb[0].mxu0
    %v249 = vadd.f32 0.0, %v248
    %v250 = vpop.f32.mrb[0].mxu0
    %v251 = vadd.f32 0.0, %v250
    %252 = vmatprep.mubr.bf16.mxu0 0
    %253 = vmatmul.mubr.bf16.gmra.mrb[0].mxu0 %v159
    %v254 = vpop.f32.mrb[0].mxu0
    %v255 = vadd.f32 0.0, %v254
    %v256 = vpop.f32.mrb[0].mxu0
    %v257 = vadd.f32 0.0, %v256
    %v258 = vpop.f32.mrb[0].mxu0
    %v259 = vadd.f32 0.0, %v258
    %v260 = vpop.f32.mrb[0].mxu0
    %v261 = vadd.f32 0.0, %v260
    %262 = vmatprep.mubr.bf16.mxu0 0
    %263 = vmatmul.mubr.bf16.gmra.mrb[0].mxu0 %v162
    %v264 = vpop.f32.mrb[0].mxu0
    %v265 = vadd.f32 0.0, %v264
    %v266 = vpop.f32.mrb[0].mxu0
    %v267 = vadd.f32 0.0, %v266
    %v268 = vpop.f32.mrb[0].mxu0
    %v269 = vadd.f32 0.0, %v268
    %v270 = vpop.f32.mrb[0].mxu0
    %v271 = vadd.f32 0.0, %v270
    %272 = vmatprep.mubr.bf16.mxu0 0
    %273 = vmatmul.mubr.bf16.gmra.mrb[0].mxu0 %v165
    %v274 = vpop.f32.mrb[0].mxu0
    %v275 = vadd.f32 0.0, %v274
    %v276 = vpop.f32.mrb[0].mxu0
    %v277 = vadd.f32 0.0, %v276
    %v278 = vpop.f32.mrb[0].mxu0
    %v279 = vadd.f32 0.0, %v278
    %v280 = vpop.f32.mrb[0].mxu0
    %v281 = vadd.f32 0.0, %v280
    %282 = vmatprep.mubr.bf16.mxu0 0
    %283 = vmatmul.mubr.bf16.gmra.mrb[0].mxu0 %v168
    %v284 = vpop.f32.mrb[0].mxu0
    %v285 = vadd.f32 0.0, %v284
    %v286 = vpop.f32.mrb[0].mxu0
    %v287 = vadd.f32 0.0, %v286
    %v288 = vpop.f32.mrb[0].mxu0
    %v289 = vadd.f32 0.0, %v288
    %v290 = vpop.f32.mrb[0].mxu0
    %v291 = vadd.f32 0.0, %v290
    %292 = vmatprep.mubr.bf16.mxu0 0
    %293 = vmatmul.mubr.bf16.gmra.mrb[0].mxu0 %v171
    %v294 = vpop.f32.mrb[0].mxu0
    %v295 = vadd.f32 0.0, %v294
    %v296 = vpop.f32.mrb[0].mxu0
    %v297 = vadd.f32 0.0, %v296
    %v298 = vpop.f32.mrb[0].mxu0
    %v299 = vadd.f32 0.0, %v298
    %v300 = vpop.f32.mrb[0].mxu0
    %v301 = vadd.f32 0.0, %v300
    %302 = vmatprep.mubr.bf16.mxu0 0
    %303 = vmatmul.mubr.bf16.gmra.mrb[0].mxu0 %v174
    %v304 = vpop.f32.mrb[0].mxu0
    %v305 = vadd.f32 0.0, %v304
    %v306 = vpop.f32.mrb[0].mxu0
    %v307 = vadd.f32 0.0, %v306
    %v308 = vpop.f32.mrb[0].mxu0
    %v309 = vadd.f32 0.0, %v308
    %v310 = vpop.f32.mrb[0].mxu0
    %v311 = vadd.f32 0.0, %v310
    %312 = vmatprep.mubr.bf16.mxu0 0
    %313 = vmatmul.mubr.bf16.gmra.mrb[0].mxu0 %v177
    %v314 = vpop.f32.mrb[0].mxu0
    %v315 = vadd.f32 0.0, %v314
    %v316 = vpop.f32.mrb[0].mxu0
    %v317 = vadd.f32 0.0, %v316
    %v318 = vpop.f32.mrb[0].mxu0
    %v319 = vadd.f32 0.0, %v318
    %v320 = vpop.f32.mrb[0].mxu0
    %v321 = vadd.f32 0.0, %v320
    %322 = vmatprep.mubr.bf16.mxu0 0
    %323 = vmatmul.mubr.bf16.gmra.mrb[0].mxu0 %v180
    %v324 = vpop.f32.mrb[0].mxu0
    %v325 = vadd.f32 0.0, %v324
    %v326 = vpop.f32.mrb[0].mxu0
    %v327 = vadd.f32 0.0, %v326
    %v328 = vpop.f32.mrb[0].mxu0
    %v329 = vadd.f32 0.0, %v328
    %v330 = vpop.f32.mrb[0].mxu0
    %v331 = vadd.f32 0.0, %v330
    %332 = vmatprep.mubr.bf16.mxu0 0
    %333 = vmatmul.mubr.bf16.gmra.mrb[0].mxu0 %v183
    %v334 = vpop.f32.mrb[0].mxu0
    %v335 = vadd.f32 0.0, %v334
    %v336 = vpop.f32.mrb[0].mxu0
    %v337 = vadd.f32 0.0, %v336
    %v338 = vpop.f32.mrb[0].mxu0
    %v339 = vadd.f32 0.0, %v338
    %v340 = vpop.f32.mrb[0].mxu0
    %v341 = vadd.f32 0.0, %v340
    %342 = vmatprep.mubr.bf16.mxu0 0
    %343 = vmatmul.mubr.bf16.gmra.mrb[0].mxu0 %v186
    %v344 = vpop.f32.mrb[0].mxu0
    %v345 = vadd.f32 0.0, %v344
    %v346 = vpop.f32.mrb[0].mxu0
    %v347 = vadd.f32 0.0, %v346
    %v348 = vpop.f32.mrb[0].mxu0
    %v349 = vadd.f32 0.0, %v348
    %v350 = vpop.f32.mrb[0].mxu0
    %v351 = vadd.f32 0.0, %v350
    %352 = vmatprep.mubr.bf16.mxu0 0
    %353 = vmatmul.mubr.bf16.gmra.mrb[0].mxu0 %v189
    %v354 = vpop.f32.mrb[0].mxu0
    %v355 = vadd.f32 0.0, %v354
    %v356 = vpop.f32.mrb[0].mxu0
    %v357 = vadd.f32 0.0, %v356
    %v358 = vpop.f32.mrb[0].mxu0
    %v359 = vadd.f32 0.0, %v358
    %v360 = vpop.f32.mrb[0].mxu0
    %v361 = vadd.f32 0.0, %v360
    %362 = vmatprep.mubr.bf16.mxu0 0
    %363 = vmatmul.mubr.bf16.gmra.mrb[0].mxu0 %v192
    %v364 = vpop.f32.mrb[0].mxu0
    %v365 = vadd.f32 0.0, %v364
    %v366 = vpop.f32.mrb[0].mxu0
    %v367 = vadd.f32 0.0, %v366
    %v368 = vpop.f32.mrb[0].mxu0
    %v369 = vadd.f32 0.0, %v368
    %v370 = vpop.f32.mrb[0].mxu0
    %v371 = vadd.f32 0.0, %v370
    %372 = vmatprep.mubr.bf16.mxu0 0
    %373 = vmatmul.mubr.bf16.gmra.mrb[0].mxu0 %v195
    %v374 = vpop.f32.mrb[0].mxu0
    %v375 = vadd.f32 0.0, %v374
    %v376 = vpop.f32.mrb[0].mxu0
    %v377 = vadd.f32 0.0, %v376
    %v378 = vpop.f32.mrb[0].mxu0
    %v379 = vadd.f32 0.0, %v378
    %v380 = vpop.f32.mrb[0].mxu0
    %v381 = vadd.f32 0.0, %v380
    %382 = vmatprep.mubr.bf16.mxu0 0
    %383 = vmatmul.mubr.bf16.gmra.mrb[0].mxu0 %v198
    %v384 = vpop.f32.mrb[0].mxu0
    %v385 = vadd.f32 0.0, %v384
    %v386 = vpop.f32.mrb[0].mxu0
    %v387 = vadd.f32 0.0, %v386
    %v388 = vpop.f32.mrb[0].mxu0
    %v389 = vadd.f32 0.0, %v388
    %v390 = vpop.f32.mrb[0].mxu0
    %v391 = vadd.f32 0.0, %v390
    %392 = vdwg.mxu0
    %393 = vmatprep.subr.bf16.mxu0 %v138
    %394 = vmatpush1.bf16.msra.mxu0 %v137
    %395 = vmatprep.subr.bf16.mxu0 %v142
    %396 = vmatpush1.bf16.msra.mxu0 %v141
    %397 = vmatprep.subr.bf16.mxu0 0
    %398 = vmatpush1.bf16.msra.mxu0 0
    %399 = vmatprep.subr.bf16.mxu0 0
    %400 = vmatpush1.bf16.msra.mxu0 0
    %401 = vmatprep.subr.bf16.mxu0 0
    %402 = vmatpush1.bf16.msra.mxu0 0
    %403 = vmatprep.subr.bf16.mxu0 0
    %404 = vmatpush1.bf16.msra.mxu0 0
    %405 = vmatprep.subr.bf16.mxu0 0
    %406 = vmatpush1.bf16.msra.mxu0 0
    %407 = vmatprep.subr.bf16.mxu0 0
    %408 = vmatpush1.bf16.msra.mxu0 0
    %409 = vmatprep.subr.bf16.mxu0 0
    %410 = vmatpush1.bf16.msra.mxu0 0
    %411 = vmatprep.subr.bf16.mxu0 0
    %412 = vmatpush1.bf16.msra.mxu0 0
    %413 = vmatprep.subr.bf16.mxu0 0
    %414 = vmatpush1.bf16.msra.mxu0 0
    %415 = vmatprep.subr.bf16.mxu0 0
    %416 = vmatpush1.bf16.msra.mxu0 0
    %417 = vmatprep.subr.bf16.mxu0 0
    %418 = vmatpush1.bf16.msra.mxu0 0
    %419 = vmatprep.subr.bf16.mxu0 0
    %420 = vmatpush1.bf16.msra.mxu0 0
    %421 = vmatprep.subr.bf16.mxu0 0
    %422 = vmatpush1.bf16.msra.mxu0 0
    %423 = vmatprep.subr.bf16.mxu0 0
    %424 = vmatpush1.bf16.msra.mxu0 0
    %425 = vmatprep.mubr.bf16.mxu0 0
    %426 = vmatmul.mubr.bf16.gmra.mrb[0].mxu0 %v153
    %v427 = vpop.f32.mrb[0].mxu0
    %v428 = vadd.f32 0.0, %v427
    %v429 = vpop.f32.mrb[0].mxu0
    %v430 = vadd.f32 0.0, %v429
    %v431 = vpop.f32.mrb[0].mxu0
    %v432 = vadd.f32 0.0, %v431
    %v433 = vpop.f32.mrb[0].mxu0
    %v434 = vadd.f32 0.0, %v433
    %435 = vmatprep.mubr.bf16.mxu0 0
    %436 = vmatmul.mubr.bf16.gmra.mrb[0].mxu0 %v156
    %v437 = vpop.f32.mrb[0].mxu0
    %v438 = vadd.f32 0.0, %v437
    %v439 = vpop.f32.mrb[0].mxu0
    %v440 = vadd.f32 0.0, %v439
    %v441 = vpop.f32.mrb[0].mxu0
    %v442 = vadd.f32 0.0, %v441
    %v443 = vpop.f32.mrb[0].mxu0
    %v444 = vadd.f32 0.0, %v443
    %445 = vmatprep.mubr.bf16.mxu0 0
    %446 = vmatmul.mubr.bf16.gmra.mrb[0].mxu0 %v159
    %v447 = vpop.f32.mrb[0].mxu0
    %v448 = vadd.f32 0.0, %v447
    %v449 = vpop.f32.mrb[0].mxu0
    %v450 = vadd.f32 0.0, %v449
    %v451 = vpop.f32.mrb[0].mxu0
    %v452 = vadd.f32 0.0, %v451
    %v453 = vpop.f32.mrb[0].mxu0
    %v454 = vadd.f32 0.0, %v453
    %455 = vmatprep.mubr.bf16.mxu0 0
    %456 = vmatmul.mubr.bf16.gmra.mrb[0].mxu0 %v162
    %v457 = vpop.f32.mrb[0].mxu0
    %v458 = vadd.f32 0.0, %v457
    %v459 = vpop.f32.mrb[0].mxu0
    %v460 = vadd.f32 0.0, %v459
    %v461 = vpop.f32.mrb[0].mxu0
    %v462 = vadd.f32 0.0, %v461
    %v463 = vpop.f32.mrb[0].mxu0
    %v464 = vadd.f32 0.0, %v463
    %465 = vmatprep.mubr.bf16.mxu0 0
    %466 = vmatmul.mubr.bf16.gmra.mrb[0].mxu0 %v165
    %v467 = vpop.f32.mrb[0].mxu0
    %v468 = vadd.f32 0.0, %v467
    %v469 = vpop.f32.mrb[0].mxu0
    %v470 = vadd.f32 0.0, %v469
    %v471 = vpop.f32.mrb[0].mxu0
    %v472 = vadd.f32 0.0, %v471
    %v473 = vpop.f32.mrb[0].mxu0
    %v474 = vadd.f32 0.0, %v473
    %475 = vmatprep.mubr.bf16.mxu0 0
    %476 = vmatmul.mubr.bf16.gmra.mrb[0].mxu0 %v168
    %v477 = vpop.f32.mrb[0].mxu0
    %v478 = vadd.f32 0.0, %v477
    %v479 = vpop.f32.mrb[0].mxu0
    %v480 = vadd.f32 0.0, %v479
    %v481 = vpop.f32.mrb[0].mxu0
    %v482 = vadd.f32 0.0, %v481
    %v483 = vpop.f32.mrb[0].mxu0
    %v484 = vadd.f32 0.0, %v483
    %485 = vmatprep.mubr.bf16.mxu0 0
    %486 = vmatmul.mubr.bf16.gmra.mrb[0].mxu0 %v171
    %v487 = vpop.f32.mrb[0].mxu0
    %v488 = vadd.f32 0.0, %v487
    %v489 = vpop.f32.mrb[0].mxu0
    %v490 = vadd.f32 0.0, %v489
    %v491 = vpop.f32.mrb[0].mxu0
    %v492 = vadd.f32 0.0, %v491
    %v493 = vpop.f32.mrb[0].mxu0
    %v494 = vadd.f32 0.0, %v493
    %495 = vmatprep.mubr.bf16.mxu0 0
    %496 = vmatmul.mubr.bf16.gmra.mrb[0].mxu0 %v174
    %v497 = vpop.f32.mrb[0].mxu0
    %v498 = vadd.f32 0.0, %v497
    %v499 = vpop.f32.mrb[0].mxu0
    %v500 = vadd.f32 0.0, %v499
    %v501 = vpop.f32.mrb[0].mxu0
    %v502 = vadd.f32 0.0, %v501
    %v503 = vpop.f32.mrb[0].mxu0
    %v504 = vadd.f32 0.0, %v503
    %505 = vmatprep.mubr.bf16.mxu0 0
    %506 = vmatmul.mubr.bf16.gmra.mrb[0].mxu0 %v177
    %v507 = vpop.f32.mrb[0].mxu0
    %v508 = vadd.f32 0.0, %v507
    %v509 = vpop.f32.mrb[0].mxu0
    %v510 = vadd.f32 0.0, %v509
    %v511 = vpop.f32.mrb[0].mxu0
    %v512 = vadd.f32 0.0, %v511
    %v513 = vpop.f32.mrb[0].mxu0
    %v514 = vadd.f32 0.0, %v513
    %515 = vmatprep.mubr.bf16.mxu0 0
    %516 = vmatmul.mubr.bf16.gmra.mrb[0].mxu0 %v180
    %v517 = vpop.f32.mrb[0].mxu0
    %v518 = vadd.f32 0.0, %v517
    %v519 = vpop.f32.mrb[0].mxu0
    %v520 = vadd.f32 0.0, %v519
    %v521 = vpop.f32.mrb[0].mxu0
    %v522 = vadd.f32 0.0, %v521
    %v523 = vpop.f32.mrb[0].mxu0
    %v524 = vadd.f32 0.0, %v523
    %525 = vmatprep.mubr.bf16.mxu0 0
    %526 = vmatmul.mubr.bf16.gmra.mrb[0].mxu0 %v183
    %v527 = vpop.f32.mrb[0].mxu0
    %v528 = vadd.f32 0.0, %v527
    %v529 = vpop.f32.mrb[0].mxu0
    %v530 = vadd.f32 0.0, %v529
    %v531 = vpop.f32.mrb[0].mxu0
    %v532 = vadd.f32 0.0, %v531
    %v533 = vpop.f32.mrb[0].mxu0
    %v534 = vadd.f32 0.0, %v533
    %535 = vmatprep.mubr.bf16.mxu0 0
    %536 = vmatmul.mubr.bf16.gmra.mrb[0].mxu0 %v186
    %v537 = vpop.f32.mrb[0].mxu0
    %v538 = vadd.f32 0.0, %v537
    %v539 = vpop.f32.mrb[0].mxu0
    %v540 = vadd.f32 0.0, %v539
    %v541 = vpop.f32.mrb[0].mxu0
    %v542 = vadd.f32 0.0, %v541
    %v543 = vpop.f32.mrb[0].mxu0
    %v544 = vadd.f32 0.0, %v543
    %545 = vmatprep.mubr.bf16.mxu0 0
    %546 = vmatmul.mubr.bf16.gmra.mrb[0].mxu0 %v189
    %v547 = vpop.f32.mrb[0].mxu0
    %v548 = vadd.f32 0.0, %v547
    %v549 = vpop.f32.mrb[0].mxu0
    %v550 = vadd.f32 0.0, %v549
    %v551 = vpop.f32.mrb[0].mxu0
    %v552 = vadd.f32 0.0, %v551
    %v553 = vpop.f32.mrb[0].mxu0
    %v554 = vadd.f32 0.0, %v553
    %555 = vmatprep.mubr.bf16.mxu0 0
    %556 = vmatmul.mubr.bf16.gmra.mrb[0].mxu0 %v192
    %v557 = vpop.f32.mrb[0].mxu0
    %v558 = vadd.f32 0.0, %v557
    %v559 = vpop.f32.mrb[0].mxu0
    %v560 = vadd.f32 0.0, %v559
    %v561 = vpop.f32.mrb[0].mxu0
    %v562 = vadd.f32 0.0, %v561
    %v563 = vpop.f32.mrb[0].mxu0
    %v564 = vadd.f32 0.0, %v563
    %565 = vmatprep.mubr.bf16.mxu0 0
    %566 = vmatmul.mubr.bf16.gmra.mrb[0].mxu0 %v195
    %v567 = vpop.f32.mrb[0].mxu0
    %v568 = vadd.f32 0.0, %v567
    %v569 = vpop.f32.mrb[0].mxu0
    %v570 = vadd.f32 0.0, %v569
    %v571 = vpop.f32.mrb[0].mxu0
    %v572 = vadd.f32 0.0, %v571
    %v573 = vpop.f32.mrb[0].mxu0
    %v574 = vadd.f32 0.0, %v573
    %575 = vmatprep.mubr.bf16.mxu0 0
    %576 = vmatmul.mubr.bf16.gmra.mrb[0].mxu0 %v198
    %v577 = vpop.f32.mrb[0].mxu0
    %v578 = vadd.f32 0.0, %v577
    %v579 = vpop.f32.mrb[0].mxu0
    %v580 = vadd.f32 0.0, %v579
    %v581 = vpop.f32.mrb[0].mxu0
    %v582 = vadd.f32 0.0, %v581
    %v583 = vpop.f32.mrb[0].mxu0
    %v584 = vadd.f32 0.0, %v583
    %585 = vdwg.mxu0
    %v586 = vld [vmem:[#allocation4] ss:$8 sm:$0xf]
    %s587 = scalar_lea.vmem [#allocation4], 1
    %v588 = vld [vmem:[%s587] ss:$8 sm:$0xf]
    %v589 = vadd.f32 %v235, %v239
    %v590 = vadd.f32 %v589, %v245
    %v591 = vadd.f32 %v590, %v249
    %v592 = vadd.f32 %v591, %v255
    %v593 = vadd.f32 %v592, %v259
    %v594 = vadd.f32 %v593, %v265
    %v595 = vadd.f32 %v594, %v269
    %v596 = vadd.f32 %v595, %v275
    %v597 = vadd.f32 %v596, %v279
    %v598 = vadd.f32 %v597, %v285
    %v599 = vadd.f32 %v598, %v289
    %v600 = vadd.f32 %v599, %v295
    %v601 = vadd.f32 %v600, %v299
    %v602 = vadd.f32 %v601, %v305
    %v603 = vadd.f32 %v602, %v309
    %v604 = vadd.f32 %v603, %v315
    %v605 = vadd.f32 %v604, %v319
    %v606 = vadd.f32 %v605, %v325
    %v607 = vadd.f32 %v606, %v329
    %v608 = vadd.f32 %v607, %v335
    %v609 = vadd.f32 %v608, %v339
    %v610 = vadd.f32 %v609, %v345
    %v611 = vadd.f32 %v610, %v349
    %v612 = vadd.f32 %v611, %v355
    %v613 = vadd.f32 %v612, %v359
    %v614 = vadd.f32 %v613, %v365
    %v615 = vadd.f32 %v614, %v369
    %v616 = vadd.f32 %v615, %v375
    %v617 = vadd.f32 %v616, %v379
    %v618 = vadd.f32 %v617, %v385
    %v619 = vadd.f32 %v618, %v389
    %v620 = vrot.slane %v619, 4
    %v621 = vadd.f32 %v619, %v620
    %v622 = vrot.slane %v621, 2
    %v623 = vadd.f32 %v621, %v622
    %v624 = vrot.slane %v623, 1
    %v625 = vadd.f32 %v623, %v624
    %v626 = vadd.f32 %v237, %v241
    %v627 = vadd.f32 %v626, %v247
    %v628 = vadd.f32 %v627, %v251
    %v629 = vadd.f32 %v628, %v257
    %v630 = vadd.f32 %v629, %v261
    %v631 = vadd.f32 %v630, %v267
    %v632 = vadd.f32 %v631, %v271
    %v633 = vadd.f32 %v632, %v277
    %v634 = vadd.f32 %v633, %v281
    %v635 = vadd.f32 %v634, %v287
    %v636 = vadd.f32 %v635, %v291
    %v637 = vadd.f32 %v636, %v297
    %v638 = vadd.f32 %v637, %v301
    %v639 = vadd.f32 %v638, %v307
    %v640 = vadd.f32 %v639, %v311
    %v641 = vadd.f32 %v640, %v317
    %v642 = vadd.f32 %v641, %v321
    %v643 = vadd.f32 %v642, %v327
    %v644 = vadd.f32 %v643, %v331
    %v645 = vadd.f32 %v644, %v337
    %v646 = vadd.f32 %v645, %v341
    %v647 = vadd.f32 %v646, %v347
    %v648 = vadd.f32 %v647, %v351
    %v649 = vadd.f32 %v648, %v357
    %v650 = vadd.f32 %v649, %v361
    %v651 = vadd.f32 %v650, %v367
    %v652 = vadd.f32 %v651, %v371
    %v653 = vadd.f32 %v652, %v377
    %v654 = vadd.f32 %v653, %v381
    %v655 = vadd.f32 %v654, %v387
    %v656 = vadd.f32 %v655, %v391
    %v657 = vrot.slane %v656, 4
    %v658 = vadd.f32 %v656, %v657
    %v659 = vrot.slane %v658, 2
    %v660 = vadd.f32 %v658, %v659
    %v661 = vrot.slane %v660, 1
    %v662 = vadd.f32 %v660, %v661
    %v663 = vadd.f32 %v428, %v432
    %v664 = vadd.f32 %v663, %v438
    %v665 = vadd.f32 %v664, %v442
    %v666 = vadd.f32 %v665, %v448
    %v667 = vadd.f32 %v666, %v452
    %v668 = vadd.f32 %v667, %v458
    %v669 = vadd.f32 %v668, %v462
    %v670 = vadd.f32 %v669, %v468
    %v671 = vadd.f32 %v670, %v472
    %v672 = vadd.f32 %v671, %v478
    %v673 = vadd.f32 %v672, %v482
    %v674 = vadd.f32 %v673, %v488
    %v675 = vadd.f32 %v674, %v492
    %v676 = vadd.f32 %v675, %v498
    %v677 = vadd.f32 %v676, %v502
    %v678 = vadd.f32 %v677, %v508
    %v679 = vadd.f32 %v678, %v512
    %v680 = vadd.f32 %v679, %v518
    %v681 = vadd.f32 %v680, %v522
    %v682 = vadd.f32 %v681, %v528
    %v683 = vadd.f32 %v682, %v532
    %v684 = vadd.f32 %v683, %v538
    %v685 = vadd.f32 %v684, %v542
    %v686 = vadd.f32 %v685, %v548
    %v687 = vadd.f32 %v686, %v552
    %v688 = vadd.f32 %v687, %v558
    %v689 = vadd.f32 %v688, %v562
    %v690 = vadd.f32 %v689, %v568
    %v691 = vadd.f32 %v690, %v572
    %v692 = vadd.f32 %v691, %v578
    %v693 = vadd.f32 %v692, %v582
    %v694 = vrot.slane %v693, 4
    %v695 = vadd.f32 %v693, %v694
    %v696 = vrot.slane %v695, 2
    %v697 = vadd.f32 %v695, %v696
    %v698 = vrot.slane %v697, 1
    %v699 = vadd.f32 %v697, %v698
    %v700 = vadd.f32 %v430, %v434
    %v701 = vadd.f32 %v700, %v440
    %v702 = vadd.f32 %v701, %v444
    %v703 = vadd.f32 %v702, %v450
    %v704 = vadd.f32 %v703, %v454
    %v705 = vadd.f32 %v704, %v460
    %v706 = vadd.f32 %v705, %v464
    %v707 = vadd.f32 %v706, %v470
    %v708 = vadd.f32 %v707, %v474
    %v709 = vadd.f32 %v708, %v480
    %v710 = vadd.f32 %v709, %v484
    %v711 = vadd.f32 %v710, %v490
    %v712 = vadd.f32 %v711, %v494
    %v713 = vadd.f32 %v712, %v500
    %v714 = vadd.f32 %v713, %v504
    %v715 = vadd.f32 %v714, %v510
    %v716 = vadd.f32 %v715, %v514
    %v717 = vadd.f32 %v716, %v520
    %v718 = vadd.f32 %v717, %v524
    %v719 = vadd.f32 %v718, %v530
    %v720 = vadd.f32 %v719, %v534
    %v721 = vadd.f32 %v720, %v540
    %v722 = vadd.f32 %v721, %v544
    %v723 = vadd.f32 %v722, %v550
    %v724 = vadd.f32 %v723, %v554
    %v725 = vadd.f32 %v724, %v560
    %v726 = vadd.f32 %v725, %v564
    %v727 = vadd.f32 %v726, %v570
    %v728 = vadd.f32 %v727, %v574
    %v729 = vadd.f32 %v728, %v580
    %v730 = vadd.f32 %v729, %v584
    %v731 = vrot.slane %v730, 4
    %v732 = vadd.f32 %v730, %v731
    %v733 = vrot.slane %v732, 2
    %v734 = vadd.f32 %v732, %v733
    %v735 = vrot.slane %v734, 1
    %v736 = vadd.f32 %v734, %v735
    %v737 = vrcp.pop 256.0
    %v738 = vmul.f32 %v625, %v737
    %v739 = vmul.f32 %v662, %v737
    %v740 = vmul.f32 %v699, %v737
    %v741 = vmul.f32 %v736, %v737
    %v742 = vsub.f32 %v235, %v738
    %v743 = vsub.f32 %v237, %v739
    %v744 = vsub.f32 %v428, %v740
    %v745 = vsub.f32 %v430, %v741
    %v746 = vsub.f32 %v239, %v738
    %v747 = vsub.f32 %v241, %v739
    %v748 = vsub.f32 %v432, %v740
    %v749 = vsub.f32 %v434, %v741
    %v750 = vsub.f32 %v245, %v738
    %v751 = vsub.f32 %v247, %v739
    %v752 = vsub.f32 %v438, %v740
    %v753 = vsub.f32 %v440, %v741
    %v754 = vsub.f32 %v249, %v738
    %v755 = vsub.f32 %v251, %v739
    %v756 = vsub.f32 %v442, %v740
    %v757 = vsub.f32 %v444, %v741
    %v758 = vsub.f32 %v255, %v738
    %v759 = vsub.f32 %v257, %v739
    %v760 = vsub.f32 %v448, %v740
    %v761 = vsub.f32 %v450, %v741
    %v762 = vsub.f32 %v259, %v738
    %v763 = vsub.f32 %v261, %v739
    %v764 = vsub.f32 %v452, %v740
    %v765 = vsub.f32 %v454, %v741
    %v766 = vsub.f32 %v265, %v738
    %v767 = vsub.f32 %v267, %v739
    %v768 = vsub.f32 %v458, %v740
    %v769 = vsub.f32 %v460, %v741
    %v770 = vsub.f32 %v269, %v738
    %v771 = vsub.f32 %v271, %v739
    %v772 = vsub.f32 %v462, %v740
    %v773 = vsub.f32 %v464, %v741
    %v774 = vsub.f32 %v275, %v738
    %v775 = vsub.f32 %v277, %v739
    %v776 = vsub.f32 %v468, %v740
    %v777 = vsub.f32 %v470, %v741
    %v778 = vsub.f32 %v279, %v738
    %v779 = vsub.f32 %v281, %v739
    %v780 = vsub.f32 %v472, %v740
    %v781 = vsub.f32 %v474, %v741
    %v782 = vsub.f32 %v285, %v738
    %v783 = vsub.f32 %v287, %v739
    %v784 = vsub.f32 %v478, %v740
    %v785 = vsub.f32 %v480, %v741
    %v786 = vsub.f32 %v289, %v738
    %v787 = vsub.f32 %v291, %v739
    %v788 = vsub.f32 %v482, %v740
    %v789 = vsub.f32 %v484, %v741
    %v790 = vsub.f32 %v295, %v738
    %v791 = vsub.f32 %v297, %v739
    %v792 = vsub.f32 %v488, %v740
    %v793 = vsub.f32 %v490, %v741
    %v794 = vsub.f32 %v299, %v738
    %v795 = vsub.f32 %v301, %v739
    %v796 = vsub.f32 %v492, %v740
    %v797 = vsub.f32 %v494, %v741
    %v798 = vsub.f32 %v305, %v738
    %v799 = vsub.f32 %v307, %v739
    %v800 = vsub.f32 %v498, %v740
    %v801 = vsub.f32 %v500, %v741
    %v802 = vsub.f32 %v309, %v738
    %v803 = vsub.f32 %v311, %v739
    %v804 = vsub.f32 %v502, %v740
    %v805 = vsub.f32 %v504, %v741
    %v806 = vsub.f32 %v315, %v738
    %v807 = vsub.f32 %v317, %v739
    %v808 = vsub.f32 %v508, %v740
    %v809 = vsub.f32 %v510, %v741
    %v810 = vsub.f32 %v319, %v738
    %v811 = vsub.f32 %v321, %v739
    %v812 = vsub.f32 %v512, %v740
    %v813 = vsub.f32 %v514, %v741
    %v814 = vsub.f32 %v325, %v738
    %v815 = vsub.f32 %v327, %v739
    %v816 = vsub.f32 %v518, %v740
    %v817 = vsub.f32 %v520, %v741
    %v818 = vsub.f32 %v329, %v738
    %v819 = vsub.f32 %v331, %v739
    %v820 = vsub.f32 %v522, %v740
    %v821 = vsub.f32 %v524, %v741
    %v822 = vsub.f32 %v335, %v738
    %v823 = vsub.f32 %v337, %v739
    %v824 = vsub.f32 %v528, %v740
    %v825 = vsub.f32 %v530, %v741
    %v826 = vsub.f32 %v339, %v738
    %v827 = vsub.f32 %v341, %v739
    %v828 = vsub.f32 %v532, %v740
    %v829 = vsub.f32 %v534, %v741
    %v830 = vsub.f32 %v345, %v738
    %v831 = vsub.f32 %v347, %v739
    %v832 = vsub.f32 %v538, %v740
    %v833 = vsub.f32 %v540, %v741
    %v834 = vsub.f32 %v349, %v738
    %v835 = vsub.f32 %v351, %v739
    %v836 = vsub.f32 %v542, %v740
    %v837 = vsub.f32 %v544, %v741
    %v838 = vsub.f32 %v355, %v738
    %v839 = vsub.f32 %v357, %v739
    %v840 = vsub.f32 %v548, %v740
    %v841 = vsub.f32 %v550, %v741
    %v842 = vsub.f32 %v359, %v738
    %v843 = vsub.f32 %v361, %v739
    %v844 = vsub.f32 %v552, %v740
    %v845 = vsub.f32 %v554, %v741
    %v846 = vsub.f32 %v365, %v738
    %v847 = vsub.f32 %v367, %v739
    %v848 = vsub.f32 %v558, %v740
    %v849 = vsub.f32 %v560, %v741
    %v850 = vsub.f32 %v369, %v738
    %v851 = vsub.f32 %v371, %v739
    %v852 = vsub.f32 %v562, %v740
    %v853 = vsub.f32 %v564, %v741
    %v854 = vsub.f32 %v375, %v738
    %v855 = vsub.f32 %v377, %v739
    %v856 = vsub.f32 %v568, %v740
    %v857 = vsub.f32 %v570, %v741
    %v858 = vsub.f32 %v379, %v738
    %v859 = vsub.f32 %v381, %v739
    %v860 = vsub.f32 %v572, %v740
    %v861 = vsub.f32 %v574, %v741
    %v862 = vsub.f32 %v385, %v738
    %v863 = vsub.f32 %v387, %v739
    %v864 = vsub.f32 %v578, %v740
    %v865 = vsub.f32 %v580, %v741
    %v866 = vsub.f32 %v389, %v738
    %v867 = vsub.f32 %v391, %v739
    %v868 = vsub.f32 %v582, %v740
    %v869 = vsub.f32 %v584, %v741
    %v870 = vmul.f32 %v742, %v742
    %v871 = vmul.f32 %v743, %v743
    %v872 = vmul.f32 %v744, %v744
    %v873 = vmul.f32 %v745, %v745
    %v874 = vmul.f32 %v746, %v746
    %v875 = vmul.f32 %v747, %v747
    %v876 = vmul.f32 %v748, %v748
    %v877 = vmul.f32 %v749, %v749
    %v878 = vmul.f32 %v750, %v750
    %v879 = vmul.f32 %v751, %v751
    %v880 = vmul.f32 %v752, %v752
    %v881 = vmul.f32 %v753, %v753
    %v882 = vmul.f32 %v754, %v754
    %v883 = vmul.f32 %v755, %v755
    %v884 = vmul.f32 %v756, %v756
    %v885 = vmul.f32 %v757, %v757
    %v886 = vmul.f32 %v758, %v758
    %v887 = vmul.f32 %v759, %v759
    %v888 = vmul.f32 %v760, %v760
    %v889 = vmul.f32 %v761, %v761
    %v890 = vmul.f32 %v762, %v762
    %v891 = vmul.f32 %v763, %v763
    %v892 = vmul.f32 %v764, %v764
    %v893 = vmul.f32 %v765, %v765
    %v894 = vmul.f32 %v766, %v766
    %v895 = vmul.f32 %v767, %v767
    %v896 = vmul.f32 %v768, %v768
    %v897 = vmul.f32 %v769, %v769
    %v898 = vmul.f32 %v770, %v770
    %v899 = vmul.f32 %v771, %v771
    %v900 = vmul.f32 %v772, %v772
    %v901 = vmul.f32 %v773, %v773
    %v902 = vmul.f32 %v774, %v774
    %v903 = vmul.f32 %v775, %v775
    %v904 = vmul.f32 %v776, %v776
    %v905 = vmul.f32 %v777, %v777
    %v906 = vmul.f32 %v778, %v778
    %v907 = vmul.f32 %v779, %v779
    %v908 = vmul.f32 %v780, %v780
    %v909 = vmul.f32 %v781, %v781
    %v910 = vmul.f32 %v782, %v782
    %v911 = vmul.f32 %v783, %v783
    %v912 = vmul.f32 %v784, %v784
    %v913 = vmul.f32 %v785, %v785
    %v914 = vmul.f32 %v786, %v786
    %v915 = vmul.f32 %v787, %v787
    %v916 = vmul.f32 %v788, %v788
    %v917 = vmul.f32 %v789, %v789
    %v918 = vmul.f32 %v790, %v790
    %v919 = vmul.f32 %v791, %v791
    %v920 = vmul.f32 %v792, %v792
    %v921 = vmul.f32 %v793, %v793
    %v922 = vmul.f32 %v794, %v794
    %v923 = vmul.f32 %v795, %v795
    %v924 = vmul.f32 %v796, %v796
    %v925 = vmul.f32 %v797, %v797
    %v926 = vmul.f32 %v798, %v798
    %v927 = vmul.f32 %v799, %v799
    %v928 = vmul.f32 %v800, %v800
    %v929 = vmul.f32 %v801, %v801
    %v930 = vmul.f32 %v802, %v802
    %v931 = vmul.f32 %v803, %v803
    %v932 = vmul.f32 %v804, %v804
    %v933 = vmul.f32 %v805, %v805
    %v934 = vmul.f32 %v806, %v806
    %v935 = vmul.f32 %v807, %v807
    %v936 = vmul.f32 %v808, %v808
    %v937 = vmul.f32 %v809, %v809
    %v938 = vmul.f32 %v810, %v810
    %v939 = vmul.f32 %v811, %v811
    %v940 = vmul.f32 %v812, %v812
    %v941 = vmul.f32 %v813, %v813
    %v942 = vmul.f32 %v814, %v814
    %v943 = vmul.f32 %v815, %v815
    %v944 = vmul.f32 %v816, %v816
    %v945 = vmul.f32 %v817, %v817
    %v946 = vmul.f32 %v818, %v818
    %v947 = vmul.f32 %v819, %v819
    %v948 = vmul.f32 %v820, %v820
    %v949 = vmul.f32 %v821, %v821
    %v950 = vmul.f32 %v822, %v822
    %v951 = vmul.f32 %v823, %v823
    %v952 = vmul.f32 %v824, %v824
    %v953 = vmul.f32 %v825, %v825
    %v954 = vmul.f32 %v826, %v826
    %v955 = vmul.f32 %v827, %v827
    %v956 = vmul.f32 %v828, %v828
    %v957 = vmul.f32 %v829, %v829
    %v958 = vmul.f32 %v830, %v830
    %v959 = vmul.f32 %v831, %v831
    %v960 = vmul.f32 %v832, %v832
    %v961 = vmul.f32 %v833, %v833
    %v962 = vmul.f32 %v834, %v834
    %v963 = vmul.f32 %v835, %v835
    %v964 = vmul.f32 %v836, %v836
    %v965 = vmul.f32 %v837, %v837
    %v966 = vmul.f32 %v838, %v838
    %v967 = vmul.f32 %v839, %v839
    %v968 = vmul.f32 %v840, %v840
    %v969 = vmul.f32 %v841, %v841
    %v970 = vmul.f32 %v842, %v842
    %v971 = vmul.f32 %v843, %v843
    %v972 = vmul.f32 %v844, %v844
    %v973 = vmul.f32 %v845, %v845
    %v974 = vmul.f32 %v846, %v846
    %v975 = vmul.f32 %v847, %v847
    %v976 = vmul.f32 %v848, %v848
    %v977 = vmul.f32 %v849, %v849
    %v978 = vmul.f32 %v850, %v850
    %v979 = vmul.f32 %v851, %v851
    %v980 = vmul.f32 %v852, %v852
    %v981 = vmul.f32 %v853, %v853
    %v982 = vmul.f32 %v854, %v854
    %v983 = vmul.f32 %v855, %v855
    %v984 = vmul.f32 %v856, %v856
    %v985 = vmul.f32 %v857, %v857
    %v986 = vmul.f32 %v858, %v858
    %v987 = vmul.f32 %v859, %v859
    %v988 = vmul.f32 %v860, %v860
    %v989 = vmul.f32 %v861, %v861
    %v990 = vmul.f32 %v862, %v862
    %v991 = vmul.f32 %v863, %v863
    %v992 = vmul.f32 %v864, %v864
    %v993 = vmul.f32 %v865, %v865
    %v994 = vmul.f32 %v866, %v866
    %v995 = vmul.f32 %v867, %v867
    %v996 = vmul.f32 %v868, %v868
    %v997 = vmul.f32 %v869, %v869
    %v998 = vadd.f32 %v870, %v874
    %v999 = vadd.f32 %v998, %v878
    %v1000 = vadd.f32 %v999, %v882
    %v1001 = vadd.f32 %v1000, %v886
    %v1002 = vadd.f32 %v1001, %v890
    %v1003 = vadd.f32 %v1002, %v894
    %v1004 = vadd.f32 %v1003, %v898
    %v1005 = vadd.f32 %v1004, %v902
    %v1006 = vadd.f32 %v1005, %v906
    %v1007 = vadd.f32 %v1006, %v910
    %v1008 = vadd.f32 %v1007, %v914
    %v1009 = vadd.f32 %v1008, %v918
    %v1010 = vadd.f32 %v1009, %v922
    %v1011 = vadd.f32 %v1010, %v926
    %v1012 = vadd.f32 %v1011, %v930
    %v1013 = vadd.f32 %v1012, %v934
    %v1014 = vadd.f32 %v1013, %v938
    %v1015 = vadd.f32 %v1014, %v942
    %v1016 = vadd.f32 %v1015, %v946
    %v1017 = vadd.f32 %v1016, %v950
    %v1018 = vadd.f32 %v1017, %v954
    %v1019 = vadd.f32 %v1018, %v958
    %v1020 = vadd.f32 %v1019, %v962
    %v1021 = vadd.f32 %v1020, %v966
    %v1022 = vadd.f32 %v1021, %v970
    %v1023 = vadd.f32 %v1022, %v974
    %v1024 = vadd.f32 %v1023, %v978
    %v1025 = vadd.f32 %v1024, %v982
    %v1026 = vadd.f32 %v1025, %v986
    %v1027 = vadd.f32 %v1026, %v990
    %v1028 = vadd.f32 %v1027, %v994
    %v1029 = vrot.slane %v1028, 4
    %v1030 = vadd.f32 %v1028, %v1029
    %v1031 = vrot.slane %v1030, 2
    %v1032 = vadd.f32 %v1030, %v1031
    %v1033 = vrot.slane %v1032, 1
    %v1034 = vadd.f32 %v1032, %v1033
    %v1035 = vadd.f32 %v871, %v875
    %v1036 = vadd.f32 %v1035, %v879
    %v1037 = vadd.f32 %v1036, %v883
    %v1038 = vadd.f32 %v1037, %v887
    %v1039 = vadd.f32 %v1038, %v891
    %v1040 = vadd.f32 %v1039, %v895
    %v1041 = vadd.f32 %v1040, %v899
    %v1042 = vadd.f32 %v1041, %v903
    %v1043 = vadd.f32 %v1042, %v907
    %v1044 = vadd.f32 %v1043, %v911
    %v1045 = vadd.f32 %v1044, %v915
    %v1046 = vadd.f32 %v1045, %v919
    %v1047 = vadd.f32 %v1046, %v923
    %v1048 = vadd.f32 %v1047, %v927
    %v1049 = vadd.f32 %v1048, %v931
    %v1050 = vadd.f32 %v1049, %v935
    %v1051 = vadd.f32 %v1050, %v939
    %v1052 = vadd.f32 %v1051, %v943
    %v1053 = vadd.f32 %v1052, %v947
    %v1054 = vadd.f32 %v1053, %v951
    %v1055 = vadd.f32 %v1054, %v955
    %v1056 = vadd.f32 %v1055, %v959
    %v1057 = vadd.f32 %v1056, %v963
    %v1058 = vadd.f32 %v1057, %v967
    %v1059 = vadd.f32 %v1058, %v971
    %v1060 = vadd.f32 %v1059, %v975
    %v1061 = vadd.f32 %v1060, %v979
    %v1062 = vadd.f32 %v1061, %v983
    %v1063 = vadd.f32 %v1062, %v987
    %v1064 = vadd.f32 %v1063, %v991
    %v1065 = vadd.f32 %v1064, %v995
    %v1066 = vrot.slane %v1065, 4
    %v1067 = vadd.f32 %v1065, %v1066
    %v1068 = vrot.slane %v1067, 2
    %v1069 = vadd.f32 %v1067, %v1068
    %v1070 = vrot.slane %v1069, 1
    %v1071 = vadd.f32 %v1069, %v1070
    %v1072 = vadd.f32 %v872, %v876
    %v1073 = vadd.f32 %v1072, %v880
    %v1074 = vadd.f32 %v1073, %v884
    %v1075 = vadd.f32 %v1074, %v888
    %v1076 = vadd.f32 %v1075, %v892
    %v1077 = vadd.f32 %v1076, %v896
    %v1078 = vadd.f32 %v1077, %v900
    %v1079 = vadd.f32 %v1078, %v904
    %v1080 = vadd.f32 %v1079, %v908
    %v1081 = vadd.f32 %v1080, %v912
    %v1082 = vadd.f32 %v1081, %v916
    %v1083 = vadd.f32 %v1082, %v920
    %v1084 = vadd.f32 %v1083, %v924
    %v1085 = vadd.f32 %v1084, %v928
    %v1086 = vadd.f32 %v1085, %v932
    %v1087 = vadd.f32 %v1086, %v936
    %v1088 = vadd.f32 %v1087, %v940
    %v1089 = vadd.f32 %v1088, %v944
    %v1090 = vadd.f32 %v1089, %v948
    %v1091 = vadd.f32 %v1090, %v952
    %v1092 = vadd.f32 %v1091, %v956
    %v1093 = vadd.f32 %v1092, %v960
    %v1094 = vadd.f32 %v1093, %v964
    %v1095 = vadd.f32 %v1094, %v968
    %v1096 = vadd.f32 %v1095, %v972
    %v1097 = vadd.f32 %v1096, %v976
    %v1098 = vadd.f32 %v1097, %v980
    %v1099 = vadd.f32 %v1098, %v984
    %v1100 = vadd.f32 %v1099, %v988
    %v1101 = vadd.f32 %v1100, %v992
    %v1102 = vadd.f32 %v1101, %v996
    %v1103 = vrot.slane %v1102, 4
    %v1104 = vadd.f32 %v1102, %v1103
    %v1105 = vrot.slane %v1104, 2
    %v1106 = vadd.f32 %v1104, %v1105
    %v1107 = vrot.slane %v1106, 1
    %v1108 = vadd.f32 %v1106, %v1107
    %v1109 = vadd.f32 %v873, %v877
    %v1110 = vadd.f32 %v1109, %v881
    %v1111 = vadd.f32 %v1110, %v885
    %v1112 = vadd.f32 %v1111, %v889
    %v1113 = vadd.f32 %v1112, %v893
    %v1114 = vadd.f32 %v1113, %v897
    %v1115 = vadd.f32 %v1114, %v901
    %v1116 = vadd.f32 %v1115, %v905
    %v1117 = vadd.f32 %v1116, %v909
    %v1118 = vadd.f32 %v1117, %v913
    %v1119 = vadd.f32 %v1118, %v917
    %v1120 = vadd.f32 %v1119, %v921
    %v1121 = vadd.f32 %v1120, %v925
    %v1122 = vadd.f32 %v1121, %v929
    %v1123 = vadd.f32 %v1122, %v933
    %v1124 = vadd.f32 %v1123, %v937
    %v1125 = vadd.f32 %v1124, %v941
    %v1126 = vadd.f32 %v1125, %v945
    %v1127 = vadd.f32 %v1126, %v949
    %v1128 = vadd.f32 %v1127, %v953
    %v1129 = vadd.f32 %v1128, %v957
    %v1130 = vadd.f32 %v1129, %v961
    %v1131 = vadd.f32 %v1130, %v965
    %v1132 = vadd.f32 %v1131, %v969
    %v1133 = vadd.f32 %v1132, %v973
    %v1134 = vadd.f32 %v1133, %v977
    %v1135 = vadd.f32 %v1134, %v981
    %v1136 = vadd.f32 %v1135, %v985
    %v1137 = vadd.f32 %v1136, %v989
    %v1138 = vadd.f32 %v1137, %v993
    %v1139 = vadd.f32 %v1138, %v997
    %v1140 = vrot.slane %v1139, 4
    %v1141 = vadd.f32 %v1139, %v1140
    %v1142 = vrot.slane %v1141, 2
    %v1143 = vadd.f32 %v1141, %v1142
    %v1144 = vrot.slane %v1143, 1
    %v1145 = vadd.f32 %v1143, %v1144
    %v1146 = vmul.f32 %v1034, %v737
    %v1147 = vmul.f32 %v1071, %v737
    %v1148 = vmul.f32 %v1108, %v737
    %v1149 = vmul.f32 %v1145, %v737
    %v1150 = vadd.f32 %v1146, 1e-05
    %v1151 = vadd.f32 %v1147, 1e-05
    %v1152 = vadd.f32 %v1148, 1e-05
    %v1153 = vadd.f32 %v1149, 1e-05
    %v1154 = vrsqrt.pop %v1150
    %v1155 = vrsqrt.pop %v1151
    %v1156 = vrsqrt.pop %v1152
    %v1157 = vrsqrt.pop %v1153
    %v1162 = vcombine.low %v1154, %v1155
    %v1163 = vcombine.low %v1156, %v1157
    %v1165 = vunpack.c.l.s4 1966171168
    %v1166 = vunpack.c.0.s8 %v1165
    %v1167 = vlaneseq
    %v1168 = vshrl.u32 %v1167, 7
    %v1169 = vsub.s32 %v1166, %v1168
    %v1170 = vrot.slane %v1162, %v1169
    %v1172 = vunpack.c.l.s4 1966171168
    %v1173 = vunpack.c.0.s8 %v1172
    %v1174 = vlaneseq
    %v1175 = vshrl.u32 %v1174, 7
    %v1176 = vsub.s32 %v1173, %v1175
    %v1177 = vrot.slane %v1163, %v1176
    %v1178 = vcombine.low %v1170, %v1177
    %v1180 = vunpack.c.l.s4 1966171168
    %v1181 = vunpack.c.0.s8 %v1180
    %v1182 = vlaneseq
    %v1183 = vshrl.u32 %v1182, 7
    %v1184 = vsub.s32 %v1181, %v1183
    %v1185 = vrot.slane %v1178, %v1184
    %v1187 = vmul.f32 %v586, %v1185
    %v1189 = vlaneseq
    %v1190 = vshrl.u32 %v1189, 7
    %v1191 = vsub.s32 0, %v1190
    %v1192 = vrot.slane %v1187, %v1191
    %v1193 = vlaneseq
    %v1194 = vshrl.u32 %v1193, 7
    %v1195 = vsub.s32 1, %v1194
    %v1196 = vrot.slane %v1187, %v1195
    %v1197 = vlaneseq
    %v1198 = vshrl.u32 %v1197, 7
    %v1199 = vsub.s32 2, %v1198
    %v1200 = vrot.slane %v1187, %v1199
    %v1201 = vlaneseq
    %v1202 = vshrl.u32 %v1201, 7
    %v1203 = vsub.s32 3, %v1202
    %v1204 = vrot.slane %v1187, %v1203
    %v1209 = vmul.f32 %v742, %v1192
    %v1210 = vmul.f32 %v743, %v1196
    %v1211 = vmul.f32 %v744, %v1200
    %v1212 = vmul.f32 %v745, %v1204
    %v1213 = vmul.f32 %v746, %v1192
    %v1214 = vmul.f32 %v747, %v1196
    %v1215 = vmul.f32 %v748, %v1200
    %v1216 = vmul.f32 %v749, %v1204
    %v1217 = vmul.f32 %v750, %v1192
    %v1218 = vmul.f32 %v751, %v1196
    %v1219 = vmul.f32 %v752, %v1200
    %v1220 = vmul.f32 %v753, %v1204
    %v1221 = vmul.f32 %v754, %v1192
    %v1222 = vmul.f32 %v755, %v1196
    %v1223 = vmul.f32 %v756, %v1200
    %v1224 = vmul.f32 %v757, %v1204
    %v1225 = vmul.f32 %v758, %v1192
    %v1226 = vmul.f32 %v759, %v1196
    %v1227 = vmul.f32 %v760, %v1200
    %v1228 = vmul.f32 %v761, %v1204
    %v1229 = vmul.f32 %v762, %v1192
    %v1230 = vmul.f32 %v763, %v1196
    %v1231 = vmul.f32 %v764, %v1200
    %v1232 = vmul.f32 %v765, %v1204
    %v1233 = vmul.f32 %v766, %v1192
    %v1234 = vmul.f32 %v767, %v1196
    %v1235 = vmul.f32 %v768, %v1200
    %v1236 = vmul.f32 %v769, %v1204
    %v1237 = vmul.f32 %v770, %v1192
    %v1238 = vmul.f32 %v771, %v1196
    %v1239 = vmul.f32 %v772, %v1200
    %v1240 = vmul.f32 %v773, %v1204
    %v1241 = vmul.f32 %v774, %v1192
    %v1242 = vmul.f32 %v775, %v1196
    %v1243 = vmul.f32 %v776, %v1200
    %v1244 = vmul.f32 %v777, %v1204
    %v1245 = vmul.f32 %v778, %v1192
    %v1246 = vmul.f32 %v779, %v1196
    %v1247 = vmul.f32 %v780, %v1200
    %v1248 = vmul.f32 %v781, %v1204
    %v1249 = vmul.f32 %v782, %v1192
    %v1250 = vmul.f32 %v783, %v1196
    %v1251 = vmul.f32 %v784, %v1200
    %v1252 = vmul.f32 %v785, %v1204
    %v1253 = vmul.f32 %v786, %v1192
    %v1254 = vmul.f32 %v787, %v1196
    %v1255 = vmul.f32 %v788, %v1200
    %v1256 = vmul.f32 %v789, %v1204
    %v1257 = vmul.f32 %v790, %v1192
    %v1258 = vmul.f32 %v791, %v1196
    %v1259 = vmul.f32 %v792, %v1200
    %v1260 = vmul.f32 %v793, %v1204
    %v1261 = vmul.f32 %v794, %v1192
    %v1262 = vmul.f32 %v795, %v1196
    %v1263 = vmul.f32 %v796, %v1200
    %v1264 = vmul.f32 %v797, %v1204
    %v1265 = vmul.f32 %v798, %v1192
    %v1266 = vmul.f32 %v799, %v1196
    %v1267 = vmul.f32 %v800, %v1200
    %v1268 = vmul.f32 %v801, %v1204
    %v1269 = vmul.f32 %v802, %v1192
    %v1270 = vmul.f32 %v803, %v1196
    %v1271 = vmul.f32 %v804, %v1200
    %v1272 = vmul.f32 %v805, %v1204
    %v1273 = vmul.f32 %v806, %v1192
    %v1274 = vmul.f32 %v807, %v1196
    %v1275 = vmul.f32 %v808, %v1200
    %v1276 = vmul.f32 %v809, %v1204
    %v1277 = vmul.f32 %v810, %v1192
    %v1278 = vmul.f32 %v811, %v1196
    %v1279 = vmul.f32 %v812, %v1200
    %v1280 = vmul.f32 %v813, %v1204
    %v1281 = vmul.f32 %v814, %v1192
    %v1282 = vmul.f32 %v815, %v1196
    %v1283 = vmul.f32 %v816, %v1200
    %v1284 = vmul.f32 %v817, %v1204
    %v1285 = vmul.f32 %v818, %v1192
    %v1286 = vmul.f32 %v819, %v1196
    %v1287 = vmul.f32 %v820, %v1200
    %v1288 = vmul.f32 %v821, %v1204
    %v1289 = vmul.f32 %v822, %v1192
    %v1290 = vmul.f32 %v823, %v1196
    %v1291 = vmul.f32 %v824, %v1200
    %v1292 = vmul.f32 %v825, %v1204
    %v1293 = vmul.f32 %v826, %v1192
    %v1294 = vmul.f32 %v827, %v1196
    %v1295 = vmul.f32 %v828, %v1200
    %v1296 = vmul.f32 %v829, %v1204
    %v1297 = vmul.f32 %v830, %v1192
    %v1298 = vmul.f32 %v831, %v1196
    %v1299 = vmul.f32 %v832, %v1200
    %v1300 = vmul.f32 %v833, %v1204
    %v1301 = vmul.f32 %v834, %v1192
    %v1302 = vmul.f32 %v835, %v1196
    %v1303 = vmul.f32 %v836, %v1200
    %v1304 = vmul.f32 %v837, %v1204
    %v1305 = vmul.f32 %v838, %v1192
    %v1306 = vmul.f32 %v839, %v1196
    %v1307 = vmul.f32 %v840, %v1200
    %v1308 = vmul.f32 %v841, %v1204
    %v1309 = vmul.f32 %v842, %v1192
    %v1310 = vmul.f32 %v843, %v1196
    %v1311 = vmul.f32 %v844, %v1200
    %v1312 = vmul.f32 %v845, %v1204
    %v1313 = vmul.f32 %v846, %v1192
    %v1314 = vmul.f32 %v847, %v1196
    %v1315 = vmul.f32 %v848, %v1200
    %v1316 = vmul.f32 %v849, %v1204
    %v1317 = vmul.f32 %v850, %v1192
    %v1318 = vmul.f32 %v851, %v1196
    %v1319 = vmul.f32 %v852, %v1200
    %v1320 = vmul.f32 %v853, %v1204
    %v1321 = vmul.f32 %v854, %v1192
    %v1322 = vmul.f32 %v855, %v1196
    %v1323 = vmul.f32 %v856, %v1200
    %v1324 = vmul.f32 %v857, %v1204
    %v1325 = vmul.f32 %v858, %v1192
    %v1326 = vmul.f32 %v859, %v1196
    %v1327 = vmul.f32 %v860, %v1200
    %v1328 = vmul.f32 %v861, %v1204
    %v1329 = vmul.f32 %v862, %v1192
    %v1330 = vmul.f32 %v863, %v1196
    %v1331 = vmul.f32 %v864, %v1200
    %v1332 = vmul.f32 %v865, %v1204
    %v1333 = vmul.f32 %v866, %v1192
    %v1334 = vmul.f32 %v867, %v1196
    %v1335 = vmul.f32 %v868, %v1200
    %v1336 = vmul.f32 %v869, %v1204
    %v1338 = vlaneseq
    %v1339 = vshrl.u32 %v1338, 7
    %v1340 = vsub.s32 0, %v1339
    %v1341 = vrot.slane %v588, %v1340
    %v1342 = vlaneseq
    %v1343 = vshrl.u32 %v1342, 7
    %v1344 = vsub.s32 1, %v1343
    %v1345 = vrot.slane %v588, %v1344
    %v1346 = vlaneseq
    %v1347 = vshrl.u32 %v1346, 7
    %v1348 = vsub.s32 2, %v1347
    %v1349 = vrot.slane %v588, %v1348
    %v1350 = vlaneseq
    %v1351 = vshrl.u32 %v1350, 7
    %v1352 = vsub.s32 3, %v1351
    %v1353 = vrot.slane %v588, %v1352
    %v1358 = vadd.f32 %v1209, %v1341
    %v1359 = vadd.f32 %v1210, %v1345
    %v1360 = vadd.f32 %v1211, %v1349
    %v1361 = vadd.f32 %v1212, %v1353
    %v1362 = vadd.f32 %v1213, %v1341
    %v1363 = vadd.f32 %v1214, %v1345
    %v1364 = vadd.f32 %v1215, %v1349
    %v1365 = vadd.f32 %v1216, %v1353
    %v1366 = vadd.f32 %v1217, %v1341
    %v1367 = vadd.f32 %v1218, %v1345
    %v1368 = vadd.f32 %v1219, %v1349
    %v1369 = vadd.f32 %v1220, %v1353
    %v1370 = vadd.f32 %v1221, %v1341
    %v1371 = vadd.f32 %v1222, %v1345
    %v1372 = vadd.f32 %v1223, %v1349
    %v1373 = vadd.f32 %v1224, %v1353
    %v1374 = vadd.f32 %v1225, %v1341
    %v1375 = vadd.f32 %v1226, %v1345
    %v1376 = vadd.f32 %v1227, %v1349
    %v1377 = vadd.f32 %v1228, %v1353
    %v1378 = vadd.f32 %v1229, %v1341
    %v1379 = vadd.f32 %v1230, %v1345
    %v1380 = vadd.f32 %v1231, %v1349
    %v1381 = vadd.f32 %v1232, %v1353
    %v1382 = vadd.f32 %v1233, %v1341
    %v1383 = vadd.f32 %v1234, %v1345
    %v1384 = vadd.f32 %v1235, %v1349
    %v1385 = vadd.f32 %v1236, %v1353
    %v1386 = vadd.f32 %v1237, %v1341
    %v1387 = vadd.f32 %v1238, %v1345
    %v1388 = vadd.f32 %v1239, %v1349
    %v1389 = vadd.f32 %v1240, %v1353
    %v1390 = vadd.f32 %v1241, %v1341
    %v1391 = vadd.f32 %v1242, %v1345
    %v1392 = vadd.f32 %v1243, %v1349
    %v1393 = vadd.f32 %v1244, %v1353
    %v1394 = vadd.f32 %v1245, %v1341
    %v1395 = vadd.f32 %v1246, %v1345
    %v1396 = vadd.f32 %v1247, %v1349
    %v1397 = vadd.f32 %v1248, %v1353
    %v1398 = vadd.f32 %v1249, %v1341
    %v1399 = vadd.f32 %v1250, %v1345
    %v1400 = vadd.f32 %v1251, %v1349
    %v1401 = vadd.f32 %v1252, %v1353
    %v1402 = vadd.f32 %v1253, %v1341
    %v1403 = vadd.f32 %v1254, %v1345
    %v1404 = vadd.f32 %v1255, %v1349
    %v1405 = vadd.f32 %v1256, %v1353
    %v1406 = vadd.f32 %v1257, %v1341
    %v1407 = vadd.f32 %v1258, %v1345
    %v1408 = vadd.f32 %v1259, %v1349
    %v1409 = vadd.f32 %v1260, %v1353
    %v1410 = vadd.f32 %v1261, %v1341
    %v1411 = vadd.f32 %v1262, %v1345
    %v1412 = vadd.f32 %v1263, %v1349
    %v1413 = vadd.f32 %v1264, %v1353
    %v1414 = vadd.f32 %v1265, %v1341
    %v1415 = vadd.f32 %v1266, %v1345
    %v1416 = vadd.f32 %v1267, %v1349
    %v1417 = vadd.f32 %v1268, %v1353
    %v1418 = vadd.f32 %v1269, %v1341
    %v1419 = vadd.f32 %v1270, %v1345
    %v1420 = vadd.f32 %v1271, %v1349
    %v1421 = vadd.f32 %v1272, %v1353
    %v1422 = vadd.f32 %v1273, %v1341
    %v1423 = vadd.f32 %v1274, %v1345
    %v1424 = vadd.f32 %v1275, %v1349
    %v1425 = vadd.f32 %v1276, %v1353
    %v1426 = vadd.f32 %v1277, %v1341
    %v1427 = vadd.f32 %v1278, %v1345
    %v1428 = vadd.f32 %v1279, %v1349
    %v1429 = vadd.f32 %v1280, %v1353
    %v1430 = vadd.f32 %v1281, %v1341
    %v1431 = vadd.f32 %v1282, %v1345
    %v1432 = vadd.f32 %v1283, %v1349
    %v1433 = vadd.f32 %v1284, %v1353
    %v1434 = vadd.f32 %v1285, %v1341
    %v1435 = vadd.f32 %v1286, %v1345
    %v1436 = vadd.f32 %v1287, %v1349
    %v1437 = vadd.f32 %v1288, %v1353
    %v1438 = vadd.f32 %v1289, %v1341
    %v1439 = vadd.f32 %v1290, %v1345
    %v1440 = vadd.f32 %v1291, %v1349
    %v1441 = vadd.f32 %v1292, %v1353
    %v1442 = vadd.f32 %v1293, %v1341
    %v1443 = vadd.f32 %v1294, %v1345
    %v1444 = vadd.f32 %v1295, %v1349
    %v1445 = vadd.f32 %v1296, %v1353
    %v1446 = vadd.f32 %v1297, %v1341
    %v1447 = vadd.f32 %v1298, %v1345
    %v1448 = vadd.f32 %v1299, %v1349
    %v1449 = vadd.f32 %v1300, %v1353
    %v1450 = vadd.f32 %v1301, %v1341
    %v1451 = vadd.f32 %v1302, %v1345
    %v1452 = vadd.f32 %v1303, %v1349
    %v1453 = vadd.f32 %v1304, %v1353
    %v1454 = vadd.f32 %v1305, %v1341
    %v1455 = vadd.f32 %v1306, %v1345
    %v1456 = vadd.f32 %v1307, %v1349
    %v1457 = vadd.f32 %v1308, %v1353
    %v1458 = vadd.f32 %v1309, %v1341
    %v1459 = vadd.f32 %v1310, %v1345
    %v1460 = vadd.f32 %v1311, %v1349
    %v1461 = vadd.f32 %v1312, %v1353
    %v1462 = vadd.f32 %v1313, %v1341
    %v1463 = vadd.f32 %v1314, %v1345
    %v1464 = vadd.f32 %v1315, %v1349
    %v1465 = vadd.f32 %v1316, %v1353
    %v1466 = vadd.f32 %v1317, %v1341
    %v1467 = vadd.f32 %v1318, %v1345
    %v1468 = vadd.f32 %v1319, %v1349
    %v1469 = vadd.f32 %v1320, %v1353
    %v1470 = vadd.f32 %v1321, %v1341
    %v1471 = vadd.f32 %v1322, %v1345
    %v1472 = vadd.f32 %v1323, %v1349
    %v1473 = vadd.f32 %v1324, %v1353
    %v1474 = vadd.f32 %v1325, %v1341
    %v1475 = vadd.f32 %v1326, %v1345
    %v1476 = vadd.f32 %v1327, %v1349
    %v1477 = vadd.f32 %v1328, %v1353
    %v1478 = vadd.f32 %v1329, %v1341
    %v1479 = vadd.f32 %v1330, %v1345
    %v1480 = vadd.f32 %v1331, %v1349
    %v1481 = vadd.f32 %v1332, %v1353
    %v1482 = vadd.f32 %v1333, %v1341
    %v1483 = vadd.f32 %v1334, %v1345
    %v1484 = vadd.f32 %v1335, %v1349
    %v1485 = vadd.f32 %v1336, %v1353
    %v1486 = vmax.f32 %v1358, 0.0
    %v1487 = vmax.f32 %v1359, 0.0
    %v1488 = vmax.f32 %v1360, 0.0
    %v1489 = vmax.f32 %v1361, 0.0
    %v1490 = vmax.f32 %v1362, 0.0
    %v1491 = vmax.f32 %v1363, 0.0
    %v1492 = vmax.f32 %v1364, 0.0
    %v1493 = vmax.f32 %v1365, 0.0
    %v1494 = vmax.f32 %v1366, 0.0
    %v1495 = vmax.f32 %v1367, 0.0
    %v1496 = vmax.f32 %v1368, 0.0
    %v1497 = vmax.f32 %v1369, 0.0
    %v1498 = vmax.f32 %v1370, 0.0
    %v1499 = vmax.f32 %v1371, 0.0
    %v1500 = vmax.f32 %v1372, 0.0
    %v1501 = vmax.f32 %v1373, 0.0
    %v1502 = vmax.f32 %v1374, 0.0
    %v1503 = vmax.f32 %v1375, 0.0
    %v1504 = vmax.f32 %v1376, 0.0
    %v1505 = vmax.f32 %v1377, 0.0
    %v1506 = vmax.f32 %v1378, 0.0
    %v1507 = vmax.f32 %v1379, 0.0
    %v1508 = vmax.f32 %v1380, 0.0
    %v1509 = vmax.f32 %v1381, 0.0
    %v1510 = vmax.f32 %v1382, 0.0
    %v1511 = vmax.f32 %v1383, 0.0
    %v1512 = vmax.f32 %v1384, 0.0
    %v1513 = vmax.f32 %v1385, 0.0
    %v1514 = vmax.f32 %v1386, 0.0
    %v1515 = vmax.f32 %v1387, 0.0
    %v1516 = vmax.f32 %v1388, 0.0
    %v1517 = vmax.f32 %v1389, 0.0
    %v1518 = vmax.f32 %v1390, 0.0
    %v1519 = vmax.f32 %v1391, 0.0
    %v1520 = vmax.f32 %v1392, 0.0
    %v1521 = vmax.f32 %v1393, 0.0
    %v1522 = vmax.f32 %v1394, 0.0
    %v1523 = vmax.f32 %v1395, 0.0
    %v1524 = vmax.f32 %v1396, 0.0
    %v1525 = vmax.f32 %v1397, 0.0
    %v1526 = vmax.f32 %v1398, 0.0
    %v1527 = vmax.f32 %v1399, 0.0
    %v1528 = vmax.f32 %v1400, 0.0
    %v1529 = vmax.f32 %v1401, 0.0
    %v1530 = vmax.f32 %v1402, 0.0
    %v1531 = vmax.f32 %v1403, 0.0
    %v1532 = vmax.f32 %v1404, 0.0
    %v1533 = vmax.f32 %v1405, 0.0
    %v1534 = vmax.f32 %v1406, 0.0
    %v1535 = vmax.f32 %v1407, 0.0
    %v1536 = vmax.f32 %v1408, 0.0
    %v1537 = vmax.f32 %v1409, 0.0
    %v1538 = vmax.f32 %v1410, 0.0
    %v1539 = vmax.f32 %v1411, 0.0
    %v1540 = vmax.f32 %v1412, 0.0
    %v1541 = vmax.f32 %v1413, 0.0
    %v1542 = vmax.f32 %v1414, 0.0
    %v1543 = vmax.f32 %v1415, 0.0
    %v1544 = vmax.f32 %v1416, 0.0
    %v1545 = vmax.f32 %v1417, 0.0
    %v1546 = vmax.f32 %v1418, 0.0
    %v1547 = vmax.f32 %v1419, 0.0
    %v1548 = vmax.f32 %v1420, 0.0
    %v1549 = vmax.f32 %v1421, 0.0
    %v1550 = vmax.f32 %v1422, 0.0
    %v1551 = vmax.f32 %v1423, 0.0
    %v1552 = vmax.f32 %v1424, 0.0
    %v1553 = vmax.f32 %v1425, 0.0
    %v1554 = vmax.f32 %v1426, 0.0
    %v1555 = vmax.f32 %v1427, 0.0
    %v1556 = vmax.f32 %v1428, 0.0
    %v1557 = vmax.f32 %v1429, 0.0
    %v1558 = vmax.f32 %v1430, 0.0
    %v1559 = vmax.f32 %v1431, 0.0
    %v1560 = vmax.f32 %v1432, 0.0
    %v1561 = vmax.f32 %v1433, 0.0
    %v1562 = vmax.f32 %v1434, 0.0
    %v1563 = vmax.f32 %v1435, 0.0
    %v1564 = vmax.f32 %v1436, 0.0
    %v1565 = vmax.f32 %v1437, 0.0
    %v1566 = vmax.f32 %v1438, 0.0
    %v1567 = vmax.f32 %v1439, 0.0
    %v1568 = vmax.f32 %v1440, 0.0
    %v1569 = vmax.f32 %v1441, 0.0
    %v1570 = vmax.f32 %v1442, 0.0
    %v1571 = vmax.f32 %v1443, 0.0
    %v1572 = vmax.f32 %v1444, 0.0
    %v1573 = vmax.f32 %v1445, 0.0
    %v1574 = vmax.f32 %v1446, 0.0
    %v1575 = vmax.f32 %v1447, 0.0
    %v1576 = vmax.f32 %v1448, 0.0
    %v1577 = vmax.f32 %v1449, 0.0
    %v1578 = vmax.f32 %v1450, 0.0
    %v1579 = vmax.f32 %v1451, 0.0
    %v1580 = vmax.f32 %v1452, 0.0
    %v1581 = vmax.f32 %v1453, 0.0
    %v1582 = vmax.f32 %v1454, 0.0
    %v1583 = vmax.f32 %v1455, 0.0
    %v1584 = vmax.f32 %v1456, 0.0
    %v1585 = vmax.f32 %v1457, 0.0
    %v1586 = vmax.f32 %v1458, 0.0
    %v1587 = vmax.f32 %v1459, 0.0
    %v1588 = vmax.f32 %v1460, 0.0
    %v1589 = vmax.f32 %v1461, 0.0
    %v1590 = vmax.f32 %v1462, 0.0
    %v1591 = vmax.f32 %v1463, 0.0
    %v1592 = vmax.f32 %v1464, 0.0
    %v1593 = vmax.f32 %v1465, 0.0
    %v1594 = vmax.f32 %v1466, 0.0
    %v1595 = vmax.f32 %v1467, 0.0
    %v1596 = vmax.f32 %v1468, 0.0
    %v1597 = vmax.f32 %v1469, 0.0
    %v1598 = vmax.f32 %v1470, 0.0
    %v1599 = vmax.f32 %v1471, 0.0
    %v1600 = vmax.f32 %v1472, 0.0
    %v1601 = vmax.f32 %v1473, 0.0
    %v1602 = vmax.f32 %v1474, 0.0
    %v1603 = vmax.f32 %v1475, 0.0
    %v1604 = vmax.f32 %v1476, 0.0
    %v1605 = vmax.f32 %v1477, 0.0
    %v1606 = vmax.f32 %v1478, 0.0
    %v1607 = vmax.f32 %v1479, 0.0
    %v1608 = vmax.f32 %v1480, 0.0
    %v1609 = vmax.f32 %v1481, 0.0
    %v1610 = vmax.f32 %v1482, 0.0
    %v1611 = vmax.f32 %v1483, 0.0
    %v1612 = vmax.f32 %v1484, 0.0
    %v1613 = vmax.f32 %v1485, 0.0
    %v1614 = vpack.c.bf16 %v1490, %v1486
    %v1615 = vpack.c.bf16 %v1491, %v1487
    %v1616 = vpack.c.bf16 %v1492, %v1488
    %v1617 = vpack.c.bf16 %v1493, %v1489
    %v1618 = vpack.c.bf16 %v1498, %v1494
    %v1619 = vpack.c.bf16 %v1499, %v1495
    %v1620 = vpack.c.bf16 %v1500, %v1496
    %v1621 = vpack.c.bf16 %v1501, %v1497
    %v1622 = vpack.c.bf16 %v1506, %v1502
    %v1623 = vpack.c.bf16 %v1507, %v1503
    %v1624 = vpack.c.bf16 %v1508, %v1504
    %v1625 = vpack.c.bf16 %v1509, %v1505
    %v1626 = vpack.c.bf16 %v1514, %v1510
    %v1627 = vpack.c.bf16 %v1515, %v1511
    %v1628 = vpack.c.bf16 %v1516, %v1512
    %v1629 = vpack.c.bf16 %v1517, %v1513
    %v1630 = vpack.c.bf16 %v1522, %v1518
    %v1631 = vpack.c.bf16 %v1523, %v1519
    %v1632 = vpack.c.bf16 %v1524, %v1520
    %v1633 = vpack.c.bf16 %v1525, %v1521
    %v1634 = vpack.c.bf16 %v1530, %v1526
    %v1635 = vpack.c.bf16 %v1531, %v1527
    %v1636 = vpack.c.bf16 %v1532, %v1528
    %v1637 = vpack.c.bf16 %v1533, %v1529
    %v1638 = vpack.c.bf16 %v1538, %v1534
    %v1639 = vpack.c.bf16 %v1539, %v1535
    %v1640 = vpack.c.bf16 %v1540, %v1536
    %v1641 = vpack.c.bf16 %v1541, %v1537
    %v1642 = vpack.c.bf16 %v1546, %v1542
    %v1643 = vpack.c.bf16 %v1547, %v1543
    %v1644 = vpack.c.bf16 %v1548, %v1544
    %v1645 = vpack.c.bf16 %v1549, %v1545
    %v1646 = vpack.c.bf16 %v1554, %v1550
    %v1647 = vpack.c.bf16 %v1555, %v1551
    %v1648 = vpack.c.bf16 %v1556, %v1552
    %v1649 = vpack.c.bf16 %v1557, %v1553
    %v1650 = vpack.c.bf16 %v1562, %v1558
    %v1651 = vpack.c.bf16 %v1563, %v1559
    %v1652 = vpack.c.bf16 %v1564, %v1560
    %v1653 = vpack.c.bf16 %v1565, %v1561
    %v1654 = vpack.c.bf16 %v1570, %v1566
    %v1655 = vpack.c.bf16 %v1571, %v1567
    %v1656 = vpack.c.bf16 %v1572, %v1568
    %v1657 = vpack.c.bf16 %v1573, %v1569
    %v1658 = vpack.c.bf16 %v1578, %v1574
    %v1659 = vpack.c.bf16 %v1579, %v1575
    %v1660 = vpack.c.bf16 %v1580, %v1576
    %v1661 = vpack.c.bf16 %v1581, %v1577
    %v1662 = vpack.c.bf16 %v1586, %v1582
    %v1663 = vpack.c.bf16 %v1587, %v1583
    %v1664 = vpack.c.bf16 %v1588, %v1584
    %v1665 = vpack.c.bf16 %v1589, %v1585
    %v1666 = vpack.c.bf16 %v1594, %v1590
    %v1667 = vpack.c.bf16 %v1595, %v1591
    %v1668 = vpack.c.bf16 %v1596, %v1592
    %v1669 = vpack.c.bf16 %v1597, %v1593
    %v1670 = vpack.c.bf16 %v1602, %v1598
    %v1671 = vpack.c.bf16 %v1603, %v1599
    %v1672 = vpack.c.bf16 %v1604, %v1600
    %v1673 = vpack.c.bf16 %v1605, %v1601
    %v1674 = vpack.c.bf16 %v1610, %v1606
    %v1675 = vpack.c.bf16 %v1611, %v1607
    %v1676 = vpack.c.bf16 %v1612, %v1608
    %v1677 = vpack.c.bf16 %v1613, %v1609
    %v1678 = vld [vmem:[#allocation2] sm:$0xff]
    %v1679 = vld [vmem:[#allocation2 + $0x8] sm:$0xff]
    %v1680 = vld [vmem:[#allocation2 + $0x10] sm:$0xff]
    %v1681 = vld [vmem:[#allocation2 + $0x18] sm:$0xff]
    %v1682 = vld [vmem:[#allocation2 + $0x20] sm:$0xff]
    %v1683 = vld [vmem:[#allocation2 + $0x28] sm:$0xff]
    %v1684 = vld [vmem:[#allocation2 + $0x30] sm:$0xff]
    %v1685 = vld [vmem:[#allocation2 + $0x38] sm:$0xff]
    %v1686 = vld [vmem:[#allocation2 + $0x40] sm:$0xff]
    %v1687 = vld [vmem:[#allocation2 + $0x48] sm:$0xff]
    %v1688 = vld [vmem:[#allocation2 + $0x50] sm:$0xff]
    %v1689 = vld [vmem:[#allocation2 + $0x58] sm:$0xff]
    %v1690 = vld [vmem:[#allocation2 + $0x60] sm:$0xff]
    %v1691 = vld [vmem:[#allocation2 + $0x68] sm:$0xff]
    %v1692 = vld [vmem:[#allocation2 + $0x70] sm:$0xff]
    %v1693 = vld [vmem:[#allocation2 + $0x78] sm:$0xff]
    %v1694 = vld [vmem:[#allocation2 + $0x80] sm:$0xff]
    %v1695 = vld [vmem:[#allocation2 + $0x88] sm:$0xff]
    %v1696 = vld [vmem:[#allocation2 + $0x90] sm:$0xff]
    %v1697 = vld [vmem:[#allocation2 + $0x98] sm:$0xff]
    %v1698 = vld [vmem:[#allocation2 + $0xa0] sm:$0xff]
    %v1699 = vld [vmem:[#allocation2 + $0xa8] sm:$0xff]
    %v1700 = vld [vmem:[#allocation2 + $0xb0] sm:$0xff]
    %v1701 = vld [vmem:[#allocation2 + $0xb8] sm:$0xff]
    %v1702 = vld [vmem:[#allocation2 + $0xc0] sm:$0xff]
    %v1703 = vld [vmem:[#allocation2 + $0xc8] sm:$0xff]
    %v1704 = vld [vmem:[#allocation2 + $0xd0] sm:$0xff]
    %v1705 = vld [vmem:[#allocation2 + $0xd8] sm:$0xff]
    %v1706 = vld [vmem:[#allocation2 + $0xe0] sm:$0xff]
    %v1707 = vld [vmem:[#allocation2 + $0xe8] sm:$0xff]
    %v1708 = vld [vmem:[#allocation2 + $0xf0] sm:$0xff]
    %v1709 = vld [vmem:[#allocation2 + $0xf8] sm:$0xff]
    %v1710 = vld [vmem:[#allocation2 + $0x100] sm:$0xff]
    %v1711 = vld [vmem:[#allocation2 + $0x108] sm:$0xff]
    %v1712 = vld [vmem:[#allocation2 + $0x110] sm:$0xff]
    %v1713 = vld [vmem:[#allocation2 + $0x118] sm:$0xff]
    %v1714 = vld [vmem:[#allocation2 + $0x120] sm:$0xff]
    %v1715 = vld [vmem:[#allocation2 + $0x128] sm:$0xff]
    %v1716 = vld [vmem:[#allocation2 + $0x130] sm:$0xff]
    %v1717 = vld [vmem:[#allocation2 + $0x138] sm:$0xff]
    %v1718 = vld [vmem:[#allocation2 + $0x140] sm:$0xff]
    %v1719 = vld [vmem:[#allocation2 + $0x148] sm:$0xff]
    %v1720 = vld [vmem:[#allocation2 + $0x150] sm:$0xff]
    %v1721 = vld [vmem:[#allocation2 + $0x158] sm:$0xff]
    %v1722 = vld [vmem:[#allocation2 + $0x160] sm:$0xff]
    %v1723 = vld [vmem:[#allocation2 + $0x168] sm:$0xff]
    %v1724 = vld [vmem:[#allocation2 + $0x170] sm:$0xff]
    %v1725 = vld [vmem:[#allocation2 + $0x178] sm:$0xff]
    %v1726 = vld [vmem:[#allocation2 + $0x180] sm:$0xff]
    %v1727 = vld [vmem:[#allocation2 + $0x188] sm:$0xff]
    %v1728 = vld [vmem:[#allocation2 + $0x190] sm:$0xff]
    %v1729 = vld [vmem:[#allocation2 + $0x198] sm:$0xff]
    %v1730 = vld [vmem:[#allocation2 + $0x1a0] sm:$0xff]
    %v1731 = vld [vmem:[#allocation2 + $0x1a8] sm:$0xff]
    %v1732 = vld [vmem:[#allocation2 + $0x1b0] sm:$0xff]
    %v1733 = vld [vmem:[#allocation2 + $0x1b8] sm:$0xff]
    %v1734 = vld [vmem:[#allocation2 + $0x1c0] sm:$0xff]
    %v1735 = vld [vmem:[#allocation2 + $0x1c8] sm:$0xff]
    %v1736 = vld [vmem:[#allocation2 + $0x1d0] sm:$0xff]
    %v1737 = vld [vmem:[#allocation2 + $0x1d8] sm:$0xff]
    %v1738 = vld [vmem:[#allocation2 + $0x1e0] sm:$0xff]
    %v1739 = vld [vmem:[#allocation2 + $0x1e8] sm:$0xff]
    %v1740 = vld [vmem:[#allocation2 + $0x1f0] sm:$0xff]
    %v1741 = vld [vmem:[#allocation2 + $0x1f8] sm:$0xff]
    %v1806 = vunpack.c.l.b16 %v1678
    %v1807 = vunpack.c.h.b16 %v1678
    %v1808 = vunpack.c.l.b16 %v1679
    %v1809 = vunpack.c.h.b16 %v1679
    %v1810 = vunpack.c.l.b16 %v1680
    %v1811 = vunpack.c.h.b16 %v1680
    %v1812 = vunpack.c.l.b16 %v1681
    %v1813 = vunpack.c.h.b16 %v1681
    %v1814 = vunpack.c.l.b16 %v1682
    %v1815 = vunpack.c.h.b16 %v1682
    %v1816 = vunpack.c.l.b16 %v1683
    %v1817 = vunpack.c.h.b16 %v1683
    %v1818 = vunpack.c.l.b16 %v1684
    %v1819 = vunpack.c.h.b16 %v1684
    %v1820 = vunpack.c.l.b16 %v1685
    %v1821 = vunpack.c.h.b16 %v1685
    %v1822 = vunpack.c.l.b16 %v1686
    %v1823 = vunpack.c.h.b16 %v1686
    %v1824 = vunpack.c.l.b16 %v1687
    %v1825 = vunpack.c.h.b16 %v1687
    %v1826 = vunpack.c.l.b16 %v1688
    %v1827 = vunpack.c.h.b16 %v1688
    %v1828 = vunpack.c.l.b16 %v1689
    %v1829 = vunpack.c.h.b16 %v1689
    %v1830 = vunpack.c.l.b16 %v1690
    %v1831 = vunpack.c.h.b16 %v1690
    %v1832 = vunpack.c.l.b16 %v1691
    %v1833 = vunpack.c.h.b16 %v1691
    %v1834 = vunpack.c.l.b16 %v1692
    %v1835 = vunpack.c.h.b16 %v1692
    %v1836 = vunpack.c.l.b16 %v1693
    %v1837 = vunpack.c.h.b16 %v1693
    %v1838 = vunpack.c.l.b16 %v1694
    %v1839 = vunpack.c.h.b16 %v1694
    %v1840 = vunpack.c.l.b16 %v1695
    %v1841 = vunpack.c.h.b16 %v1695
    %v1842 = vunpack.c.l.b16 %v1696
    %v1843 = vunpack.c.h.b16 %v1696
    %v1844 = vunpack.c.l.b16 %v1697
    %v1845 = vunpack.c.h.b16 %v1697
    %v1846 = vunpack.c.l.b16 %v1698
    %v1847 = vunpack.c.h.b16 %v1698
    %v1848 = vunpack.c.l.b16 %v1699
    %v1849 = vunpack.c.h.b16 %v1699
    %v1850 = vunpack.c.l.b16 %v1700
    %v1851 = vunpack.c.h.b16 %v1700
    %v1852 = vunpack.c.l.b16 %v1701
    %v1853 = vunpack.c.h.b16 %v1701
    %v1854 = vunpack.c.l.b16 %v1702
    %v1855 = vunpack.c.h.b16 %v1702
    %v1856 = vunpack.c.l.b16 %v1703
    %v1857 = vunpack.c.h.b16 %v1703
    %v1858 = vunpack.c.l.b16 %v1704
    %v1859 = vunpack.c.h.b16 %v1704
    %v1860 = vunpack.c.l.b16 %v1705
    %v1861 = vunpack.c.h.b16 %v1705
    %v1862 = vunpack.c.l.b16 %v1706
    %v1863 = vunpack.c.h.b16 %v1706
    %v1864 = vunpack.c.l.b16 %v1707
    %v1865 = vunpack.c.h.b16 %v1707
    %v1866 = vunpack.c.l.b16 %v1708
    %v1867 = vunpack.c.h.b16 %v1708
    %v1868 = vunpack.c.l.b16 %v1709
    %v1869 = vunpack.c.h.b16 %v1709
    %v1870 = vunpack.c.l.b16 %v1710
    %v1871 = vunpack.c.h.b16 %v1710
    %v1872 = vunpack.c.l.b16 %v1711
    %v1873 = vunpack.c.h.b16 %v1711
    %v1874 = vunpack.c.l.b16 %v1712
    %v1875 = vunpack.c.h.b16 %v1712
    %v1876 = vunpack.c.l.b16 %v1713
    %v1877 = vunpack.c.h.b16 %v1713
    %v1878 = vunpack.c.l.b16 %v1714
    %v1879 = vunpack.c.h.b16 %v1714
    %v1880 = vunpack.c.l.b16 %v1715
    %v1881 = vunpack.c.h.b16 %v1715
    %v1882 = vunpack.c.l.b16 %v1716
    %v1883 = vunpack.c.h.b16 %v1716
    %v1884 = vunpack.c.l.b16 %v1717
    %v1885 = vunpack.c.h.b16 %v1717
    %v1886 = vunpack.c.l.b16 %v1718
    %v1887 = vunpack.c.h.b16 %v1718
    %v1888 = vunpack.c.l.b16 %v1719
    %v1889 = vunpack.c.h.b16 %v1719
    %v1890 = vunpack.c.l.b16 %v1720
    %v1891 = vunpack.c.h.b16 %v1720
    %v1892 = vunpack.c.l.b16 %v1721
    %v1893 = vunpack.c.h.b16 %v1721
    %v1894 = vunpack.c.l.b16 %v1722
    %v1895 = vunpack.c.h.b16 %v1722
    %v1896 = vunpack.c.l.b16 %v1723
    %v1897 = vunpack.c.h.b16 %v1723
    %v1898 = vunpack.c.l.b16 %v1724
    %v1899 = vunpack.c.h.b16 %v1724
    %v1900 = vunpack.c.l.b16 %v1725
    %v1901 = vunpack.c.h.b16 %v1725
    %v1902 = vunpack.c.l.b16 %v1726
    %v1903 = vunpack.c.h.b16 %v1726
    %v1904 = vunpack.c.l.b16 %v1727
    %v1905 = vunpack.c.h.b16 %v1727
    %v1906 = vunpack.c.l.b16 %v1728
    %v1907 = vunpack.c.h.b16 %v1728
    %v1908 = vunpack.c.l.b16 %v1729
    %v1909 = vunpack.c.h.b16 %v1729
    %v1910 = vunpack.c.l.b16 %v1730
    %v1911 = vunpack.c.h.b16 %v1730
    %v1912 = vunpack.c.l.b16 %v1731
    %v1913 = vunpack.c.h.b16 %v1731
    %v1914 = vunpack.c.l.b16 %v1732
    %v1915 = vunpack.c.h.b16 %v1732
    %v1916 = vunpack.c.l.b16 %v1733
    %v1917 = vunpack.c.h.b16 %v1733
    %v1918 = vunpack.c.l.b16 %v1734
    %v1919 = vunpack.c.h.b16 %v1734
    %v1920 = vunpack.c.l.b16 %v1735
    %v1921 = vunpack.c.h.b16 %v1735
    %v1922 = vunpack.c.l.b16 %v1736
    %v1923 = vunpack.c.h.b16 %v1736
    %v1924 = vunpack.c.l.b16 %v1737
    %v1925 = vunpack.c.h.b16 %v1737
    %v1926 = vunpack.c.l.b16 %v1738
    %v1927 = vunpack.c.h.b16 %v1738
    %v1928 = vunpack.c.l.b16 %v1739
    %v1929 = vunpack.c.h.b16 %v1739
    %v1930 = vunpack.c.l.b16 %v1740
    %v1931 = vunpack.c.h.b16 %v1740
    %v1932 = vunpack.c.l.b16 %v1741
    %v1933 = vunpack.c.h.b16 %v1741
    %v1934 = vpack.c.b16 %v1808, %v1806
    %v1935 = vpack.c.b16 %v1809, %v1807
    %v1936 = vpack.c.b16 %v1812, %v1810
    %v1937 = vpack.c.b16 %v1813, %v1811
    %v1938 = vpack.c.b16 %v1816, %v1814
    %v1939 = vpack.c.b16 %v1817, %v1815
    %v1940 = vpack.c.b16 %v1820, %v1818
    %v1941 = vpack.c.b16 %v1821, %v1819
    %v1942 = vpack.c.b16 %v1824, %v1822
    %v1943 = vpack.c.b16 %v1825, %v1823
    %v1944 = vpack.c.b16 %v1828, %v1826
    %v1945 = vpack.c.b16 %v1829, %v1827
    %v1946 = vpack.c.b16 %v1832, %v1830
    %v1947 = vpack.c.b16 %v1833, %v1831
    %v1948 = vpack.c.b16 %v1836, %v1834
    %v1949 = vpack.c.b16 %v1837, %v1835
    %v1950 = vpack.c.b16 %v1840, %v1838
    %v1951 = vpack.c.b16 %v1841, %v1839
    %v1952 = vpack.c.b16 %v1844, %v1842
    %v1953 = vpack.c.b16 %v1845, %v1843
    %v1954 = vpack.c.b16 %v1848, %v1846
    %v1955 = vpack.c.b16 %v1849, %v1847
    %v1956 = vpack.c.b16 %v1852, %v1850
    %v1957 = vpack.c.b16 %v1853, %v1851
    %v1958 = vpack.c.b16 %v1856, %v1854
    %v1959 = vpack.c.b16 %v1857, %v1855
    %v1960 = vpack.c.b16 %v1860, %v1858
    %v1961 = vpack.c.b16 %v1861, %v1859
    %v1962 = vpack.c.b16 %v1864, %v1862
    %v1963 = vpack.c.b16 %v1865, %v1863
    %v1964 = vpack.c.b16 %v1868, %v1866
    %v1965 = vpack.c.b16 %v1869, %v1867
    %v1966 = vpack.c.b16 %v1872, %v1870
    %v1967 = vpack.c.b16 %v1873, %v1871
    %v1968 = vpack.c.b16 %v1876, %v1874
    %v1969 = vpack.c.b16 %v1877, %v1875
    %v1970 = vpack.c.b16 %v1880, %v1878
    %v1971 = vpack.c.b16 %v1881, %v1879
    %v1972 = vpack.c.b16 %v1884, %v1882
    %v1973 = vpack.c.b16 %v1885, %v1883
    %v1974 = vpack.c.b16 %v1888, %v1886
    %v1975 = vpack.c.b16 %v1889, %v1887
    %v1976 = vpack.c.b16 %v1892, %v1890
    %v1977 = vpack.c.b16 %v1893, %v1891
    %v1978 = vpack.c.b16 %v1896, %v1894
    %v1979 = vpack.c.b16 %v1897, %v1895
    %v1980 = vpack.c.b16 %v1900, %v1898
    %v1981 = vpack.c.b16 %v1901, %v1899
    %v1982 = vpack.c.b16 %v1904, %v1902
    %v1983 = vpack.c.b16 %v1905, %v1903
    %v1984 = vpack.c.b16 %v1908, %v1906
    %v1985 = vpack.c.b16 %v1909, %v1907
    %v1986 = vpack.c.b16 %v1912, %v1910
    %v1987 = vpack.c.b16 %v1913, %v1911
    %v1988 = vpack.c.b16 %v1916, %v1914
    %v1989 = vpack.c.b16 %v1917, %v1915
    %v1990 = vpack.c.b16 %v1920, %v1918
    %v1991 = vpack.c.b16 %v1921, %v1919
    %v1992 = vpack.c.b16 %v1924, %v1922
    %v1993 = vpack.c.b16 %v1925, %v1923
    %v1994 = vpack.c.b16 %v1928, %v1926
    %v1995 = vpack.c.b16 %v1929, %v1927
    %v1996 = vpack.c.b16 %v1932, %v1930
    %v1997 = vpack.c.b16 %v1933, %v1931
    %2062 = vmatprep.subr.bf16.mxu0 %v1935
    %2063 = vmatpush1.bf16.msra.mxu0 %v1934
    %2064 = vmatprep.subr.bf16.mxu0 %v1937
    %2065 = vmatpush1.bf16.msra.mxu0 %v1936
    %2066 = vmatprep.subr.bf16.mxu0 %v1939
    %2067 = vmatpush1.bf16.msra.mxu0 %v1938
    %2068 = vmatprep.subr.bf16.mxu0 %v1941
    %2069 = vmatpush1.bf16.msra.mxu0 %v1940
    %2070 = vmatprep.subr.bf16.mxu0 %v1943
    %2071 = vmatpush1.bf16.msra.mxu0 %v1942
    %2072 = vmatprep.subr.bf16.mxu0 %v1945
    %2073 = vmatpush1.bf16.msra.mxu0 %v1944
    %2074 = vmatprep.subr.bf16.mxu0 %v1947
    %2075 = vmatpush1.bf16.msra.mxu0 %v1946
    %2076 = vmatprep.subr.bf16.mxu0 %v1949
    %2077 = vmatpush1.bf16.msra.mxu0 %v1948
    %2078 = vmatprep.subr.bf16.mxu0 %v1951
    %2079 = vmatpush1.bf16.msra.mxu0 %v1950
    %2080 = vmatprep.subr.bf16.mxu0 %v1953
    %2081 = vmatpush1.bf16.msra.mxu0 %v1952
    %2082 = vmatprep.subr.bf16.mxu0 %v1955
    %2083 = vmatpush1.bf16.msra.mxu0 %v1954
    %2084 = vmatprep.subr.bf16.mxu0 %v1957
    %2085 = vmatpush1.bf16.msra.mxu0 %v1956
    %2086 = vmatprep.subr.bf16.mxu0 %v1959
    %2087 = vmatpush1.bf16.msra.mxu0 %v1958
    %2088 = vmatprep.subr.bf16.mxu0 %v1961
    %2089 = vmatpush1.bf16.msra.mxu0 %v1960
    %2090 = vmatprep.subr.bf16.mxu0 %v1963
    %2091 = vmatpush1.bf16.msra.mxu0 %v1962
    %2092 = vmatprep.subr.bf16.mxu0 %v1965
    %2093 = vmatpush1.bf16.msra.mxu0 %v1964
    %2094 = vmatprep.mubr.bf16.mxu0 %v1615
    %2095 = vmatmul.mubr.bf16.gmra.mrb[0].mxu0 %v1614
    %v2096 = vpop.f32.mrb[0].mxu0
    %v2097 = vadd.f32 0.0, %v2096
    %v2098 = vpop.f32.mrb[0].mxu0
    %v2099 = vadd.f32 0.0, %v2098
    %v2100 = vpop.f32.mrb[0].mxu0
    %v2101 = vadd.f32 0.0, %v2100
    %v2102 = vpop.f32.mrb[0].mxu0
    %v2103 = vadd.f32 0.0, %v2102
    %2104 = vmatprep.mubr.bf16.mxu0 %v1619
    %2105 = vmatmul.mubr.bf16.gmra.mrb[0].mxu0 %v1618
    %v2106 = vpop.f32.mrb[0].mxu0
    %v2107 = vadd.f32 0.0, %v2106
    %v2108 = vpop.f32.mrb[0].mxu0
    %v2109 = vadd.f32 0.0, %v2108
    %v2110 = vpop.f32.mrb[0].mxu0
    %v2111 = vadd.f32 0.0, %v2110
    %v2112 = vpop.f32.mrb[0].mxu0
    %v2113 = vadd.f32 0.0, %v2112
    %2114 = vmatprep.mubr.bf16.mxu0 %v1623
    %2115 = vmatmul.mubr.bf16.gmra.mrb[0].mxu0 %v1622
    %v2116 = vpop.f32.mrb[0].mxu0
    %v2117 = vadd.f32 0.0, %v2116
    %v2118 = vpop.f32.mrb[0].mxu0
    %v2119 = vadd.f32 0.0, %v2118
    %v2120 = vpop.f32.mrb[0].mxu0
    %v2121 = vadd.f32 0.0, %v2120
    %v2122 = vpop.f32.mrb[0].mxu0
    %v2123 = vadd.f32 0.0, %v2122
    %2124 = vmatprep.mubr.bf16.mxu0 %v1627
    %2125 = vmatmul.mubr.bf16.gmra.mrb[0].mxu0 %v1626
    %v2126 = vpop.f32.mrb[0].mxu0
    %v2127 = vadd.f32 0.0, %v2126
    %v2128 = vpop.f32.mrb[0].mxu0
    %v2129 = vadd.f32 0.0, %v2128
    %v2130 = vpop.f32.mrb[0].mxu0
    %v2131 = vadd.f32 0.0, %v2130
    %v2132 = vpop.f32.mrb[0].mxu0
    %v2133 = vadd.f32 0.0, %v2132
    %2134 = vmatprep.mubr.bf16.mxu0 %v1631
    %2135 = vmatmul.mubr.bf16.gmra.mrb[0].mxu0 %v1630
    %v2136 = vpop.f32.mrb[0].mxu0
    %v2137 = vadd.f32 0.0, %v2136
    %v2138 = vpop.f32.mrb[0].mxu0
    %v2139 = vadd.f32 0.0, %v2138
    %v2140 = vpop.f32.mrb[0].mxu0
    %v2141 = vadd.f32 0.0, %v2140
    %v2142 = vpop.f32.mrb[0].mxu0
    %v2143 = vadd.f32 0.0, %v2142
    %2144 = vmatprep.mubr.bf16.mxu0 %v1635
    %2145 = vmatmul.mubr.bf16.gmra.mrb[0].mxu0 %v1634
    %v2146 = vpop.f32.mrb[0].mxu0
    %v2147 = vadd.f32 0.0, %v2146
    %v2148 = vpop.f32.mrb[0].mxu0
    %v2149 = vadd.f32 0.0, %v2148
    %v2150 = vpop.f32.mrb[0].mxu0
    %v2151 = vadd.f32 0.0, %v2150
    %v2152 = vpop.f32.mrb[0].mxu0
    %v2153 = vadd.f32 0.0, %v2152
    %2154 = vmatprep.mubr.bf16.mxu0 %v1639
    %2155 = vmatmul.mubr.bf16.gmra.mrb[0].mxu0 %v1638
    %v2156 = vpop.f32.mrb[0].mxu0
    %v2157 = vadd.f32 0.0, %v2156
    %v2158 = vpop.f32.mrb[0].mxu0
    %v2159 = vadd.f32 0.0, %v2158
    %v2160 = vpop.f32.mrb[0].mxu0
    %v2161 = vadd.f32 0.0, %v2160
    %v2162 = vpop.f32.mrb[0].mxu0
    %v2163 = vadd.f32 0.0, %v2162
    %2164 = vmatprep.mubr.bf16.mxu0 %v1643
    %2165 = vmatmul.mubr.bf16.gmra.mrb[0].mxu0 %v1642
    %v2166 = vpop.f32.mrb[0].mxu0
    %v2167 = vadd.f32 0.0, %v2166
    %v2168 = vpop.f32.mrb[0].mxu0
    %v2169 = vadd.f32 0.0, %v2168
    %v2170 = vpop.f32.mrb[0].mxu0
    %v2171 = vadd.f32 0.0, %v2170
    %v2172 = vpop.f32.mrb[0].mxu0
    %v2173 = vadd.f32 0.0, %v2172
    %2174 = vmatprep.mubr.bf16.mxu0 %v1647
    %2175 = vmatmul.mubr.bf16.gmra.mrb[0].mxu0 %v1646
    %v2176 = vpop.f32.mrb[0].mxu0
    %v2177 = vadd.f32 0.0, %v2176
    %v2178 = vpop.f32.mrb[0].mxu0
    %v2179 = vadd.f32 0.0, %v2178
    %v2180 = vpop.f32.mrb[0].mxu0
    %v2181 = vadd.f32 0.0, %v2180
    %v2182 = vpop.f32.mrb[0].mxu0
    %v2183 = vadd.f32 0.0, %v2182
    %2184 = vmatprep.mubr.bf16.mxu0 %v1651
    %2185 = vmatmul.mubr.bf16.gmra.mrb[0].mxu0 %v1650
    %v2186 = vpop.f32.mrb[0].mxu0
    %v2187 = vadd.f32 0.0, %v2186
    %v2188 = vpop.f32.mrb[0].mxu0
    %v2189 = vadd.f32 0.0, %v2188
    %v2190 = vpop.f32.mrb[0].mxu0
    %v2191 = vadd.f32 0.0, %v2190
    %v2192 = vpop.f32.mrb[0].mxu0
    %v2193 = vadd.f32 0.0, %v2192
    %2194 = vmatprep.mubr.bf16.mxu0 %v1655
    %2195 = vmatmul.mubr.bf16.gmra.mrb[0].mxu0 %v1654
    %v2196 = vpop.f32.mrb[0].mxu0
    %v2197 = vadd.f32 0.0, %v2196
    %v2198 = vpop.f32.mrb[0].mxu0
    %v2199 = vadd.f32 0.0, %v2198
    %v2200 = vpop.f32.mrb[0].mxu0
    %v2201 = vadd.f32 0.0, %v2200
    %v2202 = vpop.f32.mrb[0].mxu0
    %v2203 = vadd.f32 0.0, %v2202
    %2204 = vmatprep.mubr.bf16.mxu0 %v1659
    %2205 = vmatmul.mubr.bf16.gmra.mrb[0].mxu0 %v1658
    %v2206 = vpop.f32.mrb[0].mxu0
    %v2207 = vadd.f32 0.0, %v2206
    %v2208 = vpop.f32.mrb[0].mxu0
    %v2209 = vadd.f32 0.0, %v2208
    %v2210 = vpop.f32.mrb[0].mxu0
    %v2211 = vadd.f32 0.0, %v2210
    %v2212 = vpop.f32.mrb[0].mxu0
    %v2213 = vadd.f32 0.0, %v2212
    %2214 = vmatprep.mubr.bf16.mxu0 %v1663
    %2215 = vmatmul.mubr.bf16.gmra.mrb[0].mxu0 %v1662
    %v2216 = vpop.f32.mrb[0].mxu0
    %v2217 = vadd.f32 0.0, %v2216
    %v2218 = vpop.f32.mrb[0].mxu0
    %v2219 = vadd.f32 0.0, %v2218
    %v2220 = vpop.f32.mrb[0].mxu0
    %v2221 = vadd.f32 0.0, %v2220
    %v2222 = vpop.f32.mrb[0].mxu0
    %v2223 = vadd.f32 0.0, %v2222
    %2224 = vmatprep.mubr.bf16.mxu0 %v1667
    %2225 = vmatmul.mubr.bf16.gmra.mrb[0].mxu0 %v1666
    %v2226 = vpop.f32.mrb[0].mxu0
    %v2227 = vadd.f32 0.0, %v2226
    %v2228 = vpop.f32.mrb[0].mxu0
    %v2229 = vadd.f32 0.0, %v2228
    %v2230 = vpop.f32.mrb[0].mxu0
    %v2231 = vadd.f32 0.0, %v2230
    %v2232 = vpop.f32.mrb[0].mxu0
    %v2233 = vadd.f32 0.0, %v2232
    %2234 = vmatprep.mubr.bf16.mxu0 %v1671
    %2235 = vmatmul.mubr.bf16.gmra.mrb[0].mxu0 %v1670
    %v2236 = vpop.f32.mrb[0].mxu0
    %v2237 = vadd.f32 0.0, %v2236
    %v2238 = vpop.f32.mrb[0].mxu0
    %v2239 = vadd.f32 0.0, %v2238
    %v2240 = vpop.f32.mrb[0].mxu0
    %v2241 = vadd.f32 0.0, %v2240
    %v2242 = vpop.f32.mrb[0].mxu0
    %v2243 = vadd.f32 0.0, %v2242
    %2244 = vmatprep.mubr.bf16.mxu0 %v1675
    %2245 = vmatmul.mubr.bf16.gmra.mrb[0].mxu0 %v1674
    %v2246 = vpop.f32.mrb[0].mxu0
    %v2247 = vadd.f32 0.0, %v2246
    %v2248 = vpop.f32.mrb[0].mxu0
    %v2249 = vadd.f32 0.0, %v2248
    %v2250 = vpop.f32.mrb[0].mxu0
    %v2251 = vadd.f32 0.0, %v2250
    %v2252 = vpop.f32.mrb[0].mxu0
    %v2253 = vadd.f32 0.0, %v2252
    %2254 = vdwg.mxu0
    %2255 = vmatprep.subr.bf16.mxu0 %v1967
    %2256 = vmatpush1.bf16.msra.mxu0 %v1966
    %2257 = vmatprep.subr.bf16.mxu0 %v1969
    %2258 = vmatpush1.bf16.msra.mxu0 %v1968
    %2259 = vmatprep.subr.bf16.mxu0 %v1971
    %2260 = vmatpush1.bf16.msra.mxu0 %v1970
    %2261 = vmatprep.subr.bf16.mxu0 %v1973
    %2262 = vmatpush1.bf16.msra.mxu0 %v1972
    %2263 = vmatprep.subr.bf16.mxu0 %v1975
    %2264 = vmatpush1.bf16.msra.mxu0 %v1974
    %2265 = vmatprep.subr.bf16.mxu0 %v1977
    %2266 = vmatpush1.bf16.msra.mxu0 %v1976
    %2267 = vmatprep.subr.bf16.mxu0 %v1979
    %2268 = vmatpush1.bf16.msra.mxu0 %v1978
    %2269 = vmatprep.subr.bf16.mxu0 %v1981
    %2270 = vmatpush1.bf16.msra.mxu0 %v1980
    %2271 = vmatprep.subr.bf16.mxu0 %v1983
    %2272 = vmatpush1.bf16.msra.mxu0 %v1982
    %2273 = vmatprep.subr.bf16.mxu0 %v1985
    %2274 = vmatpush1.bf16.msra.mxu0 %v1984
    %2275 = vmatprep.subr.bf16.mxu0 %v1987
    %2276 = vmatpush1.bf16.msra.mxu0 %v1986
    %2277 = vmatprep.subr.bf16.mxu0 %v1989
    %2278 = vmatpush1.bf16.msra.mxu0 %v1988
    %2279 = vmatprep.subr.bf16.mxu0 %v1991
    %2280 = vmatpush1.bf16.msra.mxu0 %v1990
    %2281 = vmatprep.subr.bf16.mxu0 %v1993
    %2282 = vmatpush1.bf16.msra.mxu0 %v1992
    %2283 = vmatprep.subr.bf16.mxu0 %v1995
    %2284 = vmatpush1.bf16.msra.mxu0 %v1994
    %2285 = vmatprep.subr.bf16.mxu0 %v1997
    %2286 = vmatpush1.bf16.msra.mxu0 %v1996
    %2287 = vmatprep.mubr.bf16.mxu0 %v1617
    %2288 = vmatmul.mubr.bf16.gmra.mrb[0].mxu0 %v1616
    %v2289 = vpop.f32.mrb[0].mxu0
    %v2290 = vadd.f32 %v2097, %v2289
    %v2291 = vpop.f32.mrb[0].mxu0
    %v2292 = vadd.f32 %v2099, %v2291
    %v2293 = vpop.f32.mrb[0].mxu0
    %v2294 = vadd.f32 %v2101, %v2293
    %v2295 = vpop.f32.mrb[0].mxu0
    %v2296 = vadd.f32 %v2103, %v2295
    %2297 = vmatprep.mubr.bf16.mxu0 %v1621
    %2298 = vmatmul.mubr.bf16.gmra.mrb[0].mxu0 %v1620
    %v2299 = vpop.f32.mrb[0].mxu0
    %v2300 = vadd.f32 %v2107, %v2299
    %v2301 = vpop.f32.mrb[0].mxu0
    %v2302 = vadd.f32 %v2109, %v2301
    %v2303 = vpop.f32.mrb[0].mxu0
    %v2304 = vadd.f32 %v2111, %v2303
    %v2305 = vpop.f32.mrb[0].mxu0
    %v2306 = vadd.f32 %v2113, %v2305
    %2307 = vmatprep.mubr.bf16.mxu0 %v1625
    %2308 = vmatmul.mubr.bf16.gmra.mrb[0].mxu0 %v1624
    %v2309 = vpop.f32.mrb[0].mxu0
    %v2310 = vadd.f32 %v2117, %v2309
    %v2311 = vpop.f32.mrb[0].mxu0
    %v2312 = vadd.f32 %v2119, %v2311
    %v2313 = vpop.f32.mrb[0].mxu0
    %v2314 = vadd.f32 %v2121, %v2313
    %v2315 = vpop.f32.mrb[0].mxu0
    %v2316 = vadd.f32 %v2123, %v2315
    %2317 = vmatprep.mubr.bf16.mxu0 %v1629
    %2318 = vmatmul.mubr.bf16.gmra.mrb[0].mxu0 %v1628
    %v2319 = vpop.f32.mrb[0].mxu0
    %v2320 = vadd.f32 %v2127, %v2319
    %v2321 = vpop.f32.mrb[0].mxu0
    %v2322 = vadd.f32 %v2129, %v2321
    %v2323 = vpop.f32.mrb[0].mxu0
    %v2324 = vadd.f32 %v2131, %v2323
    %v2325 = vpop.f32.mrb[0].mxu0
    %v2326 = vadd.f32 %v2133, %v2325
    %2327 = vmatprep.mubr.bf16.mxu0 %v1633
    %2328 = vmatmul.mubr.bf16.gmra.mrb[0].mxu0 %v1632
    %v2329 = vpop.f32.mrb[0].mxu0
    %v2330 = vadd.f32 %v2137, %v2329
    %v2331 = vpop.f32.mrb[0].mxu0
    %v2332 = vadd.f32 %v2139, %v2331
    %v2333 = vpop.f32.mrb[0].mxu0
    %v2334 = vadd.f32 %v2141, %v2333
    %v2335 = vpop.f32.mrb[0].mxu0
    %v2336 = vadd.f32 %v2143, %v2335
    %2337 = vmatprep.mubr.bf16.mxu0 %v1637
    %2338 = vmatmul.mubr.bf16.gmra.mrb[0].mxu0 %v1636
    %v2339 = vpop.f32.mrb[0].mxu0
    %v2340 = vadd.f32 %v2147, %v2339
    %v2341 = vpop.f32.mrb[0].mxu0
    %v2342 = vadd.f32 %v2149, %v2341
    %v2343 = vpop.f32.mrb[0].mxu0
    %v2344 = vadd.f32 %v2151, %v2343
    %v2345 = vpop.f32.mrb[0].mxu0
    %v2346 = vadd.f32 %v2153, %v2345
    %2347 = vmatprep.mubr.bf16.mxu0 %v1641
    %2348 = vmatmul.mubr.bf16.gmra.mrb[0].mxu0 %v1640
    %v2349 = vpop.f32.mrb[0].mxu0
    %v2350 = vadd.f32 %v2157, %v2349
    %v2351 = vpop.f32.mrb[0].mxu0
    %v2352 = vadd.f32 %v2159, %v2351
    %v2353 = vpop.f32.mrb[0].mxu0
    %v2354 = vadd.f32 %v2161, %v2353
    %v2355 = vpop.f32.mrb[0].mxu0
    %v2356 = vadd.f32 %v2163, %v2355
    %2357 = vmatprep.mubr.bf16.mxu0 %v1645
    %2358 = vmatmul.mubr.bf16.gmra.mrb[0].mxu0 %v1644
    %v2359 = vpop.f32.mrb[0].mxu0
    %v2360 = vadd.f32 %v2167, %v2359
    %v2361 = vpop.f32.mrb[0].mxu0
    %v2362 = vadd.f32 %v2169, %v2361
    %v2363 = vpop.f32.mrb[0].mxu0
    %v2364 = vadd.f32 %v2171, %v2363
    %v2365 = vpop.f32.mrb[0].mxu0
    %v2366 = vadd.f32 %v2173, %v2365
    %2367 = vmatprep.mubr.bf16.mxu0 %v1649
    %2368 = vmatmul.mubr.bf16.gmra.mrb[0].mxu0 %v1648
    %v2369 = vpop.f32.mrb[0].mxu0
    %v2370 = vadd.f32 %v2177, %v2369
    %v2371 = vpop.f32.mrb[0].mxu0
    %v2372 = vadd.f32 %v2179, %v2371
    %v2373 = vpop.f32.mrb[0].mxu0
    %v2374 = vadd.f32 %v2181, %v2373
    %v2375 = vpop.f32.mrb[0].mxu0
    %v2376 = vadd.f32 %v2183, %v2375
    %2377 = vmatprep.mubr.bf16.mxu0 %v1653
    %2378 = vmatmul.mubr.bf16.gmra.mrb[0].mxu0 %v1652
    %v2379 = vpop.f32.mrb[0].mxu0
    %v2380 = vadd.f32 %v2187, %v2379
    %v2381 = vpop.f32.mrb[0].mxu0
    %v2382 = vadd.f32 %v2189, %v2381
    %v2383 = vpop.f32.mrb[0].mxu0
    %v2384 = vadd.f32 %v2191, %v2383
    %v2385 = vpop.f32.mrb[0].mxu0
    %v2386 = vadd.f32 %v2193, %v2385
    %2387 = vmatprep.mubr.bf16.mxu0 %v1657
    %2388 = vmatmul.mubr.bf16.gmra.mrb[0].mxu0 %v1656
    %v2389 = vpop.f32.mrb[0].mxu0
    %v2390 = vadd.f32 %v2197, %v2389
    %v2391 = vpop.f32.mrb[0].mxu0
    %v2392 = vadd.f32 %v2199, %v2391
    %v2393 = vpop.f32.mrb[0].mxu0
    %v2394 = vadd.f32 %v2201, %v2393
    %v2395 = vpop.f32.mrb[0].mxu0
    %v2396 = vadd.f32 %v2203, %v2395
    %2397 = vmatprep.mubr.bf16.mxu0 %v1661
    %2398 = vmatmul.mubr.bf16.gmra.mrb[0].mxu0 %v1660
    %v2399 = vpop.f32.mrb[0].mxu0
    %v2400 = vadd.f32 %v2207, %v2399
    %v2401 = vpop.f32.mrb[0].mxu0
    %v2402 = vadd.f32 %v2209, %v2401
    %v2403 = vpop.f32.mrb[0].mxu0
    %v2404 = vadd.f32 %v2211, %v2403
    %v2405 = vpop.f32.mrb[0].mxu0
    %v2406 = vadd.f32 %v2213, %v2405
    %2407 = vmatprep.mubr.bf16.mxu0 %v1665
    %2408 = vmatmul.mubr.bf16.gmra.mrb[0].mxu0 %v1664
    %v2409 = vpop.f32.mrb[0].mxu0
    %v2410 = vadd.f32 %v2217, %v2409
    %v2411 = vpop.f32.mrb[0].mxu0
    %v2412 = vadd.f32 %v2219, %v2411
    %v2413 = vpop.f32.mrb[0].mxu0
    %v2414 = vadd.f32 %v2221, %v2413
    %v2415 = vpop.f32.mrb[0].mxu0
    %v2416 = vadd.f32 %v2223, %v2415
    %2417 = vmatprep.mubr.bf16.mxu0 %v1669
    %2418 = vmatmul.mubr.bf16.gmra.mrb[0].mxu0 %v1668
    %v2419 = vpop.f32.mrb[0].mxu0
    %v2420 = vadd.f32 %v2227, %v2419
    %v2421 = vpop.f32.mrb[0].mxu0
    %v2422 = vadd.f32 %v2229, %v2421
    %v2423 = vpop.f32.mrb[0].mxu0
    %v2424 = vadd.f32 %v2231, %v2423
    %v2425 = vpop.f32.mrb[0].mxu0
    %v2426 = vadd.f32 %v2233, %v2425
    %2427 = vmatprep.mubr.bf16.mxu0 %v1673
    %2428 = vmatmul.mubr.bf16.gmra.mrb[0].mxu0 %v1672
    %v2429 = vpop.f32.mrb[0].mxu0
    %v2430 = vadd.f32 %v2237, %v2429
    %v2431 = vpop.f32.mrb[0].mxu0
    %v2432 = vadd.f32 %v2239, %v2431
    %v2433 = vpop.f32.mrb[0].mxu0
    %v2434 = vadd.f32 %v2241, %v2433
    %v2435 = vpop.f32.mrb[0].mxu0
    %v2436 = vadd.f32 %v2243, %v2435
    %2437 = vmatprep.mubr.bf16.mxu0 %v1677
    %2438 = vmatmul.mubr.bf16.gmra.mrb[0].mxu0 %v1676
    %v2439 = vpop.f32.mrb[0].mxu0
    %v2440 = vadd.f32 %v2247, %v2439
    %v2441 = vpop.f32.mrb[0].mxu0
    %v2442 = vadd.f32 %v2249, %v2441
    %v2443 = vpop.f32.mrb[0].mxu0
    %v2444 = vadd.f32 %v2251, %v2443
    %v2445 = vpop.f32.mrb[0].mxu0
    %v2446 = vadd.f32 %v2253, %v2445
    %2447 = vdwg.mxu0
    %s2448 = scalar_lea.vmem [#allocation4], 2
    %v2449 = vld [vmem:[%s2448] ss:$8 sm:$0x3]
    %s2450 = scalar_lea.vmem [#allocation4], 3
    %v2451 = vld [vmem:[%s2450] ss:$8 sm:$0x3]
    %v2452 = vadd.f32 %v2290, %v2294
    %v2453 = vadd.f32 %v2452, %v2300
    %v2454 = vadd.f32 %v2453, %v2304
    %v2455 = vadd.f32 %v2454, %v2310
    %v2456 = vadd.f32 %v2455, %v2314
    %v2457 = vadd.f32 %v2456, %v2320
    %v2458 = vadd.f32 %v2457, %v2324
    %v2459 = vadd.f32 %v2458, %v2330
    %v2460 = vadd.f32 %v2459, %v2334
    %v2461 = vadd.f32 %v2460, %v2340
    %v2462 = vadd.f32 %v2461, %v2344
    %v2463 = vadd.f32 %v2462, %v2350
    %v2464 = vadd.f32 %v2463, %v2354
    %v2465 = vadd.f32 %v2464, %v2360
    %v2466 = vadd.f32 %v2465, %v2364
    %v2467 = vadd.f32 %v2466, %v2370
    %v2468 = vadd.f32 %v2467, %v2374
    %v2469 = vadd.f32 %v2468, %v2380
    %v2470 = vadd.f32 %v2469, %v2384
    %v2471 = vadd.f32 %v2470, %v2390
    %v2472 = vadd.f32 %v2471, %v2394
    %v2473 = vadd.f32 %v2472, %v2400
    %v2474 = vadd.f32 %v2473, %v2404
    %v2475 = vadd.f32 %v2474, %v2410
    %v2476 = vadd.f32 %v2475, %v2414
    %v2477 = vadd.f32 %v2476, %v2420
    %v2478 = vadd.f32 %v2477, %v2424
    %v2479 = vadd.f32 %v2478, %v2430
    %v2480 = vadd.f32 %v2479, %v2434
    %v2481 = vadd.f32 %v2480, %v2440
    %v2482 = vadd.f32 %v2481, %v2444
    %v2483 = vrot.slane %v2482, 4
    %v2484 = vadd.f32 %v2482, %v2483
    %v2485 = vrot.slane %v2484, 2
    %v2486 = vadd.f32 %v2484, %v2485
    %v2487 = vrot.slane %v2486, 1
    %v2488 = vadd.f32 %v2486, %v2487
    %v2489 = vadd.f32 %v2292, %v2296
    %v2490 = vadd.f32 %v2489, %v2302
    %v2491 = vadd.f32 %v2490, %v2306
    %v2492 = vadd.f32 %v2491, %v2312
    %v2493 = vadd.f32 %v2492, %v2316
    %v2494 = vadd.f32 %v2493, %v2322
    %v2495 = vadd.f32 %v2494, %v2326
    %v2496 = vadd.f32 %v2495, %v2332
    %v2497 = vadd.f32 %v2496, %v2336
    %v2498 = vadd.f32 %v2497, %v2342
    %v2499 = vadd.f32 %v2498, %v2346
    %v2500 = vadd.f32 %v2499, %v2352
    %v2501 = vadd.f32 %v2500, %v2356
    %v2502 = vadd.f32 %v2501, %v2362
    %v2503 = vadd.f32 %v2502, %v2366
    %v2504 = vadd.f32 %v2503, %v2372
    %v2505 = vadd.f32 %v2504, %v2376
    %v2506 = vadd.f32 %v2505, %v2382
    %v2507 = vadd.f32 %v2506, %v2386
    %v2508 = vadd.f32 %v2507, %v2392
    %v2509 = vadd.f32 %v2508, %v2396
    %v2510 = vadd.f32 %v2509, %v2402
    %v2511 = vadd.f32 %v2510, %v2406
    %v2512 = vadd.f32 %v2511, %v2412
    %v2513 = vadd.f32 %v2512, %v2416
    %v2514 = vadd.f32 %v2513, %v2422
    %v2515 = vadd.f32 %v2514, %v2426
    %v2516 = vadd.f32 %v2515, %v2432
    %v2517 = vadd.f32 %v2516, %v2436
    %v2518 = vadd.f32 %v2517, %v2442
    %v2519 = vadd.f32 %v2518, %v2446
    %v2520 = vrot.slane %v2519, 4
    %v2521 = vadd.f32 %v2519, %v2520
    %v2522 = vrot.slane %v2521, 2
    %v2523 = vadd.f32 %v2521, %v2522
    %v2524 = vrot.slane %v2523, 1
    %v2525 = vadd.f32 %v2523, %v2524
    %v2526 = vmul.f32 %v2488, %v737
    %v2527 = vmul.f32 %v2525, %v737
    %v2528 = vsub.f32 %v2290, %v2526
    %v2529 = vsub.f32 %v2292, %v2527
    %v2530 = vsub.f32 %v2294, %v2526
    %v2531 = vsub.f32 %v2296, %v2527
    %v2532 = vsub.f32 %v2300, %v2526
    %v2533 = vsub.f32 %v2302, %v2527
    %v2534 = vsub.f32 %v2304, %v2526
    %v2535 = vsub.f32 %v2306, %v2527
    %v2536 = vsub.f32 %v2310, %v2526
    %v2537 = vsub.f32 %v2312, %v2527
    %v2538 = vsub.f32 %v2314, %v2526
    %v2539 = vsub.f32 %v2316, %v2527
    %v2540 = vsub.f32 %v2320, %v2526
    %v2541 = vsub.f32 %v2322, %v2527
    %v2542 = vsub.f32 %v2324, %v2526
    %v2543 = vsub.f32 %v2326, %v2527
    %v2544 = vsub.f32 %v2330, %v2526
    %v2545 = vsub.f32 %v2332, %v2527
    %v2546 = vsub.f32 %v2334, %v2526
    %v2547 = vsub.f32 %v2336, %v2527
    %v2548 = vsub.f32 %v2340, %v2526
    %v2549 = vsub.f32 %v2342, %v2527
    %v2550 = vsub.f32 %v2344, %v2526
    %v2551 = vsub.f32 %v2346, %v2527
    %v2552 = vsub.f32 %v2350, %v2526
    %v2553 = vsub.f32 %v2352, %v2527
    %v2554 = vsub.f32 %v2354, %v2526
    %v2555 = vsub.f32 %v2356, %v2527
    %v2556 = vsub.f32 %v2360, %v2526
    %v2557 = vsub.f32 %v2362, %v2527
    %v2558 = vsub.f32 %v2364, %v2526
    %v2559 = vsub.f32 %v2366, %v2527
    %v2560 = vsub.f32 %v2370, %v2526
    %v2561 = vsub.f32 %v2372, %v2527
    %v2562 = vsub.f32 %v2374, %v2526
    %v2563 = vsub.f32 %v2376, %v2527
    %v2564 = vsub.f32 %v2380, %v2526
    %v2565 = vsub.f32 %v2382, %v2527
    %v2566 = vsub.f32 %v2384, %v2526
    %v2567 = vsub.f32 %v2386, %v2527
    %v2568 = vsub.f32 %v2390, %v2526
    %v2569 = vsub.f32 %v2392, %v2527
    %v2570 = vsub.f32 %v2394, %v2526
    %v2571 = vsub.f32 %v2396, %v2527
    %v2572 = vsub.f32 %v2400, %v2526
    %v2573 = vsub.f32 %v2402, %v2527
    %v2574 = vsub.f32 %v2404, %v2526
    %v2575 = vsub.f32 %v2406, %v2527
    %v2576 = vsub.f32 %v2410, %v2526
    %v2577 = vsub.f32 %v2412, %v2527
    %v2578 = vsub.f32 %v2414, %v2526
    %v2579 = vsub.f32 %v2416, %v2527
    %v2580 = vsub.f32 %v2420, %v2526
    %v2581 = vsub.f32 %v2422, %v2527
    %v2582 = vsub.f32 %v2424, %v2526
    %v2583 = vsub.f32 %v2426, %v2527
    %v2584 = vsub.f32 %v2430, %v2526
    %v2585 = vsub.f32 %v2432, %v2527
    %v2586 = vsub.f32 %v2434, %v2526
    %v2587 = vsub.f32 %v2436, %v2527
    %v2588 = vsub.f32 %v2440, %v2526
    %v2589 = vsub.f32 %v2442, %v2527
    %v2590 = vsub.f32 %v2444, %v2526
    %v2591 = vsub.f32 %v2446, %v2527
    %v2592 = vmul.f32 %v2528, %v2528
    %v2593 = vmul.f32 %v2529, %v2529
    %v2594 = vmul.f32 %v2530, %v2530
    %v2595 = vmul.f32 %v2531, %v2531
    %v2596 = vmul.f32 %v2532, %v2532
    %v2597 = vmul.f32 %v2533, %v2533
    %v2598 = vmul.f32 %v2534, %v2534
    %v2599 = vmul.f32 %v2535, %v2535
    %v2600 = vmul.f32 %v2536, %v2536
    %v2601 = vmul.f32 %v2537, %v2537
    %v2602 = vmul.f32 %v2538, %v2538
    %v2603 = vmul.f32 %v2539, %v2539
    %v2604 = vmul.f32 %v2540, %v2540
    %v2605 = vmul.f32 %v2541, %v2541
    %v2606 = vmul.f32 %v2542, %v2542
    %v2607 = vmul.f32 %v2543, %v2543
    %v2608 = vmul.f32 %v2544, %v2544
    %v2609 = vmul.f32 %v2545, %v2545
    %v2610 = vmul.f32 %v2546, %v2546
    %v2611 = vmul.f32 %v2547, %v2547
    %v2612 = vmul.f32 %v2548, %v2548
    %v2613 = vmul.f32 %v2549, %v2549
    %v2614 = vmul.f32 %v2550, %v2550
    %v2615 = vmul.f32 %v2551, %v2551
    %v2616 = vmul.f32 %v2552, %v2552
    %v2617 = vmul.f32 %v2553, %v2553
    %v2618 = vmul.f32 %v2554, %v2554
    %v2619 = vmul.f32 %v2555, %v2555
    %v2620 = vmul.f32 %v2556, %v2556
    %v2621 = vmul.f32 %v2557, %v2557
    %v2622 = vmul.f32 %v2558, %v2558
    %v2623 = vmul.f32 %v2559, %v2559
    %v2624 = vmul.f32 %v2560, %v2560
    %v2625 = vmul.f32 %v2561, %v2561
    %v2626 = vmul.f32 %v2562, %v2562
    %v2627 = vmul.f32 %v2563, %v2563
    %v2628 = vmul.f32 %v2564, %v2564
    %v2629 = vmul.f32 %v2565, %v2565
    %v2630 = vmul.f32 %v2566, %v2566
    %v2631 = vmul.f32 %v2567, %v2567
    %v2632 = vmul.f32 %v2568, %v2568
    %v2633 = vmul.f32 %v2569, %v2569
    %v2634 = vmul.f32 %v2570, %v2570
    %v2635 = vmul.f32 %v2571, %v2571
    %v2636 = vmul.f32 %v2572, %v2572
    %v2637 = vmul.f32 %v2573, %v2573
    %v2638 = vmul.f32 %v2574, %v2574
    %v2639 = vmul.f32 %v2575, %v2575
    %v2640 = vmul.f32 %v2576, %v2576
    %v2641 = vmul.f32 %v2577, %v2577
    %v2642 = vmul.f32 %v2578, %v2578
    %v2643 = vmul.f32 %v2579, %v2579
    %v2644 = vmul.f32 %v2580, %v2580
    %v2645 = vmul.f32 %v2581, %v2581
    %v2646 = vmul.f32 %v2582, %v2582
    %v2647 = vmul.f32 %v2583, %v2583
    %v2648 = vmul.f32 %v2584, %v2584
    %v2649 = vmul.f32 %v2585, %v2585
    %v2650 = vmul.f32 %v2586, %v2586
    %v2651 = vmul.f32 %v2587, %v2587
    %v2652 = vmul.f32 %v2588, %v2588
    %v2653 = vmul.f32 %v2589, %v2589
    %v2654 = vmul.f32 %v2590, %v2590
    %v2655 = vmul.f32 %v2591, %v2591
    %v2656 = vadd.f32 %v2592, %v2594
    %v2657 = vadd.f32 %v2656, %v2596
    %v2658 = vadd.f32 %v2657, %v2598
    %v2659 = vadd.f32 %v2658, %v2600
    %v2660 = vadd.f32 %v2659, %v2602
    %v2661 = vadd.f32 %v2660, %v2604
    %v2662 = vadd.f32 %v2661, %v2606
    %v2663 = vadd.f32 %v2662, %v2608
    %v2664 = vadd.f32 %v2663, %v2610
    %v2665 = vadd.f32 %v2664, %v2612
    %v2666 = vadd.f32 %v2665, %v2614
    %v2667 = vadd.f32 %v2666, %v2616
    %v2668 = vadd.f32 %v2667, %v2618
    %v2669 = vadd.f32 %v2668, %v2620
    %v2670 = vadd.f32 %v2669, %v2622
    %v2671 = vadd.f32 %v2670, %v2624
    %v2672 = vadd.f32 %v2671, %v2626
    %v2673 = vadd.f32 %v2672, %v2628
    %v2674 = vadd.f32 %v2673, %v2630
    %v2675 = vadd.f32 %v2674, %v2632
    %v2676 = vadd.f32 %v2675, %v2634
    %v2677 = vadd.f32 %v2676, %v2636
    %v2678 = vadd.f32 %v2677, %v2638
    %v2679 = vadd.f32 %v2678, %v2640
    %v2680 = vadd.f32 %v2679, %v2642
    %v2681 = vadd.f32 %v2680, %v2644
    %v2682 = vadd.f32 %v2681, %v2646
    %v2683 = vadd.f32 %v2682, %v2648
    %v2684 = vadd.f32 %v2683, %v2650
    %v2685 = vadd.f32 %v2684, %v2652
    %v2686 = vadd.f32 %v2685, %v2654
    %v2687 = vrot.slane %v2686, 4
    %v2688 = vadd.f32 %v2686, %v2687
    %v2689 = vrot.slane %v2688, 2
    %v2690 = vadd.f32 %v2688, %v2689
    %v2691 = vrot.slane %v2690, 1
    %v2692 = vadd.f32 %v2690, %v2691
    %v2693 = vadd.f32 %v2593, %v2595
    %v2694 = vadd.f32 %v2693, %v2597
    %v2695 = vadd.f32 %v2694, %v2599
    %v2696 = vadd.f32 %v2695, %v2601
    %v2697 = vadd.f32 %v2696, %v2603
    %v2698 = vadd.f32 %v2697, %v2605
    %v2699 = vadd.f32 %v2698, %v2607
    %v2700 = vadd.f32 %v2699, %v2609
    %v2701 = vadd.f32 %v2700, %v2611
    %v2702 = vadd.f32 %v2701, %v2613
    %v2703 = vadd.f32 %v2702, %v2615
    %v2704 = vadd.f32 %v2703, %v2617
    %v2705 = vadd.f32 %v2704, %v2619
    %v2706 = vadd.f32 %v2705, %v2621
    %v2707 = vadd.f32 %v2706, %v2623
    %v2708 = vadd.f32 %v2707, %v2625
    %v2709 = vadd.f32 %v2708, %v2627
    %v2710 = vadd.f32 %v2709, %v2629
    %v2711 = vadd.f32 %v2710, %v2631
    %v2712 = vadd.f32 %v2711, %v2633
    %v2713 = vadd.f32 %v2712, %v2635
    %v2714 = vadd.f32 %v2713, %v2637
    %v2715 = vadd.f32 %v2714, %v2639
    %v2716 = vadd.f32 %v2715, %v2641
    %v2717 = vadd.f32 %v2716, %v2643
    %v2718 = vadd.f32 %v2717, %v2645
    %v2719 = vadd.f32 %v2718, %v2647
    %v2720 = vadd.f32 %v2719, %v2649
    %v2721 = vadd.f32 %v2720, %v2651
    %v2722 = vadd.f32 %v2721, %v2653
    %v2723 = vadd.f32 %v2722, %v2655
    %v2724 = vrot.slane %v2723, 4
    %v2725 = vadd.f32 %v2723, %v2724
    %v2726 = vrot.slane %v2725, 2
    %v2727 = vadd.f32 %v2725, %v2726
    %v2728 = vrot.slane %v2727, 1
    %v2729 = vadd.f32 %v2727, %v2728
    %v2730 = vmul.f32 %v2692, %v737
    %v2731 = vmul.f32 %v2729, %v737
    %v2732 = vadd.f32 %v2730, 1e-05
    %v2733 = vadd.f32 %v2731, 1e-05
    %v2734 = vrsqrt.pop %v2732
    %v2735 = vrsqrt.pop %v2733
    %v2738 = vcombine.low %v2734, %v2735
    %v2740 = vunpack.c.l.s4 1966171168
    %v2741 = vunpack.c.0.s8 %v2740
    %v2742 = vlaneseq
    %v2743 = vshrl.u32 %v2742, 7
    %v2744 = vsub.s32 %v2741, %v2743
    %v2745 = vrot.slane %v2738, %v2744
    %v2747 = vunpack.c.l.s4 1966171168
    %v2748 = vunpack.c.0.s8 %v2747
    %v2749 = vlaneseq
    %v2750 = vshrl.u32 %v2749, 7
    %v2751 = vsub.s32 %v2748, %v2750
    %v2752 = vrot.slane %v2745, %v2751
    %v2754 = vmul.f32 %v2449, %v2752
    %v2756 = vlaneseq
    %v2757 = vshrl.u32 %v2756, 7
    %v2758 = vsub.s32 0, %v2757
    %v2759 = vrot.slane %v2754, %v2758
    %v2760 = vlaneseq
    %v2761 = vshrl.u32 %v2760, 7
    %v2762 = vsub.s32 1, %v2761
    %v2763 = vrot.slane %v2754, %v2762
    %v2766 = vmul.f32 %v2528, %v2759
    %v2767 = vmul.f32 %v2529, %v2763
    %v2768 = vmul.f32 %v2530, %v2759
    %v2769 = vmul.f32 %v2531, %v2763
    %v2770 = vmul.f32 %v2532, %v2759
    %v2771 = vmul.f32 %v2533, %v2763
    %v2772 = vmul.f32 %v2534, %v2759
    %v2773 = vmul.f32 %v2535, %v2763
    %v2774 = vmul.f32 %v2536, %v2759
    %v2775 = vmul.f32 %v2537, %v2763
    %v2776 = vmul.f32 %v2538, %v2759
    %v2777 = vmul.f32 %v2539, %v2763
    %v2778 = vmul.f32 %v2540, %v2759
    %v2779 = vmul.f32 %v2541, %v2763
    %v2780 = vmul.f32 %v2542, %v2759
    %v2781 = vmul.f32 %v2543, %v2763
    %v2782 = vmul.f32 %v2544, %v2759
    %v2783 = vmul.f32 %v2545, %v2763
    %v2784 = vmul.f32 %v2546, %v2759
    %v2785 = vmul.f32 %v2547, %v2763
    %v2786 = vmul.f32 %v2548, %v2759
    %v2787 = vmul.f32 %v2549, %v2763
    %v2788 = vmul.f32 %v2550, %v2759
    %v2789 = vmul.f32 %v2551, %v2763
    %v2790 = vmul.f32 %v2552, %v2759
    %v2791 = vmul.f32 %v2553, %v2763
    %v2792 = vmul.f32 %v2554, %v2759
    %v2793 = vmul.f32 %v2555, %v2763
    %v2794 = vmul.f32 %v2556, %v2759
    %v2795 = vmul.f32 %v2557, %v2763
    %v2796 = vmul.f32 %v2558, %v2759
    %v2797 = vmul.f32 %v2559, %v2763
    %v2798 = vmul.f32 %v2560, %v2759
    %v2799 = vmul.f32 %v2561, %v2763
    %v2800 = vmul.f32 %v2562, %v2759
    %v2801 = vmul.f32 %v2563, %v2763
    %v2802 = vmul.f32 %v2564, %v2759
    %v2803 = vmul.f32 %v2565, %v2763
    %v2804 = vmul.f32 %v2566, %v2759
    %v2805 = vmul.f32 %v2567, %v2763
    %v2806 = vmul.f32 %v2568, %v2759
    %v2807 = vmul.f32 %v2569, %v2763
    %v2808 = vmul.f32 %v2570, %v2759
    %v2809 = vmul.f32 %v2571, %v2763
    %v2810 = vmul.f32 %v2572, %v2759
    %v2811 = vmul.f32 %v2573, %v2763
    %v2812 = vmul.f32 %v2574, %v2759
    %v2813 = vmul.f32 %v2575, %v2763
    %v2814 = vmul.f32 %v2576, %v2759
    %v2815 = vmul.f32 %v2577, %v2763
    %v2816 = vmul.f32 %v2578, %v2759
    %v2817 = vmul.f32 %v2579, %v2763
    %v2818 = vmul.f32 %v2580, %v2759
    %v2819 = vmul.f32 %v2581, %v2763
    %v2820 = vmul.f32 %v2582, %v2759
    %v2821 = vmul.f32 %v2583, %v2763
    %v2822 = vmul.f32 %v2584, %v2759
    %v2823 = vmul.f32 %v2585, %v2763
    %v2824 = vmul.f32 %v2586, %v2759
    %v2825 = vmul.f32 %v2587, %v2763
    %v2826 = vmul.f32 %v2588, %v2759
    %v2827 = vmul.f32 %v2589, %v2763
    %v2828 = vmul.f32 %v2590, %v2759
    %v2829 = vmul.f32 %v2591, %v2763
    %v2831 = vlaneseq
    %v2832 = vshrl.u32 %v2831, 7
    %v2833 = vsub.s32 0, %v2832
    %v2834 = vrot.slane %v2451, %v2833
    %v2835 = vlaneseq
    %v2836 = vshrl.u32 %v2835, 7
    %v2837 = vsub.s32 1, %v2836
    %v2838 = vrot.slane %v2451, %v2837
    %v2841 = vadd.f32 %v2766, %v2834
    %v2842 = vadd.f32 %v2767, %v2838
    %v2843 = vadd.f32 %v2768, %v2834
    %v2844 = vadd.f32 %v2769, %v2838
    %v2845 = vadd.f32 %v2770, %v2834
    %v2846 = vadd.f32 %v2771, %v2838
    %v2847 = vadd.f32 %v2772, %v2834
    %v2848 = vadd.f32 %v2773, %v2838
    %v2849 = vadd.f32 %v2774, %v2834
    %v2850 = vadd.f32 %v2775, %v2838
    %v2851 = vadd.f32 %v2776, %v2834
    %v2852 = vadd.f32 %v2777, %v2838
    %v2853 = vadd.f32 %v2778, %v2834
    %v2854 = vadd.f32 %v2779, %v2838
    %v2855 = vadd.f32 %v2780, %v2834
    %v2856 = vadd.f32 %v2781, %v2838
    %v2857 = vadd.f32 %v2782, %v2834
    %v2858 = vadd.f32 %v2783, %v2838
    %v2859 = vadd.f32 %v2784, %v2834
    %v2860 = vadd.f32 %v2785, %v2838
    %v2861 = vadd.f32 %v2786, %v2834
    %v2862 = vadd.f32 %v2787, %v2838
    %v2863 = vadd.f32 %v2788, %v2834
    %v2864 = vadd.f32 %v2789, %v2838
    %v2865 = vadd.f32 %v2790, %v2834
    %v2866 = vadd.f32 %v2791, %v2838
    %v2867 = vadd.f32 %v2792, %v2834
    %v2868 = vadd.f32 %v2793, %v2838
    %v2869 = vadd.f32 %v2794, %v2834
    %v2870 = vadd.f32 %v2795, %v2838
    %v2871 = vadd.f32 %v2796, %v2834
    %v2872 = vadd.f32 %v2797, %v2838
    %v2873 = vadd.f32 %v2798, %v2834
    %v2874 = vadd.f32 %v2799, %v2838
    %v2875 = vadd.f32 %v2800, %v2834
    %v2876 = vadd.f32 %v2801, %v2838
    %v2877 = vadd.f32 %v2802, %v2834
    %v2878 = vadd.f32 %v2803, %v2838
    %v2879 = vadd.f32 %v2804, %v2834
    %v2880 = vadd.f32 %v2805, %v2838
    %v2881 = vadd.f32 %v2806, %v2834
    %v2882 = vadd.f32 %v2807, %v2838
    %v2883 = vadd.f32 %v2808, %v2834
    %v2884 = vadd.f32 %v2809, %v2838
    %v2885 = vadd.f32 %v2810, %v2834
    %v2886 = vadd.f32 %v2811, %v2838
    %v2887 = vadd.f32 %v2812, %v2834
    %v2888 = vadd.f32 %v2813, %v2838
    %v2889 = vadd.f32 %v2814, %v2834
    %v2890 = vadd.f32 %v2815, %v2838
    %v2891 = vadd.f32 %v2816, %v2834
    %v2892 = vadd.f32 %v2817, %v2838
    %v2893 = vadd.f32 %v2818, %v2834
    %v2894 = vadd.f32 %v2819, %v2838
    %v2895 = vadd.f32 %v2820, %v2834
    %v2896 = vadd.f32 %v2821, %v2838
    %v2897 = vadd.f32 %v2822, %v2834
    %v2898 = vadd.f32 %v2823, %v2838
    %v2899 = vadd.f32 %v2824, %v2834
    %v2900 = vadd.f32 %v2825, %v2838
    %v2901 = vadd.f32 %v2826, %v2834
    %v2902 = vadd.f32 %v2827, %v2838
    %v2903 = vadd.f32 %v2828, %v2834
    %v2904 = vadd.f32 %v2829, %v2838
    %v2905 = vmax.f32 %v2841, 0.0
    %v2906 = vmax.f32 %v2842, 0.0
    %v2907 = vmax.f32 %v2843, 0.0
    %v2908 = vmax.f32 %v2844, 0.0
    %v2909 = vmax.f32 %v2845, 0.0
    %v2910 = vmax.f32 %v2846, 0.0
    %v2911 = vmax.f32 %v2847, 0.0
    %v2912 = vmax.f32 %v2848, 0.0
    %v2913 = vmax.f32 %v2849, 0.0
    %v2914 = vmax.f32 %v2850, 0.0
    %v2915 = vmax.f32 %v2851, 0.0
    %v2916 = vmax.f32 %v2852, 0.0
    %v2917 = vmax.f32 %v2853, 0.0
    %v2918 = vmax.f32 %v2854, 0.0
    %v2919 = vmax.f32 %v2855, 0.0
    %v2920 = vmax.f32 %v2856, 0.0
    %v2921 = vmax.f32 %v2857, 0.0
    %v2922 = vmax.f32 %v2858, 0.0
    %v2923 = vmax.f32 %v2859, 0.0
    %v2924 = vmax.f32 %v2860, 0.0
    %v2925 = vmax.f32 %v2861, 0.0
    %v2926 = vmax.f32 %v2862, 0.0
    %v2927 = vmax.f32 %v2863, 0.0
    %v2928 = vmax.f32 %v2864, 0.0
    %v2929 = vmax.f32 %v2865, 0.0
    %v2930 = vmax.f32 %v2866, 0.0
    %v2931 = vmax.f32 %v2867, 0.0
    %v2932 = vmax.f32 %v2868, 0.0
    %v2933 = vmax.f32 %v2869, 0.0
    %v2934 = vmax.f32 %v2870, 0.0
    %v2935 = vmax.f32 %v2871, 0.0
    %v2936 = vmax.f32 %v2872, 0.0
    %v2937 = vmax.f32 %v2873, 0.0
    %v2938 = vmax.f32 %v2874, 0.0
    %v2939 = vmax.f32 %v2875, 0.0
    %v2940 = vmax.f32 %v2876, 0.0
    %v2941 = vmax.f32 %v2877, 0.0
    %v2942 = vmax.f32 %v2878, 0.0
    %v2943 = vmax.f32 %v2879, 0.0
    %v2944 = vmax.f32 %v2880, 0.0
    %v2945 = vmax.f32 %v2881, 0.0
    %v2946 = vmax.f32 %v2882, 0.0
    %v2947 = vmax.f32 %v2883, 0.0
    %v2948 = vmax.f32 %v2884, 0.0
    %v2949 = vmax.f32 %v2885, 0.0
    %v2950 = vmax.f32 %v2886, 0.0
    %v2951 = vmax.f32 %v2887, 0.0
    %v2952 = vmax.f32 %v2888, 0.0
    %v2953 = vmax.f32 %v2889, 0.0
    %v2954 = vmax.f32 %v2890, 0.0
    %v2955 = vmax.f32 %v2891, 0.0
    %v2956 = vmax.f32 %v2892, 0.0
    %v2957 = vmax.f32 %v2893, 0.0
    %v2958 = vmax.f32 %v2894, 0.0
    %v2959 = vmax.f32 %v2895, 0.0
    %v2960 = vmax.f32 %v2896, 0.0
    %v2961 = vmax.f32 %v2897, 0.0
    %v2962 = vmax.f32 %v2898, 0.0
    %v2963 = vmax.f32 %v2899, 0.0
    %v2964 = vmax.f32 %v2900, 0.0
    %v2965 = vmax.f32 %v2901, 0.0
    %v2966 = vmax.f32 %v2902, 0.0
    %v2967 = vmax.f32 %v2903, 0.0
    %v2968 = vmax.f32 %v2904, 0.0
    %v2969 = vpack.c.bf16 %v2907, %v2905
    %v2970 = vpack.c.bf16 %v2908, %v2906
    %v2971 = vpack.c.bf16 %v2911, %v2909
    %v2972 = vpack.c.bf16 %v2912, %v2910
    %v2973 = vpack.c.bf16 %v2915, %v2913
    %v2974 = vpack.c.bf16 %v2916, %v2914
    %v2975 = vpack.c.bf16 %v2919, %v2917
    %v2976 = vpack.c.bf16 %v2920, %v2918
    %v2977 = vpack.c.bf16 %v2923, %v2921
    %v2978 = vpack.c.bf16 %v2924, %v2922
    %v2979 = vpack.c.bf16 %v2927, %v2925
    %v2980 = vpack.c.bf16 %v2928, %v2926
    %v2981 = vpack.c.bf16 %v2931, %v2929
    %v2982 = vpack.c.bf16 %v2932, %v2930
    %v2983 = vpack.c.bf16 %v2935, %v2933
    %v2984 = vpack.c.bf16 %v2936, %v2934
    %v2985 = vpack.c.bf16 %v2939, %v2937
    %v2986 = vpack.c.bf16 %v2940, %v2938
    %v2987 = vpack.c.bf16 %v2943, %v2941
    %v2988 = vpack.c.bf16 %v2944, %v2942
    %v2989 = vpack.c.bf16 %v2947, %v2945
    %v2990 = vpack.c.bf16 %v2948, %v2946
    %v2991 = vpack.c.bf16 %v2951, %v2949
    %v2992 = vpack.c.bf16 %v2952, %v2950
    %v2993 = vpack.c.bf16 %v2955, %v2953
    %v2994 = vpack.c.bf16 %v2956, %v2954
    %v2995 = vpack.c.bf16 %v2959, %v2957
    %v2996 = vpack.c.bf16 %v2960, %v2958
    %v2997 = vpack.c.bf16 %v2963, %v2961
    %v2998 = vpack.c.bf16 %v2964, %v2962
    %v2999 = vpack.c.bf16 %v2967, %v2965
    %v3000 = vpack.c.bf16 %v2968, %v2966
    %v3001 = vld [vmem:[%s3] sm:$0xf]
    %v3002 = vld [vmem:[%s3 + $0x4] sm:$0xf]
    %v3003 = vld [vmem:[%s3 + $0x8] sm:$0xf]
    %v3004 = vld [vmem:[%s3 + $0xc] sm:$0xf]
    %v3005 = vld [vmem:[%s3 + $0x10] sm:$0xf]
    %v3006 = vld [vmem:[%s3 + $0x14] sm:$0xf]
    %v3007 = vld [vmem:[%s3 + $0x18] sm:$0xf]
    %v3008 = vld [vmem:[%s3 + $0x1c] sm:$0xf]
    %v3009 = vld [vmem:[%s3 + $0x20] sm:$0xf]
    %v3010 = vld [vmem:[%s3 + $0x24] sm:$0xf]
    %v3011 = vld [vmem:[%s3 + $0x28] sm:$0xf]
    %v3012 = vld [vmem:[%s3 + $0x2c] sm:$0xf]
    %v3013 = vld [vmem:[%s3 + $0x30] sm:$0xf]
    %v3014 = vld [vmem:[%s3 + $0x34] sm:$0xf]
    %v3015 = vld [vmem:[%s3 + $0x38] sm:$0xf]
    %v3016 = vld [vmem:[%s3 + $0x3c] sm:$0xf]
    %v3017 = vld [vmem:[%s3 + $0x40] sm:$0xf]
    %v3018 = vld [vmem:[%s3 + $0x44] sm:$0xf]
    %v3019 = vld [vmem:[%s3 + $0x48] sm:$0xf]
    %v3020 = vld [vmem:[%s3 + $0x4c] sm:$0xf]
    %v3021 = vld [vmem:[%s3 + $0x50] sm:$0xf]
    %v3022 = vld [vmem:[%s3 + $0x54] sm:$0xf]
    %v3023 = vld [vmem:[%s3 + $0x58] sm:$0xf]
    %v3024 = vld [vmem:[%s3 + $0x5c] sm:$0xf]
    %v3025 = vld [vmem:[%s3 + $0x60] sm:$0xf]
    %v3026 = vld [vmem:[%s3 + $0x64] sm:$0xf]
    %v3027 = vld [vmem:[%s3 + $0x68] sm:$0xf]
    %v3028 = vld [vmem:[%s3 + $0x6c] sm:$0xf]
    %v3029 = vld [vmem:[%s3 + $0x70] sm:$0xf]
    %v3030 = vld [vmem:[%s3 + $0x74] sm:$0xf]
    %v3031 = vld [vmem:[%s3 + $0x78] sm:$0xf]
    %v3032 = vld [vmem:[%s3 + $0x7c] sm:$0xf]
    %v3065 = vunpack.c.l.b16 %v3001
    %v3066 = vunpack.c.l.b16 %v3002
    %v3067 = vunpack.c.l.b16 %v3003
    %v3068 = vunpack.c.l.b16 %v3004
    %v3069 = vunpack.c.l.b16 %v3005
    %v3070 = vunpack.c.l.b16 %v3006
    %v3071 = vunpack.c.l.b16 %v3007
    %v3072 = vunpack.c.l.b16 %v3008
    %v3073 = vunpack.c.l.b16 %v3009
    %v3074 = vunpack.c.l.b16 %v3010
    %v3075 = vunpack.c.l.b16 %v3011
    %v3076 = vunpack.c.l.b16 %v3012
    %v3077 = vunpack.c.l.b16 %v3013
    %v3078 = vunpack.c.l.b16 %v3014
    %v3079 = vunpack.c.l.b16 %v3015
    %v3080 = vunpack.c.l.b16 %v3016
    %v3081 = vunpack.c.l.b16 %v3017
    %v3082 = vunpack.c.l.b16 %v3018
    %v3083 = vunpack.c.l.b16 %v3019
    %v3084 = vunpack.c.l.b16 %v3020
    %v3085 = vunpack.c.l.b16 %v3021
    %v3086 = vunpack.c.l.b16 %v3022
    %v3087 = vunpack.c.l.b16 %v3023
    %v3088 = vunpack.c.l.b16 %v3024
    %v3089 = vunpack.c.l.b16 %v3025
    %v3090 = vunpack.c.l.b16 %v3026
    %v3091 = vunpack.c.l.b16 %v3027
    %v3092 = vunpack.c.l.b16 %v3028
    %v3093 = vunpack.c.l.b16 %v3029
    %v3094 = vunpack.c.l.b16 %v3030
    %v3095 = vunpack.c.l.b16 %v3031
    %v3096 = vunpack.c.l.b16 %v3032
    %v3097 = vpack.c.b16 %v3066, %v3065
    %v3098 = vpack.c.b16 %v3068, %v3067
    %v3099 = vpack.c.b16 %v3070, %v3069
    %v3100 = vpack.c.b16 %v3072, %v3071
    %v3101 = vpack.c.b16 %v3074, %v3073
    %v3102 = vpack.c.b16 %v3076, %v3075
    %v3103 = vpack.c.b16 %v3078, %v3077
    %v3104 = vpack.c.b16 %v3080, %v3079
    %v3105 = vpack.c.b16 %v3082, %v3081
    %v3106 = vpack.c.b16 %v3084, %v3083
    %v3107 = vpack.c.b16 %v3086, %v3085
    %v3108 = vpack.c.b16 %v3088, %v3087
    %v3109 = vpack.c.b16 %v3090, %v3089
    %v3110 = vpack.c.b16 %v3092, %v3091
    %v3111 = vpack.c.b16 %v3094, %v3093
    %v3112 = vpack.c.b16 %v3096, %v3095
    %3129 = vmatprep.subr.bf16.mxu0 0
    %3130 = vmatpush1.bf16.msra.mxu0 %v3097
    %3131 = vmatprep.subr.bf16.mxu0 0
    %3132 = vmatpush1.bf16.msra.mxu0 %v3098
    %3133 = vmatprep.subr.bf16.mxu0 0
    %3134 = vmatpush1.bf16.msra.mxu0 %v3099
    %3135 = vmatprep.subr.bf16.mxu0 0
    %3136 = vmatpush1.bf16.msra.mxu0 %v3100
    %3137 = vmatprep.subr.bf16.mxu0 0
    %3138 = vmatpush1.bf16.msra.mxu0 %v3101
    %3139 = vmatprep.subr.bf16.mxu0 0
    %3140 = vmatpush1.bf16.msra.mxu0 %v3102
    %3141 = vmatprep.subr.bf16.mxu0 0
    %3142 = vmatpush1.bf16.msra.mxu0 %v3103
    %3143 = vmatprep.subr.bf16.mxu0 0
    %3144 = vmatpush1.bf16.msra.mxu0 %v3104
    %3145 = vmatprep.subr.bf16.mxu0 0
    %3146 = vmatpush1.bf16.msra.mxu0 %v3105
    %3147 = vmatprep.subr.bf16.mxu0 0
    %3148 = vmatpush1.bf16.msra.mxu0 %v3106
    %3149 = vmatprep.subr.bf16.mxu0 0
    %3150 = vmatpush1.bf16.msra.mxu0 %v3107
    %3151 = vmatprep.subr.bf16.mxu0 0
    %3152 = vmatpush1.bf16.msra.mxu0 %v3108
    %3153 = vmatprep.subr.bf16.mxu0 0
    %3154 = vmatpush1.bf16.msra.mxu0 %v3109
    %3155 = vmatprep.subr.bf16.mxu0 0
    %3156 = vmatpush1.bf16.msra.mxu0 %v3110
    %3157 = vmatprep.subr.bf16.mxu0 0
    %3158 = vmatpush1.bf16.msra.mxu0 %v3111
    %3159 = vmatprep.subr.bf16.mxu0 0
    %3160 = vmatpush1.bf16.msra.mxu0 %v3112
    %3161 = vmatprep.mubr.bf16.mxu0 %v2970
    %3162 = vmatmul.mubr.bf16.gmra.mrb[0].mxu0 %v2969
    %v3163 = vpop.f32.mrb[0].mxu0
    %v3164 = vadd.f32 0.0, %v3163
    %v3165 = vpop.f32.mrb[0].mxu0
    %v3166 = vpop.f32.mrb[0].mxu0
    %v3167 = vadd.f32 0.0, %v3166
    %v3168 = vpop.f32.mrb[0].mxu0
    %3169 = vmatprep.mubr.bf16.mxu0 %v2972
    %3170 = vmatmul.mubr.bf16.gmra.mrb[0].mxu0 %v2971
    %v3171 = vpop.f32.mrb[0].mxu0
    %v3172 = vadd.f32 0.0, %v3171
    %v3173 = vpop.f32.mrb[0].mxu0
    %v3174 = vpop.f32.mrb[0].mxu0
    %v3175 = vadd.f32 0.0, %v3174
    %v3176 = vpop.f32.mrb[0].mxu0
    %3177 = vmatprep.mubr.bf16.mxu0 %v2974
    %3178 = vmatmul.mubr.bf16.gmra.mrb[0].mxu0 %v2973
    %v3179 = vpop.f32.mrb[0].mxu0
    %v3180 = vadd.f32 0.0, %v3179
    %v3181 = vpop.f32.mrb[0].mxu0
    %v3182 = vpop.f32.mrb[0].mxu0
    %v3183 = vadd.f32 0.0, %v3182
    %v3184 = vpop.f32.mrb[0].mxu0
    %3185 = vmatprep.mubr.bf16.mxu0 %v2976
    %3186 = vmatmul.mubr.bf16.gmra.mrb[0].mxu0 %v2975
    %v3187 = vpop.f32.mrb[0].mxu0
    %v3188 = vadd.f32 0.0, %v3187
    %v3189 = vpop.f32.mrb[0].mxu0
    %v3190 = vpop.f32.mrb[0].mxu0
    %v3191 = vadd.f32 0.0, %v3190
    %v3192 = vpop.f32.mrb[0].mxu0
    %3193 = vmatprep.mubr.bf16.mxu0 %v2978
    %3194 = vmatmul.mubr.bf16.gmra.mrb[0].mxu0 %v2977
    %v3195 = vpop.f32.mrb[0].mxu0
    %v3196 = vadd.f32 0.0, %v3195
    %v3197 = vpop.f32.mrb[0].mxu0
    %v3198 = vpop.f32.mrb[0].mxu0
    %v3199 = vadd.f32 0.0, %v3198
    %v3200 = vpop.f32.mrb[0].mxu0
    %3201 = vmatprep.mubr.bf16.mxu0 %v2980
    %3202 = vmatmul.mubr.bf16.gmra.mrb[0].mxu0 %v2979
    %v3203 = vpop.f32.mrb[0].mxu0
    %v3204 = vadd.f32 0.0, %v3203
    %v3205 = vpop.f32.mrb[0].mxu0
    %v3206 = vpop.f32.mrb[0].mxu0
    %v3207 = vadd.f32 0.0, %v3206
    %v3208 = vpop.f32.mrb[0].mxu0
    %3209 = vmatprep.mubr.bf16.mxu0 %v2982
    %3210 = vmatmul.mubr.bf16.gmra.mrb[0].mxu0 %v2981
    %v3211 = vpop.f32.mrb[0].mxu0
    %v3212 = vadd.f32 0.0, %v3211
    %v3213 = vpop.f32.mrb[0].mxu0
    %v3214 = vpop.f32.mrb[0].mxu0
    %v3215 = vadd.f32 0.0, %v3214
    %v3216 = vpop.f32.mrb[0].mxu0
    %3217 = vmatprep.mubr.bf16.mxu0 %v2984
    %3218 = vmatmul.mubr.bf16.gmra.mrb[0].mxu0 %v2983
    %v3219 = vpop.f32.mrb[0].mxu0
    %v3220 = vadd.f32 0.0, %v3219
    %v3221 = vpop.f32.mrb[0].mxu0
    %v3222 = vpop.f32.mrb[0].mxu0
    %v3223 = vadd.f32 0.0, %v3222
    %v3224 = vpop.f32.mrb[0].mxu0
    %3225 = vmatprep.mubr.bf16.mxu0 %v2986
    %3226 = vmatmul.mubr.bf16.gmra.mrb[0].mxu0 %v2985
    %v3227 = vpop.f32.mrb[0].mxu0
    %v3228 = vadd.f32 0.0, %v3227
    %v3229 = vpop.f32.mrb[0].mxu0
    %v3230 = vpop.f32.mrb[0].mxu0
    %v3231 = vadd.f32 0.0, %v3230
    %v3232 = vpop.f32.mrb[0].mxu0
    %3233 = vmatprep.mubr.bf16.mxu0 %v2988
    %3234 = vmatmul.mubr.bf16.gmra.mrb[0].mxu0 %v2987
    %v3235 = vpop.f32.mrb[0].mxu0
    %v3236 = vadd.f32 0.0, %v3235
    %v3237 = vpop.f32.mrb[0].mxu0
    %v3238 = vpop.f32.mrb[0].mxu0
    %v3239 = vadd.f32 0.0, %v3238
    %v3240 = vpop.f32.mrb[0].mxu0
    %3241 = vmatprep.mubr.bf16.mxu0 %v2990
    %3242 = vmatmul.mubr.bf16.gmra.mrb[0].mxu0 %v2989
    %v3243 = vpop.f32.mrb[0].mxu0
    %v3244 = vadd.f32 0.0, %v3243
    %v3245 = vpop.f32.mrb[0].mxu0
    %v3246 = vpop.f32.mrb[0].mxu0
    %v3247 = vadd.f32 0.0, %v3246
    %v3248 = vpop.f32.mrb[0].mxu0
    %3249 = vmatprep.mubr.bf16.mxu0 %v2992
    %3250 = vmatmul.mubr.bf16.gmra.mrb[0].mxu0 %v2991
    %v3251 = vpop.f32.mrb[0].mxu0
    %v3252 = vadd.f32 0.0, %v3251
    %v3253 = vpop.f32.mrb[0].mxu0
    %v3254 = vpop.f32.mrb[0].mxu0
    %v3255 = vadd.f32 0.0, %v3254
    %v3256 = vpop.f32.mrb[0].mxu0
    %3257 = vmatprep.mubr.bf16.mxu0 %v2994
    %3258 = vmatmul.mubr.bf16.gmra.mrb[0].mxu0 %v2993
    %v3259 = vpop.f32.mrb[0].mxu0
    %v3260 = vadd.f32 0.0, %v3259
    %v3261 = vpop.f32.mrb[0].mxu0
    %v3262 = vpop.f32.mrb[0].mxu0
    %v3263 = vadd.f32 0.0, %v3262
    %v3264 = vpop.f32.mrb[0].mxu0
    %3265 = vmatprep.mubr.bf16.mxu0 %v2996
    %3266 = vmatmul.mubr.bf16.gmra.mrb[0].mxu0 %v2995
    %v3267 = vpop.f32.mrb[0].mxu0
    %v3268 = vadd.f32 0.0, %v3267
    %v3269 = vpop.f32.mrb[0].mxu0
    %v3270 = vpop.f32.mrb[0].mxu0
    %v3271 = vadd.f32 0.0, %v3270
    %v3272 = vpop.f32.mrb[0].mxu0
    %3273 = vmatprep.mubr.bf16.mxu0 %v2998
    %3274 = vmatmul.mubr.bf16.gmra.mrb[0].mxu0 %v2997
    %v3275 = vpop.f32.mrb[0].mxu0
    %v3276 = vadd.f32 0.0, %v3275
    %v3277 = vpop.f32.mrb[0].mxu0
    %v3278 = vpop.f32.mrb[0].mxu0
    %v3279 = vadd.f32 0.0, %v3278
    %v3280 = vpop.f32.mrb[0].mxu0
    %3281 = vmatprep.mubr.bf16.mxu0 %v3000
    %3282 = vmatmul.mubr.bf16.gmra.mrb[0].mxu0 %v2999
    %v3283 = vpop.f32.mrb[0].mxu0
    %v3284 = vadd.f32 0.0, %v3283
    %v3285 = vpop.f32.mrb[0].mxu0
    %v3286 = vpop.f32.mrb[0].mxu0
    %v3287 = vadd.f32 0.0, %v3286
    %v3288 = vpop.f32.mrb[0].mxu0
    %3289 = vdwg.mxu0
    %v3290 = vld [vmem:[#allocation4 + $0x4] ss:$0 sm:$0xff]
    %v3291 = vld [vmem:[#allocation4 + $0x5] ss:$0 sm:$0xff]
    %v3292 = vadd.f32 %v3164, %v3167
    %v3293 = vadd.f32 %v3292, %v3172
    %v3294 = vadd.f32 %v3293, %v3175
    %v3295 = vadd.f32 %v3294, %v3180
    %v3296 = vadd.f32 %v3295, %v3183
    %v3297 = vadd.f32 %v3296, %v3188
    %v3298 = vadd.f32 %v3297, %v3191
    %v3299 = vadd.f32 %v3298, %v3196
    %v3300 = vadd.f32 %v3299, %v3199
    %v3301 = vadd.f32 %v3300, %v3204
    %v3302 = vadd.f32 %v3301, %v3207
    %v3303 = vadd.f32 %v3302, %v3212
    %v3304 = vadd.f32 %v3303, %v3215
    %v3305 = vadd.f32 %v3304, %v3220
    %v3306 = vadd.f32 %v3305, %v3223
    %v3307 = vadd.f32 %v3306, %v3228
    %v3308 = vadd.f32 %v3307, %v3231
    %v3309 = vadd.f32 %v3308, %v3236
    %v3310 = vadd.f32 %v3309, %v3239
    %v3311 = vadd.f32 %v3310, %v3244
    %v3312 = vadd.f32 %v3311, %v3247
    %v3313 = vadd.f32 %v3312, %v3252
    %v3314 = vadd.f32 %v3313, %v3255
    %v3315 = vadd.f32 %v3314, %v3260
    %v3316 = vadd.f32 %v3315, %v3263
    %v3317 = vadd.f32 %v3316, %v3268
    %v3318 = vadd.f32 %v3317, %v3271
    %v3319 = vadd.f32 %v3318, %v3276
    %v3320 = vadd.f32 %v3319, %v3279
    %v3321 = vadd.f32 %v3320, %v3284
    %v3322 = vadd.f32 %v3321, %v3287
    %v3323 = vrot.slane %v3322, 4
    %v3324 = vadd.f32 %v3322, %v3323
    %v3325 = vrot.slane %v3324, 2
    %v3326 = vadd.f32 %v3324, %v3325
    %v3327 = vrot.slane %v3326, 1
    %v3328 = vadd.f32 %v3326, %v3327
    %v3329 = vmul.f32 %v3328, %v737
    %v3330 = vsub.f32 %v3164, %v3329
    %v3331 = vsub.f32 %v3167, %v3329
    %v3332 = vsub.f32 %v3172, %v3329
    %v3333 = vsub.f32 %v3175, %v3329
    %v3334 = vsub.f32 %v3180, %v3329
    %v3335 = vsub.f32 %v3183, %v3329
    %v3336 = vsub.f32 %v3188, %v3329
    %v3337 = vsub.f32 %v3191, %v3329
    %v3338 = vsub.f32 %v3196, %v3329
    %v3339 = vsub.f32 %v3199, %v3329
    %v3340 = vsub.f32 %v3204, %v3329
    %v3341 = vsub.f32 %v3207, %v3329
    %v3342 = vsub.f32 %v3212, %v3329
    %v3343 = vsub.f32 %v3215, %v3329
    %v3344 = vsub.f32 %v3220, %v3329
    %v3345 = vsub.f32 %v3223, %v3329
    %v3346 = vsub.f32 %v3228, %v3329
    %v3347 = vsub.f32 %v3231, %v3329
    %v3348 = vsub.f32 %v3236, %v3329
    %v3349 = vsub.f32 %v3239, %v3329
    %v3350 = vsub.f32 %v3244, %v3329
    %v3351 = vsub.f32 %v3247, %v3329
    %v3352 = vsub.f32 %v3252, %v3329
    %v3353 = vsub.f32 %v3255, %v3329
    %v3354 = vsub.f32 %v3260, %v3329
    %v3355 = vsub.f32 %v3263, %v3329
    %v3356 = vsub.f32 %v3268, %v3329
    %v3357 = vsub.f32 %v3271, %v3329
    %v3358 = vsub.f32 %v3276, %v3329
    %v3359 = vsub.f32 %v3279, %v3329
    %v3360 = vsub.f32 %v3284, %v3329
    %v3361 = vsub.f32 %v3287, %v3329
    %v3362 = vmul.f32 %v3330, %v3330
    %v3363 = vmul.f32 %v3331, %v3331
    %v3364 = vmul.f32 %v3332, %v3332
    %v3365 = vmul.f32 %v3333, %v3333
    %v3366 = vmul.f32 %v3334, %v3334
    %v3367 = vmul.f32 %v3335, %v3335
    %v3368 = vmul.f32 %v3336, %v3336
    %v3369 = vmul.f32 %v3337, %v3337
    %v3370 = vmul.f32 %v3338, %v3338
    %v3371 = vmul.f32 %v3339, %v3339
    %v3372 = vmul.f32 %v3340, %v3340
    %v3373 = vmul.f32 %v3341, %v3341
    %v3374 = vmul.f32 %v3342, %v3342
    %v3375 = vmul.f32 %v3343, %v3343
    %v3376 = vmul.f32 %v3344, %v3344
    %v3377 = vmul.f32 %v3345, %v3345
    %v3378 = vmul.f32 %v3346, %v3346
    %v3379 = vmul.f32 %v3347, %v3347
    %v3380 = vmul.f32 %v3348, %v3348
    %v3381 = vmul.f32 %v3349, %v3349
    %v3382 = vmul.f32 %v3350, %v3350
    %v3383 = vmul.f32 %v3351, %v3351
    %v3384 = vmul.f32 %v3352, %v3352
    %v3385 = vmul.f32 %v3353, %v3353
    %v3386 = vmul.f32 %v3354, %v3354
    %v3387 = vmul.f32 %v3355, %v3355
    %v3388 = vmul.f32 %v3356, %v3356
    %v3389 = vmul.f32 %v3357, %v3357
    %v3390 = vmul.f32 %v3358, %v3358
    %v3391 = vmul.f32 %v3359, %v3359
    %v3392 = vmul.f32 %v3360, %v3360
    %v3393 = vmul.f32 %v3361, %v3361
    %v3394 = vadd.f32 %v3362, %v3363
    %v3395 = vadd.f32 %v3394, %v3364
    %v3396 = vadd.f32 %v3395, %v3365
    %v3397 = vadd.f32 %v3396, %v3366
    %v3398 = vadd.f32 %v3397, %v3367
    %v3399 = vadd.f32 %v3398, %v3368
    %v3400 = vadd.f32 %v3399, %v3369
    %v3401 = vadd.f32 %v3400, %v3370
    %v3402 = vadd.f32 %v3401, %v3371
    %v3403 = vadd.f32 %v3402, %v3372
    %v3404 = vadd.f32 %v3403, %v3373
    %v3405 = vadd.f32 %v3404, %v3374
    %v3406 = vadd.f32 %v3405, %v3375
    %v3407 = vadd.f32 %v3406, %v3376
    %v3408 = vadd.f32 %v3407, %v3377
    %v3409 = vadd.f32 %v3408, %v3378
    %v3410 = vadd.f32 %v3409, %v3379
    %v3411 = vadd.f32 %v3410, %v3380
    %v3412 = vadd.f32 %v3411, %v3381
    %v3413 = vadd.f32 %v3412, %v3382
    %v3414 = vadd.f32 %v3413, %v3383
    %v3415 = vadd.f32 %v3414, %v3384
    %v3416 = vadd.f32 %v3415, %v3385
    %v3417 = vadd.f32 %v3416, %v3386
    %v3418 = vadd.f32 %v3417, %v3387
    %v3419 = vadd.f32 %v3418, %v3388
    %v3420 = vadd.f32 %v3419, %v3389
    %v3421 = vadd.f32 %v3420, %v3390
    %v3422 = vadd.f32 %v3421, %v3391
    %v3423 = vadd.f32 %v3422, %v3392
    %v3424 = vadd.f32 %v3423, %v3393
    %v3425 = vrot.slane %v3424, 4
    %v3426 = vadd.f32 %v3424, %v3425
    %v3427 = vrot.slane %v3426, 2
    %v3428 = vadd.f32 %v3426, %v3427
    %v3429 = vrot.slane %v3428, 1
    %v3430 = vadd.f32 %v3428, %v3429
    %v3431 = vmul.f32 %v3430, %v737
    %v3432 = vadd.f32 %v3431, 1e-05
    %v3433 = vrsqrt.pop %v3432
    %v3434 = vmul.f32 %v3290, %v3433
    %v3435 = vmul.f32 %v3330, %v3434
    %v3436 = vmul.f32 %v3331, %v3434
    %v3437 = vmul.f32 %v3332, %v3434
    %v3438 = vmul.f32 %v3333, %v3434
    %v3439 = vmul.f32 %v3334, %v3434
    %v3440 = vmul.f32 %v3335, %v3434
    %v3441 = vmul.f32 %v3336, %v3434
    %v3442 = vmul.f32 %v3337, %v3434
    %v3443 = vmul.f32 %v3338, %v3434
    %v3444 = vmul.f32 %v3339, %v3434
    %v3445 = vmul.f32 %v3340, %v3434
    %v3446 = vmul.f32 %v3341, %v3434
    %v3447 = vmul.f32 %v3342, %v3434
    %v3448 = vmul.f32 %v3343, %v3434
    %v3449 = vmul.f32 %v3344, %v3434
    %v3450 = vmul.f32 %v3345, %v3434
    %v3451 = vmul.f32 %v3346, %v3434
    %v3452 = vmul.f32 %v3347, %v3434
    %v3453 = vmul.f32 %v3348, %v3434
    %v3454 = vmul.f32 %v3349, %v3434
    %v3455 = vmul.f32 %v3350, %v3434
    %v3456 = vmul.f32 %v3351, %v3434
    %v3457 = vmul.f32 %v3352, %v3434
    %v3458 = vmul.f32 %v3353, %v3434
    %v3459 = vmul.f32 %v3354, %v3434
    %v3460 = vmul.f32 %v3355, %v3434
    %v3461 = vmul.f32 %v3356, %v3434
    %v3462 = vmul.f32 %v3357, %v3434
    %v3463 = vmul.f32 %v3358, %v3434
    %v3464 = vmul.f32 %v3359, %v3434
    %v3465 = vmul.f32 %v3360, %v3434
    %v3466 = vmul.f32 %v3361, %v3434
    %v3467 = vadd.f32 %v3435, %v3291
    %v3468 = vadd.f32 %v3436, %v3291
    %v3469 = vadd.f32 %v3437, %v3291
    %v3470 = vadd.f32 %v3438, %v3291
    %v3471 = vadd.f32 %v3439, %v3291
    %v3472 = vadd.f32 %v3440, %v3291
    %v3473 = vadd.f32 %v3441, %v3291
    %v3474 = vadd.f32 %v3442, %v3291
    %v3475 = vadd.f32 %v3443, %v3291
    %v3476 = vadd.f32 %v3444, %v3291
    %v3477 = vadd.f32 %v3445, %v3291
    %v3478 = vadd.f32 %v3446, %v3291
    %v3479 = vadd.f32 %v3447, %v3291
    %v3480 = vadd.f32 %v3448, %v3291
    %v3481 = vadd.f32 %v3449, %v3291
    %v3482 = vadd.f32 %v3450, %v3291
    %v3483 = vadd.f32 %v3451, %v3291
    %v3484 = vadd.f32 %v3452, %v3291
    %v3485 = vadd.f32 %v3453, %v3291
    %v3486 = vadd.f32 %v3454, %v3291
    %v3487 = vadd.f32 %v3455, %v3291
    %v3488 = vadd.f32 %v3456, %v3291
    %v3489 = vadd.f32 %v3457, %v3291
    %v3490 = vadd.f32 %v3458, %v3291
    %v3491 = vadd.f32 %v3459, %v3291
    %v3492 = vadd.f32 %v3460, %v3291
    %v3493 = vadd.f32 %v3461, %v3291
    %v3494 = vadd.f32 %v3462, %v3291
    %v3495 = vadd.f32 %v3463, %v3291
    %v3496 = vadd.f32 %v3464, %v3291
    %v3497 = vadd.f32 %v3465, %v3291
    %v3498 = vadd.f32 %v3466, %v3291
    %v3499 = vmax.f32 %v3467, 0.0
    %v3500 = vmax.f32 %v3468, 0.0
    %v3501 = vmax.f32 %v3469, 0.0
    %v3502 = vmax.f32 %v3470, 0.0
    %v3503 = vmax.f32 %v3471, 0.0
    %v3504 = vmax.f32 %v3472, 0.0
    %v3505 = vmax.f32 %v3473, 0.0
    %v3506 = vmax.f32 %v3474, 0.0
    %v3507 = vmax.f32 %v3475, 0.0
    %v3508 = vmax.f32 %v3476, 0.0
    %v3509 = vmax.f32 %v3477, 0.0
    %v3510 = vmax.f32 %v3478, 0.0
    %v3511 = vmax.f32 %v3479, 0.0
    %v3512 = vmax.f32 %v3480, 0.0
    %v3513 = vmax.f32 %v3481, 0.0
    %v3514 = vmax.f32 %v3482, 0.0
    %v3515 = vmax.f32 %v3483, 0.0
    %v3516 = vmax.f32 %v3484, 0.0
    %v3517 = vmax.f32 %v3485, 0.0
    %v3518 = vmax.f32 %v3486, 0.0
    %v3519 = vmax.f32 %v3487, 0.0
    %v3520 = vmax.f32 %v3488, 0.0
    %v3521 = vmax.f32 %v3489, 0.0
    %v3522 = vmax.f32 %v3490, 0.0
    %v3523 = vmax.f32 %v3491, 0.0
    %v3524 = vmax.f32 %v3492, 0.0
    %v3525 = vmax.f32 %v3493, 0.0
    %v3526 = vmax.f32 %v3494, 0.0
    %v3527 = vmax.f32 %v3495, 0.0
    %v3528 = vmax.f32 %v3496, 0.0
    %v3529 = vmax.f32 %v3497, 0.0
    %v3530 = vmax.f32 %v3498, 0.0
    %v3531 = vpack.c.bf16 %v3500, %v3499
    %v3532 = vpack.c.bf16 %v3502, %v3501
    %v3533 = vpack.c.bf16 %v3504, %v3503
    %v3534 = vpack.c.bf16 %v3506, %v3505
    %v3535 = vpack.c.bf16 %v3508, %v3507
    %v3536 = vpack.c.bf16 %v3510, %v3509
    %v3537 = vpack.c.bf16 %v3512, %v3511
    %v3538 = vpack.c.bf16 %v3514, %v3513
    %v3539 = vpack.c.bf16 %v3516, %v3515
    %v3540 = vpack.c.bf16 %v3518, %v3517
    %v3541 = vpack.c.bf16 %v3520, %v3519
    %v3542 = vpack.c.bf16 %v3522, %v3521
    %v3543 = vpack.c.bf16 %v3524, %v3523
    %v3544 = vpack.c.bf16 %v3526, %v3525
    %v3545 = vpack.c.bf16 %v3528, %v3527
    %v3546 = vpack.c.bf16 %v3530, %v3529
    %v3547 = vld [vmem:[%s4] sm:$0xf]
    %v3548 = vld [vmem:[%s4 + $0x4] sm:$0xf]
    %v3549 = vld [vmem:[%s4 + $0x8] sm:$0xf]
    %v3550 = vld [vmem:[%s4 + $0xc] sm:$0xf]
    %v3551 = vld [vmem:[%s4 + $0x10] sm:$0xf]
    %v3552 = vld [vmem:[%s4 + $0x14] sm:$0xf]
    %v3553 = vld [vmem:[%s4 + $0x18] sm:$0xf]
    %v3554 = vld [vmem:[%s4 + $0x1c] sm:$0xf]
    %v3555 = vld [vmem:[%s4 + $0x20] sm:$0xf]
    %v3556 = vld [vmem:[%s4 + $0x24] sm:$0xf]
    %v3557 = vld [vmem:[%s4 + $0x28] sm:$0xf]
    %v3558 = vld [vmem:[%s4 + $0x2c] sm:$0xf]
    %v3559 = vld [vmem:[%s4 + $0x30] sm:$0xf]
    %v3560 = vld [vmem:[%s4 + $0x34] sm:$0xf]
    %v3561 = vld [vmem:[%s4 + $0x38] sm:$0xf]
    %v3562 = vld [vmem:[%s4 + $0x3c] sm:$0xf]
    %v3579 = vunpack.c.l.b16 %v3547
    %v3580 = vunpack.c.l.b16 %v3548
    %v3581 = vunpack.c.l.b16 %v3549
    %v3582 = vunpack.c.l.b16 %v3550
    %v3583 = vunpack.c.l.b16 %v3551
    %v3584 = vunpack.c.l.b16 %v3552
    %v3585 = vunpack.c.l.b16 %v3553
    %v3586 = vunpack.c.l.b16 %v3554
    %v3587 = vunpack.c.l.b16 %v3555
    %v3588 = vunpack.c.l.b16 %v3556
    %v3589 = vunpack.c.l.b16 %v3557
    %v3590 = vunpack.c.l.b16 %v3558
    %v3591 = vunpack.c.l.b16 %v3559
    %v3592 = vunpack.c.l.b16 %v3560
    %v3593 = vunpack.c.l.b16 %v3561
    %v3594 = vunpack.c.l.b16 %v3562
    %v3595 = vpack.c.b16 %v3580, %v3579
    %v3596 = vpack.c.b16 %v3582, %v3581
    %v3597 = vpack.c.b16 %v3584, %v3583
    %v3598 = vpack.c.b16 %v3586, %v3585
    %v3599 = vpack.c.b16 %v3588, %v3587
    %v3600 = vpack.c.b16 %v3590, %v3589
    %v3601 = vpack.c.b16 %v3592, %v3591
    %v3602 = vpack.c.b16 %v3594, %v3593
    %3611 = vmatprep.subr.bf16.mxu0 0
    %3612 = vmatpush1.bf16.msra.mxu0 %v3595
    %3613 = vmatprep.subr.bf16.mxu0 0
    %3614 = vmatpush1.bf16.msra.mxu0 %v3596
    %3615 = vmatprep.subr.bf16.mxu0 0
    %3616 = vmatpush1.bf16.msra.mxu0 %v3597
    %3617 = vmatprep.subr.bf16.mxu0 0
    %3618 = vmatpush1.bf16.msra.mxu0 %v3598
    %3619 = vmatprep.subr.bf16.mxu0 0
    %3620 = vmatpush1.bf16.msra.mxu0 %v3599
    %3621 = vmatprep.subr.bf16.mxu0 0
    %3622 = vmatpush1.bf16.msra.mxu0 %v3600
    %3623 = vmatprep.subr.bf16.mxu0 0
    %3624 = vmatpush1.bf16.msra.mxu0 %v3601
    %3625 = vmatprep.subr.bf16.mxu0 0
    %3626 = vmatpush1.bf16.msra.mxu0 %v3602
    %3627 = vmatprep.subr.bf16.mxu0 0
    %3628 = vmatpush1.bf16.msra.mxu0 0
    %3629 = vmatprep.subr.bf16.mxu0 0
    %3630 = vmatpush1.bf16.msra.mxu0 0
    %3631 = vmatprep.subr.bf16.mxu0 0
    %3632 = vmatpush1.bf16.msra.mxu0 0
    %3633 = vmatprep.subr.bf16.mxu0 0
    %3634 = vmatpush1.bf16.msra.mxu0 0
    %3635 = vmatprep.subr.bf16.mxu0 0
    %3636 = vmatpush1.bf16.msra.mxu0 0
    %3637 = vmatprep.subr.bf16.mxu0 0
    %3638 = vmatpush1.bf16.msra.mxu0 0
    %3639 = vmatprep.subr.bf16.mxu0 0
    %3640 = vmatpush1.bf16.msra.mxu0 0
    %3641 = vmatprep.subr.bf16.mxu0 0
    %3642 = vmatpush1.bf16.msra.mxu0 0
    %3643 = vmatprep.mubr.bf16.mxu0 0
    %3644 = vmatmul.mubr.bf16.gmra.mrb[0].mxu0 %v3531
    %v3645 = vpop.f32.mrb[0].mxu0
    %v3646 = vadd.f32 0.0, %v3645
    %v3647 = vpop.f32.mrb[0].mxu0
    %v3648 = vpop.f32.mrb[0].mxu0
    %v3649 = vadd.f32 0.0, %v3648
    %v3650 = vpop.f32.mrb[0].mxu0
    %3651 = vmatprep.mubr.bf16.mxu0 0
    %3652 = vmatmul.mubr.bf16.gmra.mrb[0].mxu0 %v3532
    %v3653 = vpop.f32.mrb[0].mxu0
    %v3654 = vadd.f32 0.0, %v3653
    %v3655 = vpop.f32.mrb[0].mxu0
    %v3656 = vpop.f32.mrb[0].mxu0
    %v3657 = vadd.f32 0.0, %v3656
    %v3658 = vpop.f32.mrb[0].mxu0
    %3659 = vmatprep.mubr.bf16.mxu0 0
    %3660 = vmatmul.mubr.bf16.gmra.mrb[0].mxu0 %v3533
    %v3661 = vpop.f32.mrb[0].mxu0
    %v3662 = vadd.f32 0.0, %v3661
    %v3663 = vpop.f32.mrb[0].mxu0
    %v3664 = vpop.f32.mrb[0].mxu0
    %v3665 = vadd.f32 0.0, %v3664
    %v3666 = vpop.f32.mrb[0].mxu0
    %3667 = vmatprep.mubr.bf16.mxu0 0
    %3668 = vmatmul.mubr.bf16.gmra.mrb[0].mxu0 %v3534
    %v3669 = vpop.f32.mrb[0].mxu0
    %v3670 = vadd.f32 0.0, %v3669
    %v3671 = vpop.f32.mrb[0].mxu0
    %v3672 = vpop.f32.mrb[0].mxu0
    %v3673 = vadd.f32 0.0, %v3672
    %v3674 = vpop.f32.mrb[0].mxu0
    %3675 = vmatprep.mubr.bf16.mxu0 0
    %3676 = vmatmul.mubr.bf16.gmra.mrb[0].mxu0 %v3535
    %v3677 = vpop.f32.mrb[0].mxu0
    %v3678 = vadd.f32 0.0, %v3677
    %v3679 = vpop.f32.mrb[0].mxu0
    %v3680 = vpop.f32.mrb[0].mxu0
    %v3681 = vadd.f32 0.0, %v3680
    %v3682 = vpop.f32.mrb[0].mxu0
    %3683 = vmatprep.mubr.bf16.mxu0 0
    %3684 = vmatmul.mubr.bf16.gmra.mrb[0].mxu0 %v3536
    %v3685 = vpop.f32.mrb[0].mxu0
    %v3686 = vadd.f32 0.0, %v3685
    %v3687 = vpop.f32.mrb[0].mxu0
    %v3688 = vpop.f32.mrb[0].mxu0
    %v3689 = vadd.f32 0.0, %v3688
    %v3690 = vpop.f32.mrb[0].mxu0
    %3691 = vmatprep.mubr.bf16.mxu0 0
    %3692 = vmatmul.mubr.bf16.gmra.mrb[0].mxu0 %v3537
    %v3693 = vpop.f32.mrb[0].mxu0
    %v3694 = vadd.f32 0.0, %v3693
    %v3695 = vpop.f32.mrb[0].mxu0
    %v3696 = vpop.f32.mrb[0].mxu0
    %v3697 = vadd.f32 0.0, %v3696
    %v3698 = vpop.f32.mrb[0].mxu0
    %3699 = vmatprep.mubr.bf16.mxu0 0
    %3700 = vmatmul.mubr.bf16.gmra.mrb[0].mxu0 %v3538
    %v3701 = vpop.f32.mrb[0].mxu0
    %v3702 = vadd.f32 0.0, %v3701
    %v3703 = vpop.f32.mrb[0].mxu0
    %v3704 = vpop.f32.mrb[0].mxu0
    %v3705 = vadd.f32 0.0, %v3704
    %v3706 = vpop.f32.mrb[0].mxu0
    %3707 = vmatprep.mubr.bf16.mxu0 0
    %3708 = vmatmul.mubr.bf16.gmra.mrb[0].mxu0 %v3539
    %v3709 = vpop.f32.mrb[0].mxu0
    %v3710 = vadd.f32 0.0, %v3709
    %v3711 = vpop.f32.mrb[0].mxu0
    %v3712 = vpop.f32.mrb[0].mxu0
    %v3713 = vadd.f32 0.0, %v3712
    %v3714 = vpop.f32.mrb[0].mxu0
    %3715 = vmatprep.mubr.bf16.mxu0 0
    %3716 = vmatmul.mubr.bf16.gmra.mrb[0].mxu0 %v3540
    %v3717 = vpop.f32.mrb[0].mxu0
    %v3718 = vadd.f32 0.0, %v3717
    %v3719 = vpop.f32.mrb[0].mxu0
    %v3720 = vpop.f32.mrb[0].mxu0
    %v3721 = vadd.f32 0.0, %v3720
    %v3722 = vpop.f32.mrb[0].mxu0
    %3723 = vmatprep.mubr.bf16.mxu0 0
    %3724 = vmatmul.mubr.bf16.gmra.mrb[0].mxu0 %v3541
    %v3725 = vpop.f32.mrb[0].mxu0
    %v3726 = vadd.f32 0.0, %v3725
    %v3727 = vpop.f32.mrb[0].mxu0
    %v3728 = vpop.f32.mrb[0].mxu0
    %v3729 = vadd.f32 0.0, %v3728
    %v3730 = vpop.f32.mrb[0].mxu0
    %3731 = vmatprep.mubr.bf16.mxu0 0
    %3732 = vmatmul.mubr.bf16.gmra.mrb[0].mxu0 %v3542
    %v3733 = vpop.f32.mrb[0].mxu0
    %v3734 = vadd.f32 0.0, %v3733
    %v3735 = vpop.f32.mrb[0].mxu0
    %v3736 = vpop.f32.mrb[0].mxu0
    %v3737 = vadd.f32 0.0, %v3736
    %v3738 = vpop.f32.mrb[0].mxu0
    %3739 = vmatprep.mubr.bf16.mxu0 0
    %3740 = vmatmul.mubr.bf16.gmra.mrb[0].mxu0 %v3543
    %v3741 = vpop.f32.mrb[0].mxu0
    %v3742 = vadd.f32 0.0, %v3741
    %v3743 = vpop.f32.mrb[0].mxu0
    %v3744 = vpop.f32.mrb[0].mxu0
    %v3745 = vadd.f32 0.0, %v3744
    %v3746 = vpop.f32.mrb[0].mxu0
    %3747 = vmatprep.mubr.bf16.mxu0 0
    %3748 = vmatmul.mubr.bf16.gmra.mrb[0].mxu0 %v3544
    %v3749 = vpop.f32.mrb[0].mxu0
    %v3750 = vadd.f32 0.0, %v3749
    %v3751 = vpop.f32.mrb[0].mxu0
    %v3752 = vpop.f32.mrb[0].mxu0
    %v3753 = vadd.f32 0.0, %v3752
    %v3754 = vpop.f32.mrb[0].mxu0
    %3755 = vmatprep.mubr.bf16.mxu0 0
    %3756 = vmatmul.mubr.bf16.gmra.mrb[0].mxu0 %v3545
    %v3757 = vpop.f32.mrb[0].mxu0
    %v3758 = vadd.f32 0.0, %v3757
    %v3759 = vpop.f32.mrb[0].mxu0
    %v3760 = vpop.f32.mrb[0].mxu0
    %v3761 = vadd.f32 0.0, %v3760
    %v3762 = vpop.f32.mrb[0].mxu0
    %3763 = vmatprep.mubr.bf16.mxu0 0
    %3764 = vmatmul.mubr.bf16.gmra.mrb[0].mxu0 %v3546
    %v3765 = vpop.f32.mrb[0].mxu0
    %v3766 = vadd.f32 0.0, %v3765
    %v3767 = vpop.f32.mrb[0].mxu0
    %v3768 = vpop.f32.mrb[0].mxu0
    %v3769 = vadd.f32 0.0, %v3768
    %v3770 = vpop.f32.mrb[0].mxu0
    %3771 = vdwg.mxu0
    %v3772 = vld [vmem:[#allocation4 + $0x6] ss:$0 sm:$0xff]
    %v3773 = vld [vmem:[#allocation4 + $0x7] ss:$0 sm:$0xff]
    %v3774 = vadd.f32 %v3646, %v3649
    %v3775 = vadd.f32 %v3774, %v3654
    %v3776 = vadd.f32 %v3775, %v3657
    %v3777 = vadd.f32 %v3776, %v3662
    %v3778 = vadd.f32 %v3777, %v3665
    %v3779 = vadd.f32 %v3778, %v3670
    %v3780 = vadd.f32 %v3779, %v3673
    %v3781 = vadd.f32 %v3780, %v3678
    %v3782 = vadd.f32 %v3781, %v3681
    %v3783 = vadd.f32 %v3782, %v3686
    %v3784 = vadd.f32 %v3783, %v3689
    %v3785 = vadd.f32 %v3784, %v3694
    %v3786 = vadd.f32 %v3785, %v3697
    %v3787 = vadd.f32 %v3786, %v3702
    %v3788 = vadd.f32 %v3787, %v3705
    %v3789 = vadd.f32 %v3788, %v3710
    %v3790 = vadd.f32 %v3789, %v3713
    %v3791 = vadd.f32 %v3790, %v3718
    %v3792 = vadd.f32 %v3791, %v3721
    %v3793 = vadd.f32 %v3792, %v3726
    %v3794 = vadd.f32 %v3793, %v3729
    %v3795 = vadd.f32 %v3794, %v3734
    %v3796 = vadd.f32 %v3795, %v3737
    %v3797 = vadd.f32 %v3796, %v3742
    %v3798 = vadd.f32 %v3797, %v3745
    %v3799 = vadd.f32 %v3798, %v3750
    %v3800 = vadd.f32 %v3799, %v3753
    %v3801 = vadd.f32 %v3800, %v3758
    %v3802 = vadd.f32 %v3801, %v3761
    %v3803 = vadd.f32 %v3802, %v3766
    %v3804 = vadd.f32 %v3803, %v3769
    %v3805 = vrot.slane %v3804, 4
    %v3806 = vadd.f32 %v3804, %v3805
    %v3807 = vrot.slane %v3806, 2
    %v3808 = vadd.f32 %v3806, %v3807
    %v3809 = vrot.slane %v3808, 1
    %v3810 = vadd.f32 %v3808, %v3809
    %v3811 = vmul.f32 %v3810, %v737
    %v3812 = vsub.f32 %v3646, %v3811
    %v3813 = vsub.f32 %v3649, %v3811
    %v3814 = vsub.f32 %v3654, %v3811
    %v3815 = vsub.f32 %v3657, %v3811
    %v3816 = vsub.f32 %v3662, %v3811
    %v3817 = vsub.f32 %v3665, %v3811
    %v3818 = vsub.f32 %v3670, %v3811
    %v3819 = vsub.f32 %v3673, %v3811
    %v3820 = vsub.f32 %v3678, %v3811
    %v3821 = vsub.f32 %v3681, %v3811
    %v3822 = vsub.f32 %v3686, %v3811
    %v3823 = vsub.f32 %v3689, %v3811
    %v3824 = vsub.f32 %v3694, %v3811
    %v3825 = vsub.f32 %v3697, %v3811
    %v3826 = vsub.f32 %v3702, %v3811
    %v3827 = vsub.f32 %v3705, %v3811
    %v3828 = vsub.f32 %v3710, %v3811
    %v3829 = vsub.f32 %v3713, %v3811
    %v3830 = vsub.f32 %v3718, %v3811
    %v3831 = vsub.f32 %v3721, %v3811
    %v3832 = vsub.f32 %v3726, %v3811
    %v3833 = vsub.f32 %v3729, %v3811
    %v3834 = vsub.f32 %v3734, %v3811
    %v3835 = vsub.f32 %v3737, %v3811
    %v3836 = vsub.f32 %v3742, %v3811
    %v3837 = vsub.f32 %v3745, %v3811
    %v3838 = vsub.f32 %v3750, %v3811
    %v3839 = vsub.f32 %v3753, %v3811
    %v3840 = vsub.f32 %v3758, %v3811
    %v3841 = vsub.f32 %v3761, %v3811
    %v3842 = vsub.f32 %v3766, %v3811
    %v3843 = vsub.f32 %v3769, %v3811
    %v3844 = vmul.f32 %v3812, %v3812
    %v3845 = vmul.f32 %v3813, %v3813
    %v3846 = vmul.f32 %v3814, %v3814
    %v3847 = vmul.f32 %v3815, %v3815
    %v3848 = vmul.f32 %v3816, %v3816
    %v3849 = vmul.f32 %v3817, %v3817
    %v3850 = vmul.f32 %v3818, %v3818
    %v3851 = vmul.f32 %v3819, %v3819
    %v3852 = vmul.f32 %v3820, %v3820
    %v3853 = vmul.f32 %v3821, %v3821
    %v3854 = vmul.f32 %v3822, %v3822
    %v3855 = vmul.f32 %v3823, %v3823
    %v3856 = vmul.f32 %v3824, %v3824
    %v3857 = vmul.f32 %v3825, %v3825
    %v3858 = vmul.f32 %v3826, %v3826
    %v3859 = vmul.f32 %v3827, %v3827
    %v3860 = vmul.f32 %v3828, %v3828
    %v3861 = vmul.f32 %v3829, %v3829
    %v3862 = vmul.f32 %v3830, %v3830
    %v3863 = vmul.f32 %v3831, %v3831
    %v3864 = vmul.f32 %v3832, %v3832
    %v3865 = vmul.f32 %v3833, %v3833
    %v3866 = vmul.f32 %v3834, %v3834
    %v3867 = vmul.f32 %v3835, %v3835
    %v3868 = vmul.f32 %v3836, %v3836
    %v3869 = vmul.f32 %v3837, %v3837
    %v3870 = vmul.f32 %v3838, %v3838
    %v3871 = vmul.f32 %v3839, %v3839
    %v3872 = vmul.f32 %v3840, %v3840
    %v3873 = vmul.f32 %v3841, %v3841
    %v3874 = vmul.f32 %v3842, %v3842
    %v3875 = vmul.f32 %v3843, %v3843
    %v3876 = vadd.f32 %v3844, %v3845
    %v3877 = vadd.f32 %v3876, %v3846
    %v3878 = vadd.f32 %v3877, %v3847
    %v3879 = vadd.f32 %v3878, %v3848
    %v3880 = vadd.f32 %v3879, %v3849
    %v3881 = vadd.f32 %v3880, %v3850
    %v3882 = vadd.f32 %v3881, %v3851
    %v3883 = vadd.f32 %v3882, %v3852
    %v3884 = vadd.f32 %v3883, %v3853
    %v3885 = vadd.f32 %v3884, %v3854
    %v3886 = vadd.f32 %v3885, %v3855
    %v3887 = vadd.f32 %v3886, %v3856
    %v3888 = vadd.f32 %v3887, %v3857
    %v3889 = vadd.f32 %v3888, %v3858
    %v3890 = vadd.f32 %v3889, %v3859
    %v3891 = vadd.f32 %v3890, %v3860
    %v3892 = vadd.f32 %v3891, %v3861
    %v3893 = vadd.f32 %v3892, %v3862
    %v3894 = vadd.f32 %v3893, %v3863
    %v3895 = vadd.f32 %v3894, %v3864
    %v3896 = vadd.f32 %v3895, %v3865
    %v3897 = vadd.f32 %v3896, %v3866
    %v3898 = vadd.f32 %v3897, %v3867
    %v3899 = vadd.f32 %v3898, %v3868
    %v3900 = vadd.f32 %v3899, %v3869
    %v3901 = vadd.f32 %v3900, %v3870
    %v3902 = vadd.f32 %v3901, %v3871
    %v3903 = vadd.f32 %v3902, %v3872
    %v3904 = vadd.f32 %v3903, %v3873
    %v3905 = vadd.f32 %v3904, %v3874
    %v3906 = vadd.f32 %v3905, %v3875
    %v3907 = vrot.slane %v3906, 4
    %v3908 = vadd.f32 %v3906, %v3907
    %v3909 = vrot.slane %v3908, 2
    %v3910 = vadd.f32 %v3908, %v3909
    %v3911 = vrot.slane %v3910, 1
    %v3912 = vadd.f32 %v3910, %v3911
    %v3913 = vmul.f32 %v3912, %v737
    %v3914 = vadd.f32 %v3913, 1e-05
    %v3915 = vrsqrt.pop %v3914
    %v3916 = vmul.f32 %v3772, %v3915
    %v3917 = vmul.f32 %v3812, %v3916
    %v3918 = vmul.f32 %v3813, %v3916
    %v3919 = vmul.f32 %v3814, %v3916
    %v3920 = vmul.f32 %v3815, %v3916
    %v3921 = vmul.f32 %v3816, %v3916
    %v3922 = vmul.f32 %v3817, %v3916
    %v3923 = vmul.f32 %v3818, %v3916
    %v3924 = vmul.f32 %v3819, %v3916
    %v3925 = vmul.f32 %v3820, %v3916
    %v3926 = vmul.f32 %v3821, %v3916
    %v3927 = vmul.f32 %v3822, %v3916
    %v3928 = vmul.f32 %v3823, %v3916
    %v3929 = vmul.f32 %v3824, %v3916
    %v3930 = vmul.f32 %v3825, %v3916
    %v3931 = vmul.f32 %v3826, %v3916
    %v3932 = vmul.f32 %v3827, %v3916
    %v3933 = vmul.f32 %v3828, %v3916
    %v3934 = vmul.f32 %v3829, %v3916
    %v3935 = vmul.f32 %v3830, %v3916
    %v3936 = vmul.f32 %v3831, %v3916
    %v3937 = vmul.f32 %v3832, %v3916
    %v3938 = vmul.f32 %v3833, %v3916
    %v3939 = vmul.f32 %v3834, %v3916
    %v3940 = vmul.f32 %v3835, %v3916
    %v3941 = vmul.f32 %v3836, %v3916
    %v3942 = vmul.f32 %v3837, %v3916
    %v3943 = vmul.f32 %v3838, %v3916
    %v3944 = vmul.f32 %v3839, %v3916
    %v3945 = vmul.f32 %v3840, %v3916
    %v3946 = vmul.f32 %v3841, %v3916
    %v3947 = vmul.f32 %v3842, %v3916
    %v3948 = vmul.f32 %v3843, %v3916
    %v3949 = vadd.f32 %v3917, %v3773
    %v3950 = vadd.f32 %v3918, %v3773
    %v3951 = vadd.f32 %v3919, %v3773
    %v3952 = vadd.f32 %v3920, %v3773
    %v3953 = vadd.f32 %v3921, %v3773
    %v3954 = vadd.f32 %v3922, %v3773
    %v3955 = vadd.f32 %v3923, %v3773
    %v3956 = vadd.f32 %v3924, %v3773
    %v3957 = vadd.f32 %v3925, %v3773
    %v3958 = vadd.f32 %v3926, %v3773
    %v3959 = vadd.f32 %v3927, %v3773
    %v3960 = vadd.f32 %v3928, %v3773
    %v3961 = vadd.f32 %v3929, %v3773
    %v3962 = vadd.f32 %v3930, %v3773
    %v3963 = vadd.f32 %v3931, %v3773
    %v3964 = vadd.f32 %v3932, %v3773
    %v3965 = vadd.f32 %v3933, %v3773
    %v3966 = vadd.f32 %v3934, %v3773
    %v3967 = vadd.f32 %v3935, %v3773
    %v3968 = vadd.f32 %v3936, %v3773
    %v3969 = vadd.f32 %v3937, %v3773
    %v3970 = vadd.f32 %v3938, %v3773
    %v3971 = vadd.f32 %v3939, %v3773
    %v3972 = vadd.f32 %v3940, %v3773
    %v3973 = vadd.f32 %v3941, %v3773
    %v3974 = vadd.f32 %v3942, %v3773
    %v3975 = vadd.f32 %v3943, %v3773
    %v3976 = vadd.f32 %v3944, %v3773
    %v3977 = vadd.f32 %v3945, %v3773
    %v3978 = vadd.f32 %v3946, %v3773
    %v3979 = vadd.f32 %v3947, %v3773
    %v3980 = vadd.f32 %v3948, %v3773
    %v3981 = vmax.f32 %v3949, 0.0
    %v3982 = vmax.f32 %v3950, 0.0
    %v3983 = vmax.f32 %v3951, 0.0
    %v3984 = vmax.f32 %v3952, 0.0
    %v3985 = vmax.f32 %v3953, 0.0
    %v3986 = vmax.f32 %v3954, 0.0
    %v3987 = vmax.f32 %v3955, 0.0
    %v3988 = vmax.f32 %v3956, 0.0
    %v3989 = vmax.f32 %v3957, 0.0
    %v3990 = vmax.f32 %v3958, 0.0
    %v3991 = vmax.f32 %v3959, 0.0
    %v3992 = vmax.f32 %v3960, 0.0
    %v3993 = vmax.f32 %v3961, 0.0
    %v3994 = vmax.f32 %v3962, 0.0
    %v3995 = vmax.f32 %v3963, 0.0
    %v3996 = vmax.f32 %v3964, 0.0
    %v3997 = vmax.f32 %v3965, 0.0
    %v3998 = vmax.f32 %v3966, 0.0
    %v3999 = vmax.f32 %v3967, 0.0
    %v4000 = vmax.f32 %v3968, 0.0
    %v4001 = vmax.f32 %v3969, 0.0
    %v4002 = vmax.f32 %v3970, 0.0
    %v4003 = vmax.f32 %v3971, 0.0
    %v4004 = vmax.f32 %v3972, 0.0
    %v4005 = vmax.f32 %v3973, 0.0
    %v4006 = vmax.f32 %v3974, 0.0
    %v4007 = vmax.f32 %v3975, 0.0
    %v4008 = vmax.f32 %v3976, 0.0
    %v4009 = vmax.f32 %v3977, 0.0
    %v4010 = vmax.f32 %v3978, 0.0
    %v4011 = vmax.f32 %v3979, 0.0
    %v4012 = vmax.f32 %v3980, 0.0
    %v4013 = vpack.c.bf16 %v3982, %v3981
    %v4014 = vpack.c.bf16 %v3984, %v3983
    %v4015 = vpack.c.bf16 %v3986, %v3985
    %v4016 = vpack.c.bf16 %v3988, %v3987
    %v4017 = vpack.c.bf16 %v3990, %v3989
    %v4018 = vpack.c.bf16 %v3992, %v3991
    %v4019 = vpack.c.bf16 %v3994, %v3993
    %v4020 = vpack.c.bf16 %v3996, %v3995
    %v4021 = vpack.c.bf16 %v3998, %v3997
    %v4022 = vpack.c.bf16 %v4000, %v3999
    %v4023 = vpack.c.bf16 %v4002, %v4001
    %v4024 = vpack.c.bf16 %v4004, %v4003
    %v4025 = vpack.c.bf16 %v4006, %v4005
    %v4026 = vpack.c.bf16 %v4008, %v4007
    %v4027 = vpack.c.bf16 %v4010, %v4009
    %v4028 = vpack.c.bf16 %v4012, %v4011
    %v4029 = vld [vmem:[%s5] sm:$0xf]
    %v4030 = vld [vmem:[%s5 + $0x4] sm:$0xf]
    %v4031 = vld [vmem:[%s5 + $0x8] sm:$0xf]
    %v4032 = vld [vmem:[%s5 + $0xc] sm:$0xf]
    %v4033 = vld [vmem:[%s5 + $0x10] sm:$0xf]
    %v4034 = vld [vmem:[%s5 + $0x14] sm:$0xf]
    %v4035 = vld [vmem:[%s5 + $0x18] sm:$0xf]
    %v4036 = vld [vmem:[%s5 + $0x1c] sm:$0xf]
    %v4037 = vld [vmem:[%s5 + $0x20] sm:$0xf]
    %v4038 = vld [vmem:[%s5 + $0x24] sm:$0xf]
    %v4039 = vld [vmem:[%s5 + $0x28] sm:$0xf]
    %v4040 = vld [vmem:[%s5 + $0x2c] sm:$0xf]
    %v4041 = vld [vmem:[%s5 + $0x30] sm:$0xf]
    %v4042 = vld [vmem:[%s5 + $0x34] sm:$0xf]
    %v4043 = vld [vmem:[%s5 + $0x38] sm:$0xf]
    %v4044 = vld [vmem:[%s5 + $0x3c] sm:$0xf]
    %v4045 = vld [vmem:[#allocation4 + $0x20] ss:$0 sm:$0xff]
    %v4062 = vunpack.c.l.b16 %v4029
    %v4063 = vunpack.c.l.b16 %v4030
    %v4064 = vunpack.c.l.b16 %v4031
    %v4065 = vunpack.c.l.b16 %v4032
    %v4066 = vunpack.c.l.b16 %v4033
    %v4067 = vunpack.c.l.b16 %v4034
    %v4068 = vunpack.c.l.b16 %v4035
    %v4069 = vunpack.c.l.b16 %v4036
    %v4070 = vunpack.c.l.b16 %v4037
    %v4071 = vunpack.c.l.b16 %v4038
    %v4072 = vunpack.c.l.b16 %v4039
    %v4073 = vunpack.c.l.b16 %v4040
    %v4074 = vunpack.c.l.b16 %v4041
    %v4075 = vunpack.c.l.b16 %v4042
    %v4076 = vunpack.c.l.b16 %v4043
    %v4077 = vunpack.c.l.b16 %v4044
    %v4078 = vpack.c.b16 %v4063, %v4062
    %v4079 = vpack.c.b16 %v4065, %v4064
    %v4080 = vpack.c.b16 %v4067, %v4066
    %v4081 = vpack.c.b16 %v4069, %v4068
    %v4082 = vpack.c.b16 %v4071, %v4070
    %v4083 = vpack.c.b16 %v4073, %v4072
    %v4084 = vpack.c.b16 %v4075, %v4074
    %v4085 = vpack.c.b16 %v4077, %v4076
    %4094 = vmatprep.subr.bf16.mxu0 0
    %4095 = vmatpush1.bf16.msra.mxu0 %v4078
    %4096 = vmatprep.subr.bf16.mxu0 0
    %4097 = vmatpush1.bf16.msra.mxu0 %v4079
    %4098 = vmatprep.subr.bf16.mxu0 0
    %4099 = vmatpush1.bf16.msra.mxu0 %v4080
    %4100 = vmatprep.subr.bf16.mxu0 0
    %4101 = vmatpush1.bf16.msra.mxu0 %v4081
    %4102 = vmatprep.subr.bf16.mxu0 0
    %4103 = vmatpush1.bf16.msra.mxu0 %v4082
    %4104 = vmatprep.subr.bf16.mxu0 0
    %4105 = vmatpush1.bf16.msra.mxu0 %v4083
    %4106 = vmatprep.subr.bf16.mxu0 0
    %4107 = vmatpush1.bf16.msra.mxu0 %v4084
    %4108 = vmatprep.subr.bf16.mxu0 0
    %4109 = vmatpush1.bf16.msra.mxu0 %v4085
    %4110 = vmatprep.subr.bf16.mxu0 0
    %4111 = vmatpush1.bf16.msra.mxu0 0
    %4112 = vmatprep.subr.bf16.mxu0 0
    %4113 = vmatpush1.bf16.msra.mxu0 0
    %4114 = vmatprep.subr.bf16.mxu0 0
    %4115 = vmatpush1.bf16.msra.mxu0 0
    %4116 = vmatprep.subr.bf16.mxu0 0
    %4117 = vmatpush1.bf16.msra.mxu0 0
    %4118 = vmatprep.subr.bf16.mxu0 0
    %4119 = vmatpush1.bf16.msra.mxu0 0
    %4120 = vmatprep.subr.bf16.mxu0 0
    %4121 = vmatpush1.bf16.msra.mxu0 0
    %4122 = vmatprep.subr.bf16.mxu0 0
    %4123 = vmatpush1.bf16.msra.mxu0 0
    %4124 = vmatprep.subr.bf16.mxu0 0
    %4125 = vmatpush1.bf16.msra.mxu0 0
    %4126 = vmatprep.mubr.bf16.mxu0 0
    %4127 = vmatmul.mubr.bf16.gmra.mrb[0].mxu0 %v4013
    %v4128 = vpop.f32.mrb[0].mxu0
    %v4129 = vadd.f32 %v4045, %v4128
    %v4130 = vpop.f32.mrb[0].mxu0
    %v4131 = vpop.f32.mrb[0].mxu0
    %v4132 = vadd.f32 %v4045, %v4131
    %v4133 = vpop.f32.mrb[0].mxu0
    %4134 = vmatprep.mubr.bf16.mxu0 0
    %4135 = vmatmul.mubr.bf16.gmra.mrb[0].mxu0 %v4014
    %v4136 = vpop.f32.mrb[0].mxu0
    %v4137 = vadd.f32 %v4045, %v4136
    %v4138 = vpop.f32.mrb[0].mxu0
    %v4139 = vpop.f32.mrb[0].mxu0
    %v4140 = vadd.f32 %v4045, %v4139
    %v4141 = vpop.f32.mrb[0].mxu0
    %4142 = vmatprep.mubr.bf16.mxu0 0
    %4143 = vmatmul.mubr.bf16.gmra.mrb[0].mxu0 %v4015
    %v4144 = vpop.f32.mrb[0].mxu0
    %v4145 = vadd.f32 %v4045, %v4144
    %v4146 = vpop.f32.mrb[0].mxu0
    %v4147 = vpop.f32.mrb[0].mxu0
    %v4148 = vadd.f32 %v4045, %v4147
    %v4149 = vpop.f32.mrb[0].mxu0
    %4150 = vmatprep.mubr.bf16.mxu0 0
    %4151 = vmatmul.mubr.bf16.gmra.mrb[0].mxu0 %v4016
    %v4152 = vpop.f32.mrb[0].mxu0
    %v4153 = vadd.f32 %v4045, %v4152
    %v4154 = vpop.f32.mrb[0].mxu0
    %v4155 = vpop.f32.mrb[0].mxu0
    %v4156 = vadd.f32 %v4045, %v4155
    %v4157 = vpop.f32.mrb[0].mxu0
    %4158 = vmatprep.mubr.bf16.mxu0 0
    %4159 = vmatmul.mubr.bf16.gmra.mrb[0].mxu0 %v4017
    %v4160 = vpop.f32.mrb[0].mxu0
    %v4161 = vadd.f32 %v4045, %v4160
    %v4162 = vpop.f32.mrb[0].mxu0
    %v4163 = vpop.f32.mrb[0].mxu0
    %v4164 = vadd.f32 %v4045, %v4163
    %v4165 = vpop.f32.mrb[0].mxu0
    %4166 = vmatprep.mubr.bf16.mxu0 0
    %4167 = vmatmul.mubr.bf16.gmra.mrb[0].mxu0 %v4018
    %v4168 = vpop.f32.mrb[0].mxu0
    %v4169 = vadd.f32 %v4045, %v4168
    %v4170 = vpop.f32.mrb[0].mxu0
    %v4171 = vpop.f32.mrb[0].mxu0
    %v4172 = vadd.f32 %v4045, %v4171
    %v4173 = vpop.f32.mrb[0].mxu0
    %4174 = vmatprep.mubr.bf16.mxu0 0
    %4175 = vmatmul.mubr.bf16.gmra.mrb[0].mxu0 %v4019
    %v4176 = vpop.f32.mrb[0].mxu0
    %v4177 = vadd.f32 %v4045, %v4176
    %v4178 = vpop.f32.mrb[0].mxu0
    %v4179 = vpop.f32.mrb[0].mxu0
    %v4180 = vadd.f32 %v4045, %v4179
    %v4181 = vpop.f32.mrb[0].mxu0
    %4182 = vmatprep.mubr.bf16.mxu0 0
    %4183 = vmatmul.mubr.bf16.gmra.mrb[0].mxu0 %v4020
    %v4184 = vpop.f32.mrb[0].mxu0
    %v4185 = vadd.f32 %v4045, %v4184
    %v4186 = vpop.f32.mrb[0].mxu0
    %v4187 = vpop.f32.mrb[0].mxu0
    %v4188 = vadd.f32 %v4045, %v4187
    %v4189 = vpop.f32.mrb[0].mxu0
    %4190 = vmatprep.mubr.bf16.mxu0 0
    %4191 = vmatmul.mubr.bf16.gmra.mrb[0].mxu0 %v4021
    %v4192 = vpop.f32.mrb[0].mxu0
    %v4193 = vadd.f32 %v4045, %v4192
    %v4194 = vpop.f32.mrb[0].mxu0
    %v4195 = vpop.f32.mrb[0].mxu0
    %v4196 = vadd.f32 %v4045, %v4195
    %v4197 = vpop.f32.mrb[0].mxu0
    %4198 = vmatprep.mubr.bf16.mxu0 0
    %4199 = vmatmul.mubr.bf16.gmra.mrb[0].mxu0 %v4022
    %v4200 = vpop.f32.mrb[0].mxu0
    %v4201 = vadd.f32 %v4045, %v4200
    %v4202 = vpop.f32.mrb[0].mxu0
    %v4203 = vpop.f32.mrb[0].mxu0
    %v4204 = vadd.f32 %v4045, %v4203
    %v4205 = vpop.f32.mrb[0].mxu0
    %4206 = vmatprep.mubr.bf16.mxu0 0
    %4207 = vmatmul.mubr.bf16.gmra.mrb[0].mxu0 %v4023
    %v4208 = vpop.f32.mrb[0].mxu0
    %v4209 = vadd.f32 %v4045, %v4208
    %v4210 = vpop.f32.mrb[0].mxu0
    %v4211 = vpop.f32.mrb[0].mxu0
    %v4212 = vadd.f32 %v4045, %v4211
    %v4213 = vpop.f32.mrb[0].mxu0
    %4214 = vmatprep.mubr.bf16.mxu0 0
    %4215 = vmatmul.mubr.bf16.gmra.mrb[0].mxu0 %v4024
    %v4216 = vpop.f32.mrb[0].mxu0
    %v4217 = vadd.f32 %v4045, %v4216
    %v4218 = vpop.f32.mrb[0].mxu0
    %v4219 = vpop.f32.mrb[0].mxu0
    %v4220 = vadd.f32 %v4045, %v4219
    %v4221 = vpop.f32.mrb[0].mxu0
    %4222 = vmatprep.mubr.bf16.mxu0 0
    %4223 = vmatmul.mubr.bf16.gmra.mrb[0].mxu0 %v4025
    %v4224 = vpop.f32.mrb[0].mxu0
    %v4225 = vadd.f32 %v4045, %v4224
    %v4226 = vpop.f32.mrb[0].mxu0
    %v4227 = vpop.f32.mrb[0].mxu0
    %v4228 = vadd.f32 %v4045, %v4227
    %v4229 = vpop.f32.mrb[0].mxu0
    %4230 = vmatprep.mubr.bf16.mxu0 0
    %4231 = vmatmul.mubr.bf16.gmra.mrb[0].mxu0 %v4026
    %v4232 = vpop.f32.mrb[0].mxu0
    %v4233 = vadd.f32 %v4045, %v4232
    %v4234 = vpop.f32.mrb[0].mxu0
    %v4235 = vpop.f32.mrb[0].mxu0
    %v4236 = vadd.f32 %v4045, %v4235
    %v4237 = vpop.f32.mrb[0].mxu0
    %4238 = vmatprep.mubr.bf16.mxu0 0
    %4239 = vmatmul.mubr.bf16.gmra.mrb[0].mxu0 %v4027
    %v4240 = vpop.f32.mrb[0].mxu0
    %v4241 = vadd.f32 %v4045, %v4240
    %v4242 = vpop.f32.mrb[0].mxu0
    %v4243 = vpop.f32.mrb[0].mxu0
    %v4244 = vadd.f32 %v4045, %v4243
    %v4245 = vpop.f32.mrb[0].mxu0
    %4246 = vmatprep.mubr.bf16.mxu0 0
    %4247 = vmatmul.mubr.bf16.gmra.mrb[0].mxu0 %v4028
    %v4248 = vpop.f32.mrb[0].mxu0
    %v4249 = vadd.f32 %v4045, %v4248
    %v4250 = vpop.f32.mrb[0].mxu0
    %v4251 = vpop.f32.mrb[0].mxu0
    %v4252 = vadd.f32 %v4045, %v4251
    %v4253 = vpop.f32.mrb[0].mxu0
    %4254 = vdwg.mxu0
    %4255 = vmax.xlane.f32.xlu0 %v4129
    %v4256 = vpop.xlane.xlu0 %4255
    %4257 = vmax.xlane.f32.xlu0 %v4132
    %v4258 = vpop.xlane.xlu0 %4257
    %4259 = vmax.xlane.f32.xlu0 %v4137
    %v4260 = vpop.xlane.xlu0 %4259
    %4261 = vmax.xlane.f32.xlu0 %v4140
    %v4262 = vpop.xlane.xlu0 %4261
    %4263 = vmax.xlane.f32.xlu0 %v4145
    %v4264 = vpop.xlane.xlu0 %4263
    %4265 = vmax.xlane.f32.xlu0 %v4148
    %v4266 = vpop.xlane.xlu0 %4265
    %4267 = vmax.xlane.f32.xlu0 %v4153
    %v4268 = vpop.xlane.xlu0 %4267
    %4269 = vmax.xlane.f32.xlu0 %v4156
    %v4270 = vpop.xlane.xlu0 %4269
    %4271 = vmax.xlane.f32.xlu0 %v4161
    %v4272 = vpop.xlane.xlu0 %4271
    %4273 = vmax.xlane.f32.xlu0 %v4164
    %v4274 = vpop.xlane.xlu0 %4273
    %4275 = vmax.xlane.f32.xlu0 %v4169
    %v4276 = vpop.xlane.xlu0 %4275
    %4277 = vmax.xlane.f32.xlu0 %v4172
    %v4278 = vpop.xlane.xlu0 %4277
    %4279 = vmax.xlane.f32.xlu0 %v4177
    %v4280 = vpop.xlane.xlu0 %4279
    %4281 = vmax.xlane.f32.xlu0 %v4180
    %v4282 = vpop.xlane.xlu0 %4281
    %4283 = vmax.xlane.f32.xlu0 %v4185
    %v4284 = vpop.xlane.xlu0 %4283
    %4285 = vmax.xlane.f32.xlu0 %v4188
    %v4286 = vpop.xlane.xlu0 %4285
    %4287 = vmax.xlane.f32.xlu0 %v4193
    %v4288 = vpop.xlane.xlu0 %4287
    %4289 = vmax.xlane.f32.xlu0 %v4196
    %v4290 = vpop.xlane.xlu0 %4289
    %4291 = vmax.xlane.f32.xlu0 %v4201
    %v4292 = vpop.xlane.xlu0 %4291
    %4293 = vmax.xlane.f32.xlu0 %v4204
    %v4294 = vpop.xlane.xlu0 %4293
    %4295 = vmax.xlane.f32.xlu0 %v4209
    %v4296 = vpop.xlane.xlu0 %4295
    %4297 = vmax.xlane.f32.xlu0 %v4212
    %v4298 = vpop.xlane.xlu0 %4297
    %4299 = vmax.xlane.f32.xlu0 %v4217
    %v4300 = vpop.xlane.xlu0 %4299
    %4301 = vmax.xlane.f32.xlu0 %v4220
    %v4302 = vpop.xlane.xlu0 %4301
    %4303 = vmax.xlane.f32.xlu0 %v4225
    %v4304 = vpop.xlane.xlu0 %4303
    %4305 = vmax.xlane.f32.xlu0 %v4228
    %v4306 = vpop.xlane.xlu0 %4305
    %4307 = vmax.xlane.f32.xlu0 %v4233
    %v4308 = vpop.xlane.xlu0 %4307
    %4309 = vmax.xlane.f32.xlu0 %v4236
    %v4310 = vpop.xlane.xlu0 %4309
    %4311 = vmax.xlane.f32.xlu0 %v4241
    %v4312 = vpop.xlane.xlu0 %4311
    %4313 = vmax.xlane.f32.xlu0 %v4244
    %v4314 = vpop.xlane.xlu0 %4313
    %4315 = vmax.xlane.f32.xlu0 %v4249
    %v4316 = vpop.xlane.xlu0 %4315
    %4317 = vmax.xlane.f32.xlu0 %v4252
    %v4318 = vpop.xlane.xlu0 %4317
    %v4319 = vsub.f32 %v4129, %v4256
    %v4320 = vsub.f32 %v4132, %v4258
    %v4321 = vsub.f32 %v4137, %v4260
    %v4322 = vsub.f32 %v4140, %v4262
    %v4323 = vsub.f32 %v4145, %v4264
    %v4324 = vsub.f32 %v4148, %v4266
    %v4325 = vsub.f32 %v4153, %v4268
    %v4326 = vsub.f32 %v4156, %v4270
    %v4327 = vsub.f32 %v4161, %v4272
    %v4328 = vsub.f32 %v4164, %v4274
    %v4329 = vsub.f32 %v4169, %v4276
    %v4330 = vsub.f32 %v4172, %v4278
    %v4331 = vsub.f32 %v4177, %v4280
    %v4332 = vsub.f32 %v4180, %v4282
    %v4333 = vsub.f32 %v4185, %v4284
    %v4334 = vsub.f32 %v4188, %v4286
    %v4335 = vsub.f32 %v4193, %v4288
    %v4336 = vsub.f32 %v4196, %v4290
    %v4337 = vsub.f32 %v4201, %v4292
    %v4338 = vsub.f32 %v4204, %v4294
    %v4339 = vsub.f32 %v4209, %v4296
    %v4340 = vsub.f32 %v4212, %v4298
    %v4341 = vsub.f32 %v4217, %v4300
    %v4342 = vsub.f32 %v4220, %v4302
    %v4343 = vsub.f32 %v4225, %v4304
    %v4344 = vsub.f32 %v4228, %v4306
    %v4345 = vsub.f32 %v4233, %v4308
    %v4346 = vsub.f32 %v4236, %v4310
    %v4347 = vsub.f32 %v4241, %v4312
    %v4348 = vsub.f32 %v4244, %v4314
    %v4349 = vsub.f32 %v4249, %v4316
    %v4350 = vsub.f32 %v4252, %v4318
    %v4351 = vmul.f32 %v4319, 1.442695
    %v4352 = vpow.pop %v4351
    %v4353 = vmul.f32 %v4320, 1.442695
    %v4354 = vpow.pop %v4353
    %v4355 = vmul.f32 %v4321, 1.442695
    %v4356 = vpow.pop %v4355
    %v4357 = vmul.f32 %v4322, 1.442695
    %v4358 = vpow.pop %v4357
    %v4359 = vmul.f32 %v4323, 1.442695
    %v4360 = vpow.pop %v4359
    %v4361 = vmul.f32 %v4324, 1.442695
    %v4362 = vpow.pop %v4361
    %v4363 = vmul.f32 %v4325, 1.442695
    %v4364 = vpow.pop %v4363
    %v4365 = vmul.f32 %v4326, 1.442695
    %v4366 = vpow.pop %v4365
    %v4367 = vmul.f32 %v4327, 1.442695
    %v4368 = vpow.pop %v4367
    %v4369 = vmul.f32 %v4328, 1.442695
    %v4370 = vpow.pop %v4369
    %v4371 = vmul.f32 %v4329, 1.442695
    %v4372 = vpow.pop %v4371
    %v4373 = vmul.f32 %v4330, 1.442695
    %v4374 = vpow.pop %v4373
    %v4375 = vmul.f32 %v4331, 1.442695
    %v4376 = vpow.pop %v4375
    %v4377 = vmul.f32 %v4332, 1.442695
    %v4378 = vpow.pop %v4377
    %v4379 = vmul.f32 %v4333, 1.442695
    %v4380 = vpow.pop %v4379
    %v4381 = vmul.f32 %v4334, 1.442695
    %v4382 = vpow.pop %v4381
    %v4383 = vmul.f32 %v4335, 1.442695
    %v4384 = vpow.pop %v4383
    %v4385 = vmul.f32 %v4336, 1.442695
    %v4386 = vpow.pop %v4385
    %v4387 = vmul.f32 %v4337, 1.442695
    %v4388 = vpow.pop %v4387
    %v4389 = vmul.f32 %v4338, 1.442695
    %v4390 = vpow.pop %v4389
    %v4391 = vmul.f32 %v4339, 1.442695
    %v4392 = vpow.pop %v4391
    %v4393 = vmul.f32 %v4340, 1.442695
    %v4394 = vpow.pop %v4393
    %v4395 = vmul.f32 %v4341, 1.442695
    %v4396 = vpow.pop %v4395
    %v4397 = vmul.f32 %v4342, 1.442695
    %v4398 = vpow.pop %v4397
    %v4399 = vmul.f32 %v4343, 1.442695
    %v4400 = vpow.pop %v4399
    %v4401 = vmul.f32 %v4344, 1.442695
    %v4402 = vpow.pop %v4401
    %v4403 = vmul.f32 %v4345, 1.442695
    %v4404 = vpow.pop %v4403
    %v4405 = vmul.f32 %v4346, 1.442695
    %v4406 = vpow.pop %v4405
    %v4407 = vmul.f32 %v4347, 1.442695
    %v4408 = vpow.pop %v4407
    %v4409 = vmul.f32 %v4348, 1.442695
    %v4410 = vpow.pop %v4409
    %v4411 = vmul.f32 %v4349, 1.442695
    %v4412 = vpow.pop %v4411
    %v4413 = vmul.f32 %v4350, 1.442695
    %v4414 = vpow.pop %v4413
    %4415 = vadd.xlane.f32.xlu0 %v4352
    %v4416 = vpop.xlane.xlu0 %4415
    %4417 = vadd.xlane.f32.xlu0 %v4354
    %v4418 = vpop.xlane.xlu0 %4417
    %4419 = vadd.xlane.f32.xlu0 %v4356
    %v4420 = vpop.xlane.xlu0 %4419
    %4421 = vadd.xlane.f32.xlu0 %v4358
    %v4422 = vpop.xlane.xlu0 %4421
    %4423 = vadd.xlane.f32.xlu0 %v4360
    %v4424 = vpop.xlane.xlu0 %4423
    %4425 = vadd.xlane.f32.xlu0 %v4362
    %v4426 = vpop.xlane.xlu0 %4425
    %4427 = vadd.xlane.f32.xlu0 %v4364
    %v4428 = vpop.xlane.xlu0 %4427
    %4429 = vadd.xlane.f32.xlu0 %v4366
    %v4430 = vpop.xlane.xlu0 %4429
    %4431 = vadd.xlane.f32.xlu0 %v4368
    %v4432 = vpop.xlane.xlu0 %4431
    %4433 = vadd.xlane.f32.xlu0 %v4370
    %v4434 = vpop.xlane.xlu0 %4433
    %4435 = vadd.xlane.f32.xlu0 %v4372
    %v4436 = vpop.xlane.xlu0 %4435
    %4437 = vadd.xlane.f32.xlu0 %v4374
    %v4438 = vpop.xlane.xlu0 %4437
    %4439 = vadd.xlane.f32.xlu0 %v4376
    %v4440 = vpop.xlane.xlu0 %4439
    %4441 = vadd.xlane.f32.xlu0 %v4378
    %v4442 = vpop.xlane.xlu0 %4441
    %4443 = vadd.xlane.f32.xlu0 %v4380
    %v4444 = vpop.xlane.xlu0 %4443
    %4445 = vadd.xlane.f32.xlu0 %v4382
    %v4446 = vpop.xlane.xlu0 %4445
    %4447 = vadd.xlane.f32.xlu0 %v4384
    %v4448 = vpop.xlane.xlu0 %4447
    %4449 = vadd.xlane.f32.xlu0 %v4386
    %v4450 = vpop.xlane.xlu0 %4449
    %4451 = vadd.xlane.f32.xlu0 %v4388
    %v4452 = vpop.xlane.xlu0 %4451
    %4453 = vadd.xlane.f32.xlu0 %v4390
    %v4454 = vpop.xlane.xlu0 %4453
    %4455 = vadd.xlane.f32.xlu0 %v4392
    %v4456 = vpop.xlane.xlu0 %4455
    %4457 = vadd.xlane.f32.xlu0 %v4394
    %v4458 = vpop.xlane.xlu0 %4457
    %4459 = vadd.xlane.f32.xlu0 %v4396
    %v4460 = vpop.xlane.xlu0 %4459
    %4461 = vadd.xlane.f32.xlu0 %v4398
    %v4462 = vpop.xlane.xlu0 %4461
    %4463 = vadd.xlane.f32.xlu0 %v4400
    %v4464 = vpop.xlane.xlu0 %4463
    %4465 = vadd.xlane.f32.xlu0 %v4402
    %v4466 = vpop.xlane.xlu0 %4465
    %4467 = vadd.xlane.f32.xlu0 %v4404
    %v4468 = vpop.xlane.xlu0 %4467
    %4469 = vadd.xlane.f32.xlu0 %v4406
    %v4470 = vpop.xlane.xlu0 %4469
    %4471 = vadd.xlane.f32.xlu0 %v4408
    %v4472 = vpop.xlane.xlu0 %4471
    %4473 = vadd.xlane.f32.xlu0 %v4410
    %v4474 = vpop.xlane.xlu0 %4473
    %4475 = vadd.xlane.f32.xlu0 %v4412
    %v4476 = vpop.xlane.xlu0 %4475
    %4477 = vadd.xlane.f32.xlu0 %v4414
    %v4478 = vpop.xlane.xlu0 %4477
    %v4479 = vrcp.pop %v4416
    %v4480 = vrcp.pop %v4418
    %v4481 = vrcp.pop %v4420
    %v4482 = vrcp.pop %v4422
    %v4483 = vrcp.pop %v4424
    %v4484 = vrcp.pop %v4426
    %v4485 = vrcp.pop %v4428
    %v4486 = vrcp.pop %v4430
    %v4487 = vrcp.pop %v4432
    %v4488 = vrcp.pop %v4434
    %v4489 = vrcp.pop %v4436
    %v4490 = vrcp.pop %v4438
    %v4491 = vrcp.pop %v4440
    %v4492 = vrcp.pop %v4442
    %v4493 = vrcp.pop %v4444
    %v4494 = vrcp.pop %v4446
    %v4495 = vrcp.pop %v4448
    %v4496 = vrcp.pop %v4450
    %v4497 = vrcp.pop %v4452
    %v4498 = vrcp.pop %v4454
    %v4499 = vrcp.pop %v4456
    %v4500 = vrcp.pop %v4458
    %v4501 = vrcp.pop %v4460
    %v4502 = vrcp.pop %v4462
    %v4503 = vrcp.pop %v4464
    %v4504 = vrcp.pop %v4466
    %v4505 = vrcp.pop %v4468
    %v4506 = vrcp.pop %v4470
    %v4507 = vrcp.pop %v4472
    %v4508 = vrcp.pop %v4474
    %v4509 = vrcp.pop %v4476
    %v4510 = vrcp.pop %v4478
    %v4511 = vmul.f32 %v4352, %v4479
    %v4512 = vmul.f32 %v4354, %v4480
    %v4513 = vmul.f32 %v4356, %v4481
    %v4514 = vmul.f32 %v4358, %v4482
    %v4515 = vmul.f32 %v4360, %v4483
    %v4516 = vmul.f32 %v4362, %v4484
    %v4517 = vmul.f32 %v4364, %v4485
    %v4518 = vmul.f32 %v4366, %v4486
    %v4519 = vmul.f32 %v4368, %v4487
    %v4520 = vmul.f32 %v4370, %v4488
    %v4521 = vmul.f32 %v4372, %v4489
    %v4522 = vmul.f32 %v4374, %v4490
    %v4523 = vmul.f32 %v4376, %v4491
    %v4524 = vmul.f32 %v4378, %v4492
    %v4525 = vmul.f32 %v4380, %v4493
    %v4526 = vmul.f32 %v4382, %v4494
    %v4527 = vmul.f32 %v4384, %v4495
    %v4528 = vmul.f32 %v4386, %v4496
    %v4529 = vmul.f32 %v4388, %v4497
    %v4530 = vmul.f32 %v4390, %v4498
    %v4531 = vmul.f32 %v4392, %v4499
    %v4532 = vmul.f32 %v4394, %v4500
    %v4533 = vmul.f32 %v4396, %v4501
    %v4534 = vmul.f32 %v4398, %v4502
    %v4535 = vmul.f32 %v4400, %v4503
    %v4536 = vmul.f32 %v4402, %v4504
    %v4537 = vmul.f32 %v4404, %v4505
    %v4538 = vmul.f32 %v4406, %v4506
    %v4539 = vmul.f32 %v4408, %v4507
    %v4540 = vmul.f32 %v4410, %v4508
    %v4541 = vmul.f32 %v4412, %v4509
    %v4542 = vmul.f32 %v4414, %v4510
    %4543 = vst [vmem:[%s7] sm:$0xff] %v4511
    %4544 = vst [vmem:[%s7 + $0x8] sm:$0xff] %v4512
    %4545 = vst [vmem:[%s7 + $0x10] sm:$0xff] %v4513
    %4546 = vst [vmem:[%s7 + $0x18] sm:$0xff] %v4514
    %4547 = vst [vmem:[%s7 + $0x20] sm:$0xff] %v4515
    %4548 = vst [vmem:[%s7 + $0x28] sm:$0xff] %v4516
    %4549 = vst [vmem:[%s7 + $0x30] sm:$0xff] %v4517
    %4550 = vst [vmem:[%s7 + $0x38] sm:$0xff] %v4518
    %4551 = vst [vmem:[%s7 + $0x40] sm:$0xff] %v4519
    %4552 = vst [vmem:[%s7 + $0x48] sm:$0xff] %v4520
    %4553 = vst [vmem:[%s7 + $0x50] sm:$0xff] %v4521
    %4554 = vst [vmem:[%s7 + $0x58] sm:$0xff] %v4522
    %4555 = vst [vmem:[%s7 + $0x60] sm:$0xff] %v4523
    %4556 = vst [vmem:[%s7 + $0x68] sm:$0xff] %v4524
    %4557 = vst [vmem:[%s7 + $0x70] sm:$0xff] %v4525
    %4558 = vst [vmem:[%s7 + $0x78] sm:$0xff] %v4526
    %4559 = vst [vmem:[%s7 + $0x80] sm:$0xff] %v4527
    %4560 = vst [vmem:[%s7 + $0x88] sm:$0xff] %v4528
    %4561 = vst [vmem:[%s7 + $0x90] sm:$0xff] %v4529
    %4562 = vst [vmem:[%s7 + $0x98] sm:$0xff] %v4530
    %4563 = vst [vmem:[%s7 + $0xa0] sm:$0xff] %v4531
    %4564 = vst [vmem:[%s7 + $0xa8] sm:$0xff] %v4532
    %4565 = vst [vmem:[%s7 + $0xb0] sm:$0xff] %v4533
    %4566 = vst [vmem:[%s7 + $0xb8] sm:$0xff] %v4534
    %4567 = vst [vmem:[%s7 + $0xc0] sm:$0xff] %v4535
    %4568 = vst [vmem:[%s7 + $0xc8] sm:$0xff] %v4536
    %4569 = vst [vmem:[%s7 + $0xd0] sm:$0xff] %v4537
    %4570 = vst [vmem:[%s7 + $0xd8] sm:$0xff] %v4538
    %4571 = vst [vmem:[%s7 + $0xe0] sm:$0xff] %v4539
    %4572 = vst [vmem:[%s7 + $0xe8] sm:$0xff] %v4540
    %4573 = vst [vmem:[%s7 + $0xf0] sm:$0xff] %v4541
    %4574 = vst [vmem:[%s7 + $0xf8] sm:$0xff] %v4542
    // Predicated region
    $region38: #{_dnn_forward_jit.1} parent=1 // pred_check
      _
    $region39: #{_dnn_forward_jit.1} parent=1 // pred_check_branch
      %4576 = sbr.rel (0) target = $region41
    $region40: #{_dnn_forward_jit.1} parent=1 // pred_region
      _
    $region41: #{_dnn_forward_jit.1} parent=1 // pred_fallthru
      _
    // Predicated region
    $region42: #{_dnn_forward_jit.1} parent=1 // pred_check
      _
    $region43: #{_dnn_forward_jit.1} parent=1 // pred_check_branch
      %4578 = sbr.rel (0) target = $region45
    $region44: #{_dnn_forward_jit.1} parent=1 // pred_region
      _
    $region45: #{_dnn_forward_jit.1} parent=1 // pred_fallthru
      _
    %4579 = vsyncpa [#allocation3], 1
    %4580 = vsyncpa [#allocation5], 1

</llo_original>
